<compile_context>
chip_gen: v7x
topology: tpu7x:2x2x1
jax: 0.10.0
libtpu: 0.0.40
codegen_flags: <defaults>
</compile_context>

<pallas_src>
import math
import jax
import jax.numpy as jnp
from jax import lax
from jax.experimental import pallas as pl
from jax.experimental.pallas import tpu as pltpu

HIDDEN_SIZE = 64
NUM_LAYERS = 2
nb_agent = 3
Q_dim = 4 * nb_agent      # 12
U_dim = 2 * nb_agent      # 6
dt = 1.0 / 3.0

HP = 128                  # padded hidden: each LSTM gate is one full 128-lane block
UP = 128                  # padded output width: lane-dense final store
BP_ALIGN = 8              # pad batch to a sublane multiple


def _rnn_kernel(x_ref, h0_ref, c0_ref,
                wih0_ref, whh0_ref, b0_ref,
                wih1_ref, whh1_ref, b1_ref,
                wout_ref, bout_ref, umin_ref, umax_ref,
                out_ref, hn_ref, cn_ref,
                xw_scr, h_scr):
    """Whole-sequence 2-layer LSTM + deferred output projection, all in VMEM.

    x_ref:   (T*Bp, Q)     time-major, batch padded to Bp
    h0/c0:   (2, Bp, Hp)
    whh*:    (Hp, 4Hp)     recurrent weights (gate blocks lane-aligned)
    wih1:    (Hp, 4Hp)     layer-1 input weight
    wout:    (Hp, Up)
    xw_scr:  (T*Bp, 4Hp)   reused: x@Wih0+b0, then h0_hist@Wih1+b1
    h_scr:   (T*Bp, Hp)    reused: layer-0 hidden history, then layer-1 history
    """
    BP = h0_ref.shape[1]
    HPk = whh0_ref.shape[0]
    T = x_ref.shape[0] // BP
    unroll = True if T <= 16 else 4

    # Loop-invariant recurrent weights (stay VMEM/vreg resident).
    whh0 = whh0_ref[...]
    whh1 = whh1_ref[...]

    def gates_to_state(g, c):
        # gate order [i, f, g, o]; each block is a full 128-lane slice.
        i = jax.nn.sigmoid(g[:, 0:HPk])
        f = jax.nn.sigmoid(g[:, HPk:2 * HPk])
        gg = jnp.tanh(g[:, 2 * HPk:3 * HPk])
        o = jax.nn.sigmoid(g[:, 3 * HPk:4 * HPk])
        c_new = f * c + i * gg
        h_new = o * jnp.tanh(c_new)
        return h_new, c_new

    # (1) Hoisted layer-0 input path: one whole-sequence GEMM, bias folded in.
    xw_scr[...] = (jnp.dot(x_ref[...], wih0_ref[...],
                           preferred_element_type=jnp.float32)
                   + b0_ref[...])

    # (2) Layer-0 recurrence: only the small recurrent GEMM per step.
    def body0(t, carry):
        h, c = carry
        row = pl.multiple_of(t * BP, BP)
        g = xw_scr[pl.ds(row, BP), :] + jnp.dot(
            h, whh0, preferred_element_type=jnp.float32)
        h, c = gates_to_state(g, c)
        h_scr[pl.ds(row, BP), :] = h
        return (h, c)

    h_l0, c_l0 = lax.fori_loop(0, T, body0, (h0_ref[0], c0_ref[0]),
                               unroll=unroll)
    hn_ref[0] = h_l0
    cn_ref[0] = c_l0

    # (3) Hoisted layer-1 input path: one whole-sequence GEMM over the
    #     layer-0 hidden history (reuses xw_scr).
    xw_scr[...] = (jnp.dot(h_scr[...], wih1_ref[...],
                           preferred_element_type=jnp.float32)
                   + b1_ref[...])

    # (4) Layer-1 recurrence (reuses h_scr for the layer-1 hidden history).
    def body1(t, carry):
        h, c = carry
        row = pl.multiple_of(t * BP, BP)
        g = xw_scr[pl.ds(row, BP), :] + jnp.dot(
            h, whh1, preferred_element_type=jnp.float32)
        h, c = gates_to_state(g, c)
        h_scr[pl.ds(row, BP), :] = h
        return (h, c)

    h_l1, c_l1 = lax.fori_loop(0, T, body1, (h0_ref[1], c0_ref[1]),
                               unroll=unroll)
    hn_ref[1] = h_l1
    cn_ref[1] = c_l1

    # (5) Deferred output projection + tansig squash: one GEMM, lane-dense store.
    y = jnp.dot(h_scr[...], wout_ref[...],
                preferred_element_type=jnp.float32) + bout_ref[...]
    scale = (umax_ref[...] - umin_ref[...]) * 0.5
    offset = umin_ref[...] + scale
    out_ref[...] = offset + scale * jnp.tanh(y)


def _pad_gates(w):
    """(in, 4H) -> (in, 4*HP): pad each of the 4 gate blocks from H to HP cols."""
    n = w.shape[0]
    w4 = w.reshape(n, 4, HIDDEN_SIZE)
    w4 = jnp.pad(w4, ((0, 0), (0, 0), (0, HP - HIDDEN_SIZE)))
    return w4.reshape(n, 4 * HP)


def _pad_rows(w):
    """(H, n) -> (HP, n): zero-pad input rows to the padded hidden size."""
    return jnp.pad(w, ((0, HP - w.shape[0]), (0, 0)))


def _pad_cols(w, n):
    """(r, c) -> (r, n): zero-pad columns (lane axis)."""
    return jnp.pad(w, ((0, 0), (0, n - w.shape[1])))


def rnn_forward(x, h_state, params):
    """x: (B, T, Q_dim) f32; h_state = (h0, c0) each (NUM_LAYERS, B, HIDDEN_SIZE)."""
    h0, c0 = h_state
    B, T, _ = x.shape
    H = HIDDEN_SIZE
    BP = ((B + BP_ALIGN - 1) // BP_ALIGN) * BP_ALIGN

    # Lane-aligned (gate blocks -> 128 lanes) weights.
    wih0_p = _pad_gates(params["wih0"])                       # (Q, 4HP)
    whh0_p = _pad_rows(_pad_gates(params["whh0"]))            # (HP, 4HP)
    b0_p = _pad_gates(params["b0"])                           # (1, 4HP)
    wih1_p = _pad_rows(_pad_gates(params["wih1"]))            # (HP, 4HP)
    whh1_p = _pad_rows(_pad_gates(params["whh1"]))            # (HP, 4HP)
    b1_p = _pad_gates(params["b1"])                           # (1, 4HP)
    # Output path padded to a lane-dense width (padded cols provably 0).
    wout_p = _pad_cols(_pad_rows(params["wout"]), UP)         # (HP, UP)
    bout_p = _pad_cols(params["bout"], UP)                    # (1, UP)
    umin_p = _pad_cols(params["umin"], UP)                    # (1, UP)
    umax_p = _pad_cols(params["umax"], UP)                    # (1, UP)

    # Time-major, batch padded to a sublane multiple, flattened to 2-D so the
    # kernel needs no reshapes and every per-step slice is 8-aligned.
    x_tm = jnp.transpose(x, (1, 0, 2))                        # (T, B, Q)
    x_tm = jnp.pad(x_tm, ((0, 0), (0, BP - B), (0, 0)))
    x2d = x_tm.reshape(T * BP, Q_dim)

    h0_p = jnp.pad(h0, ((0, 0), (0, BP - B), (0, HP - H)))
    c0_p = jnp.pad(c0, ((0, 0), (0, BP - B), (0, HP - H)))

    vmem = pl.BlockSpec(memory_space=pltpu.MemorySpace.VMEM)

    out2d, hn_p, cn_p = pl.pallas_call(
        _rnn_kernel,
        out_shape=(
            jax.ShapeDtypeStruct((T * BP, UP), jnp.float32),
            jax.ShapeDtypeStruct((NUM_LAYERS, BP, HP), jnp.float32),
            jax.ShapeDtypeStruct((NUM_LAYERS, BP, HP), jnp.float32),
        ),
        in_specs=[vmem] * 13,
        out_specs=(vmem, vmem, vmem),
        scratch_shapes=[
            pltpu.VMEM((T * BP, 4 * HP), jnp.float32),   # reused gate-input buffer
            pltpu.VMEM((T * BP, HP), jnp.float32),       # reused hidden history
        ],
        compiler_params=pltpu.CompilerParams(
            vmem_limit_bytes=32 * 1024 * 1024),
        # TODO(synk): once T*B grows past VMEM, chunk the sequence with a
        # ("arbitrary",) time grid and carry (h, c) across grid steps.
    )(x2d, h0_p, c0_p,
      wih0_p, whh0_p, b0_p,
      wih1_p, whh1_p, b1_p,
      wout_p, bout_p, umin_p, umax_p)

    out = out2d.reshape(T, BP, UP)[:, :B, :U_dim]
    out = jnp.transpose(out, (1, 0, 2))                       # (B, T, U)
    h_n = hn_p[:, :B, :H]
    c_n = cn_p[:, :B, :H]
    return out, (h_n, c_n)


def init_params(key):
    """Deterministic synthetic parameters matching nn.LSTM / nn.Linear shapes."""
    H, Q, U = HIDDEN_SIZE, Q_dim, U_dim
    k = 1.0 / math.sqrt(H)
    keys = jax.random.split(key, 12)

    def u(k_, shape):
        return jax.random.uniform(k_, shape, jnp.float32, -k, k)

    # stored transposed: (in_features, 4H) so the kernel does x @ W
    wih0 = u(keys[0], (Q, 4 * H))
    whh0 = u(keys[1], (H, 4 * H))
    b0 = u(keys[2], (1, 4 * H)) + u(keys[3], (1, 4 * H))   # bias_ih + bias_hh
    wih1 = u(keys[4], (H, 4 * H))
    whh1 = u(keys[5], (H, 4 * H))
    b1 = u(keys[6], (1, 4 * H)) + u(keys[7], (1, 4 * H))
    wout = u(keys[8], (H, U))
    bout = u(keys[9], (1, U))

    umin = jnp.array([[0.0, -1.5 * dt, 0.0, -1.5 * dt, 0.0, -1.5 * dt]], jnp.float32)
    umax = jnp.array([[0.7 * dt, 1.5 * dt, 0.7 * dt, 1.5 * dt, 0.7 * dt, 1.5 * dt]], jnp.float32)

    return dict(wih0=wih0, whh0=whh0, b0=b0, wih1=wih1, whh1=whh1, b1=b1,
                wout=wout, bout=bout, umin=umin, umax=umax)


def rnn_reference(x, h_state, p):
    """Pure-JAX reference of the same forward (for correctness check)."""
    h0, c0 = h_state
    H = HIDDEN_SIZE

    def cell(xt, h, c, wih, whh, b):
        g = xt @ wih + h @ whh + b
        i = jax.nn.sigmoid(g[:, :H])
        f = jax.nn.sigmoid(g[:, H:2 * H])
        gg = jnp.tanh(g[:, 2 * H:3 * H])
        o = jax.nn.sigmoid(g[:, 3 * H:])
        c = f * c + i * gg
        return o * jnp.tanh(c), c

    def step(carry, xt):
        a, ca, b_, cb = carry
        a, ca = cell(xt, a, ca, p["wih0"], p["whh0"], p["b0"])
        b_, cb = cell(a, b_, cb, p["wih1"], p["whh1"], p["b1"])
        y = b_ @ p["wout"] + p["bout"]
        y = p["umin"] + (p["umax"] - p["umin"]) * (jnp.tanh(y) + 1.0) * 0.5
        return (a, ca, b_, cb), y

    (a, ca, b_, cb), ys = lax.scan(step, (h0[0], c0[0], h0[1], c0[1]),
                                   jnp.transpose(x, (1, 0, 2)))
    return (jnp.transpose(ys, (1, 0, 2)),
            (jnp.stack([a, b_]), jnp.stack([ca, cb])))


if __name__ == "__main__":
    B, T = 2, 8
    key = jax.random.PRNGKey(0)
    kx, kh, kc, kp = jax.random.split(key, 4)

    x = jax.random.normal(kx, (B, T, Q_dim), jnp.float32)
    h0 = jax.random.normal(kh, (NUM_LAYERS, B, HIDDEN_SIZE), jnp.float32)
    c0 = jax.random.normal(kc, (NUM_LAYERS, B, HIDDEN_SIZE), jnp.float32)
    params = init_params(kp)

    fwd = jax.jit(rnn_forward)
    out, (h_n, c_n) = fwd(x, (h0, c0), params)
    jax.block_until_ready((out, h_n, c_n))

    ref_out, (ref_h, ref_c) = rnn_reference(x, (h0, c0), params)
    assert out.shape == (B, T, U_dim)
    assert h_n.shape == (NUM_LAYERS, B, HIDDEN_SIZE)
    assert c_n.shape == (NUM_LAYERS, B, HIDDEN_SIZE)
    assert jnp.max(jnp.abs(out - ref_out)) < 2e-4
    assert jnp.max(jnp.abs(h_n - ref_h)) < 2e-4
    assert jnp.max(jnp.abs(c_n - ref_c)) < 2e-4

    print("KERNEL_OK")
</pallas_src>

<mosaic_0001>
module attributes {stable_mosaic.version = 11 : i64} {
  func.func @_rnn_kernel(%arg0: memref<64x12xf32, #tpu.memory_space<vmem>>, %arg1: memref<2x8x128xf32, #tpu.memory_space<vmem>>, %arg2: memref<2x8x128xf32, #tpu.memory_space<vmem>>, %arg3: memref<12x512xf32, #tpu.memory_space<vmem>>, %arg4: memref<128x512xf32, #tpu.memory_space<vmem>>, %arg5: memref<1x512xf32, #tpu.memory_space<vmem>>, %arg6: memref<128x512xf32, #tpu.memory_space<vmem>>, %arg7: memref<128x512xf32, #tpu.memory_space<vmem>>, %arg8: memref<1x512xf32, #tpu.memory_space<vmem>>, %arg9: memref<128x128xf32, #tpu.memory_space<vmem>>, %arg10: memref<1x128xf32, #tpu.memory_space<vmem>>, %arg11: memref<1x128xf32, #tpu.memory_space<vmem>>, %arg12: memref<1x128xf32, #tpu.memory_space<vmem>>, %arg13: memref<64x128xf32, #tpu.memory_space<vmem>>, %arg14: memref<2x8x128xf32, #tpu.memory_space<vmem>>, %arg15: memref<2x8x128xf32, #tpu.memory_space<vmem>>, %arg16: memref<64x512xf32, #tpu.memory_space<vmem>>, %arg17: memref<64x128xf32, #tpu.memory_space<vmem>>) attributes {dimension_semantics = [], scalar_prefetch = 0 : i64, scratch_operands = 2 : i64, tpu.core_type = #tpu.core_type<tc>} {
    %c0 = arith.constant 0 : index
    %c0_0 = arith.constant 0 : index
    %0 = vector.load %arg4[%c0, %c0_0] : memref<128x512xf32, #tpu.memory_space<vmem>>, vector<128x512xf32>
    %c0_1 = arith.constant 0 : index
    %c0_2 = arith.constant 0 : index
    %1 = vector.load %arg7[%c0_1, %c0_2] : memref<128x512xf32, #tpu.memory_space<vmem>>, vector<128x512xf32>
    %c0_3 = arith.constant 0 : index
    %c0_4 = arith.constant 0 : index
    %2 = vector.load %arg0[%c0_3, %c0_4] : memref<64x12xf32, #tpu.memory_space<vmem>>, vector<64x12xf32>
    %c0_5 = arith.constant 0 : index
    %c0_6 = arith.constant 0 : index
    %3 = vector.load %arg3[%c0_5, %c0_6] : memref<12x512xf32, #tpu.memory_space<vmem>>, vector<12x512xf32>
    %cst = arith.constant dense<0.000000e+00> : vector<64x512xf32>
    %4 = tpu.matmul %2, %3, %cst {dimension_numbers = #tpu.dot_dimension_numbers<[1], [0], [0], [1], [0, 0, 1, 1], [], []>} : vector<64x12xf32>, vector<12x512xf32>, vector<64x512xf32> -> vector<64x512xf32>
    %c0_7 = arith.constant 0 : index
    %c0_8 = arith.constant 0 : index
    %5 = vector.load %arg5[%c0_7, %c0_8] : memref<1x512xf32, #tpu.memory_space<vmem>>, vector<1x512xf32>
    %6 = vector.broadcast %5 : vector<1x512xf32> to vector<64x512xf32>
    %7 = arith.addf %4, %6 : vector<64x512xf32>
    %c0_9 = arith.constant 0 : index
    %c0_10 = arith.constant 0 : index
    %8 = vector.load %arg16[%c0_9, %c0_10] : memref<64x512xf32, #tpu.memory_space<vmem>>, vector<64x512xf32>
    tpu.vector_store %arg16[%c0_9, %c0_10], %7 {strides = array<i32>} : memref<64x512xf32, #tpu.memory_space<vmem>>, vector<64x512xf32>,
    %c0_11 = arith.constant 0 : index
    %c0_12 = arith.constant 0 : index
    %c0_13 = arith.constant 0 : index
    %9 = vector.load %arg1[%c0_11, %c0_12, %c0_13] : memref<2x8x128xf32, #tpu.memory_space<vmem>>, vector<1x8x128xf32>
    %10 = vector.shape_cast %9 : vector<1x8x128xf32> to vector<8x128xf32>
    %c0_14 = arith.constant 0 : index
    %c0_15 = arith.constant 0 : index
    %c0_16 = arith.constant 0 : index
    %11 = vector.load %arg2[%c0_14, %c0_15, %c0_16] : memref<2x8x128xf32, #tpu.memory_space<vmem>>, vector<1x8x128xf32>
    %12 = vector.shape_cast %11 : vector<1x8x128xf32> to vector<8x128xf32>
    %c0_i32 = arith.constant 0 : i32
    %c8_i32 = arith.constant 8 : i32
    %13 = arith.muli %c0_i32, %c8_i32 : i32
    %14 = tpu.assume_multiple %13, 8 : i32
    %15 = arith.index_cast %14 : i32 to index
    %c0_17 = arith.constant 0 : index
    %16 = vector.load %arg16[%15, %c0_17] : memref<64x512xf32, #tpu.memory_space<vmem>>, vector<8x512xf32>
    %cst_18 = arith.constant dense<0.000000e+00> : vector<8x512xf32>
    %17 = tpu.matmul %10, %0, %cst_18 {dimension_numbers = #tpu.dot_dimension_numbers<[1], [0], [0], [1], [0, 0, 1, 1], [], []>} : vector<8x128xf32>, vector<128x512xf32>, vector<8x512xf32> -> vector<8x512xf32>
    %18 = arith.addf %16, %17 : vector<8x512xf32>
    %19 = vector.extract_strided_slice %18 {offsets = [0, 0], sizes = [8, 128], strides = [1, 1]} : vector<8x512xf32> to vector<8x128xf32>
    %20 = arith.negf %19 : vector<8x128xf32>
    %21 = math.exp %20 : vector<8x128xf32>
    %cst_19 = arith.constant 1.000000e+00 : f32
    %22 = vector.broadcast %cst_19 : f32 to vector<8x128xf32>
    %23 = arith.addf %22, %21 : vector<8x128xf32>
    %24 = arith.divf %22, %23 : vector<8x128xf32>
    %25 = vector.extract_strided_slice %18 {offsets = [0, 128], sizes = [8, 128], strides = [1, 1]} : vector<8x512xf32> to vector<8x128xf32>
    %26 = arith.negf %25 : vector<8x128xf32>
    %27 = math.exp %26 : vector<8x128xf32>
    %cst_20 = arith.constant 1.000000e+00 : f32
    %28 = vector.broadcast %cst_20 : f32 to vector<8x128xf32>
    %29 = arith.addf %28, %27 : vector<8x128xf32>
    %30 = arith.divf %28, %29 : vector<8x128xf32>
    %31 = vector.extract_strided_slice %18 {offsets = [0, 256], sizes = [8, 128], strides = [1, 1]} : vector<8x512xf32> to vector<8x128xf32>
    %32 = math.tanh %31 : vector<8x128xf32>
    %33 = vector.extract_strided_slice %18 {offsets = [0, 384], sizes = [8, 128], strides = [1, 1]} : vector<8x512xf32> to vector<8x128xf32>
    %34 = arith.negf %33 : vector<8x128xf32>
    %35 = math.exp %34 : vector<8x128xf32>
    %cst_21 = arith.constant 1.000000e+00 : f32
    %36 = vector.broadcast %cst_21 : f32 to vector<8x128xf32>
    %37 = arith.addf %36, %35 : vector<8x128xf32>
    %38 = arith.divf %36, %37 : vector<8x128xf32>
    %39 = arith.mulf %30, %12 : vector<8x128xf32>
    %40 = arith.mulf %24, %32 : vector<8x128xf32>
    %41 = arith.addf %39, %40 : vector<8x128xf32>
    %42 = math.tanh %41 : vector<8x128xf32>
    %43 = arith.mulf %38, %42 : vector<8x128xf32>
    %44 = arith.index_cast %14 : i32 to index
    %c0_22 = arith.constant 0 : index
    %45 = vector.load %arg17[%44, %c0_22] : memref<64x128xf32, #tpu.memory_space<vmem>>, vector<8x128xf32>
    tpu.vector_store %arg17[%44, %c0_22], %43 {strides = array<i32>} : memref<64x128xf32, #tpu.memory_space<vmem>>, vector<8x128xf32>,
    %c1_i32 = arith.constant 1 : i32
    %c8_i32_23 = arith.constant 8 : i32
    %46 = arith.muli %c1_i32, %c8_i32_23 : i32
    %47 = tpu.assume_multiple %46, 8 : i32
    %48 = arith.index_cast %47 : i32 to index
    %c0_24 = arith.constant 0 : index
    %49 = vector.load %arg16[%48, %c0_24] : memref<64x512xf32, #tpu.memory_space<vmem>>, vector<8x512xf32>
    %cst_25 = arith.constant dense<0.000000e+00> : vector<8x512xf32>
    %50 = tpu.matmul %43, %0, %cst_25 {dimension_numbers = #tpu.dot_dimension_numbers<[1], [0], [0], [1], [0, 0, 1, 1], [], []>} : vector<8x128xf32>, vector<128x512xf32>, vector<8x512xf32> -> vector<8x512xf32>
    %51 = arith.addf %49, %50 : vector<8x512xf32>
    %52 = vector.extract_strided_slice %51 {offsets = [0, 0], sizes = [8, 128], strides = [1, 1]} : vector<8x512xf32> to vector<8x128xf32>
    %53 = arith.negf %52 : vector<8x128xf32>
    %54 = math.exp %53 : vector<8x128xf32>
    %cst_26 = arith.constant 1.000000e+00 : f32
    %55 = vector.broadcast %cst_26 : f32 to vector<8x128xf32>
    %56 = arith.addf %55, %54 : vector<8x128xf32>
    %57 = arith.divf %55, %56 : vector<8x128xf32>
    %58 = vector.extract_strided_slice %51 {offsets = [0, 128], sizes = [8, 128], strides = [1, 1]} : vector<8x512xf32> to vector<8x128xf32>
    %59 = arith.negf %58 : vector<8x128xf32>
    %60 = math.exp %59 : vector<8x128xf32>
    %cst_27 = arith.constant 1.000000e+00 : f32
    %61 = vector.broadcast %cst_27 : f32 to vector<8x128xf32>
    %62 = arith.addf %61, %60 : vector<8x128xf32>
    %63 = arith.divf %61, %62 : vector<8x128xf32>
    %64 = vector.extract_strided_slice %51 {offsets = [0, 256], sizes = [8, 128], strides = [1, 1]} : vector<8x512xf32> to vector<8x128xf32>
    %65 = math.tanh %64 : vector<8x128xf32>
    %66 = vector.extract_strided_slice %51 {offsets = [0, 384], sizes = [8, 128], strides = [1, 1]} : vector<8x512xf32> to vector<8x128xf32>
    %67 = arith.negf %66 : vector<8x128xf32>
    %68 = math.exp %67 : vector<8x128xf32>
    %cst_28 = arith.constant 1.000000e+00 : f32
    %69 = vector.broadcast %cst_28 : f32 to vector<8x128xf32>
    %70 = arith.addf %69, %68 : vector<8x128xf32>
    %71 = arith.divf %69, %70 : vector<8x128xf32>
    %72 = arith.mulf %63, %41 : vector<8x128xf32>
    %73 = arith.mulf %57, %65 : vector<8x128xf32>
    %74 = arith.addf %72, %73 : vector<8x128xf32>
    %75 = math.tanh %74 : vector<8x128xf32>
    %76 = arith.mulf %71, %75 : vector<8x128xf32>
    %77 = arith.index_cast %47 : i32 to index
    %c0_29 = arith.constant 0 : index
    %78 = vector.load %arg17[%77, %c0_29] : memref<64x128xf32, #tpu.memory_space<vmem>>, vector<8x128xf32>
    tpu.vector_store %arg17[%77, %c0_29], %76 {strides = array<i32>} : memref<64x128xf32, #tpu.memory_space<vmem>>, vector<8x128xf32>,
    %c2_i32 = arith.constant 2 : i32
    %c8_i32_30 = arith.constant 8 : i32
    %79 = arith.muli %c2_i32, %c8_i32_30 : i32
    %80 = tpu.assume_multiple %79, 8 : i32
    %81 = arith.index_cast %80 : i32 to index
    %c0_31 = arith.constant 0 : index
    %82 = vector.load %arg16[%81, %c0_31] : memref<64x512xf32, #tpu.memory_space<vmem>>, vector<8x512xf32>
    %cst_32 = arith.constant dense<0.000000e+00> : vector<8x512xf32>
    %83 = tpu.matmul %76, %0, %cst_32 {dimension_numbers = #tpu.dot_dimension_numbers<[1], [0], [0], [1], [0, 0, 1, 1], [], []>} : vector<8x128xf32>, vector<128x512xf32>, vector<8x512xf32> -> vector<8x512xf32>
    %84 = arith.addf %82, %83 : vector<8x512xf32>
    %85 = vector.extract_strided_slice %84 {offsets = [0, 0], sizes = [8, 128], strides = [1, 1]} : vector<8x512xf32> to vector<8x128xf32>
    %86 = arith.negf %85 : vector<8x128xf32>
    %87 = math.exp %86 : vector<8x128xf32>
    %cst_33 = arith.constant 1.000000e+00 : f32
    %88 = vector.broadcast %cst_33 : f32 to vector<8x128xf32>
    %89 = arith.addf %88, %87 : vector<8x128xf32>
    %90 = arith.divf %88, %89 : vector<8x128xf32>
    %91 = vector.extract_strided_slice %84 {offsets = [0, 128], sizes = [8, 128], strides = [1, 1]} : vector<8x512xf32> to vector<8x128xf32>
    %92 = arith.negf %91 : vector<8x128xf32>
    %93 = math.exp %92 : vector<8x128xf32>
    %cst_34 = arith.constant 1.000000e+00 : f32
    %94 = vector.broadcast %cst_34 : f32 to vector<8x128xf32>
    %95 = arith.addf %94, %93 : vector<8x128xf32>
    %96 = arith.divf %94, %95 : vector<8x128xf32>
    %97 = vector.extract_strided_slice %84 {offsets = [0, 256], sizes = [8, 128], strides = [1, 1]} : vector<8x512xf32> to vector<8x128xf32>
    %98 = math.tanh %97 : vector<8x128xf32>
    %99 = vector.extract_strided_slice %84 {offsets = [0, 384], sizes = [8, 128], strides = [1, 1]} : vector<8x512xf32> to vector<8x128xf32>
    %100 = arith.negf %99 : vector<8x128xf32>
    %101 = math.exp %100 : vector<8x128xf32>
    %cst_35 = arith.constant 1.000000e+00 : f32
    %102 = vector.broadcast %cst_35 : f32 to vector<8x128xf32>
    %103 = arith.addf %102, %101 : vector<8x128xf32>
    %104 = arith.divf %102, %103 : vector<8x128xf32>
    %105 = arith.mulf %96, %74 : vector<8x128xf32>
    %106 = arith.mulf %90, %98 : vector<8x128xf32>
    %107 = arith.addf %105, %106 : vector<8x128xf32>
    %108 = math.tanh %107 : vector<8x128xf32>
    %109 = arith.mulf %104, %108 : vector<8x128xf32>
    %110 = arith.index_cast %80 : i32 to index
    %c0_36 = arith.constant 0 : index
    %111 = vector.load %arg17[%110, %c0_36] : memref<64x128xf32, #tpu.memory_space<vmem>>, vector<8x128xf32>
    tpu.vector_store %arg17[%110, %c0_36], %109 {strides = array<i32>} : memref<64x128xf32, #tpu.memory_space<vmem>>, vector<8x128xf32>,
    %c3_i32 = arith.constant 3 : i32
    %c8_i32_37 = arith.constant 8 : i32
    %112 = arith.muli %c3_i32, %c8_i32_37 : i32
    %113 = tpu.assume_multiple %112, 8 : i32
    %114 = arith.index_cast %113 : i32 to index
    %c0_38 = arith.constant 0 : index
    %115 = vector.load %arg16[%114, %c0_38] : memref<64x512xf32, #tpu.memory_space<vmem>>, vector<8x512xf32>
    %cst_39 = arith.constant dense<0.000000e+00> : vector<8x512xf32>
    %116 = tpu.matmul %109, %0, %cst_39 {dimension_numbers = #tpu.dot_dimension_numbers<[1], [0], [0], [1], [0, 0, 1, 1], [], []>} : vector<8x128xf32>, vector<128x512xf32>, vector<8x512xf32> -> vector<8x512xf32>
    %117 = arith.addf %115, %116 : vector<8x512xf32>
    %118 = vector.extract_strided_slice %117 {offsets = [0, 0], sizes = [8, 128], strides = [1, 1]} : vector<8x512xf32> to vector<8x128xf32>
    %119 = arith.negf %118 : vector<8x128xf32>
    %120 = math.exp %119 : vector<8x128xf32>
    %cst_40 = arith.constant 1.000000e+00 : f32
    %121 = vector.broadcast %cst_40 : f32 to vector<8x128xf32>
    %122 = arith.addf %121, %120 : vector<8x128xf32>
    %123 = arith.divf %121, %122 : vector<8x128xf32>
    %124 = vector.extract_strided_slice %117 {offsets = [0, 128], sizes = [8, 128], strides = [1, 1]} : vector<8x512xf32> to vector<8x128xf32>
    %125 = arith.negf %124 : vector<8x128xf32>
    %126 = math.exp %125 : vector<8x128xf32>
    %cst_41 = arith.constant 1.000000e+00 : f32
    %127 = vector.broadcast %cst_41 : f32 to vector<8x128xf32>
    %128 = arith.addf %127, %126 : vector<8x128xf32>
    %129 = arith.divf %127, %128 : vector<8x128xf32>
    %130 = vector.extract_strided_slice %117 {offsets = [0, 256], sizes = [8, 128], strides = [1, 1]} : vector<8x512xf32> to vector<8x128xf32>
    %131 = math.tanh %130 : vector<8x128xf32>
    %132 = vector.extract_strided_slice %117 {offsets = [0, 384], sizes = [8, 128], strides = [1, 1]} : vector<8x512xf32> to vector<8x128xf32>
    %133 = arith.negf %132 : vector<8x128xf32>
    %134 = math.exp %133 : vector<8x128xf32>
    %cst_42 = arith.constant 1.000000e+00 : f32
    %135 = vector.broadcast %cst_42 : f32 to vector<8x128xf32>
    %136 = arith.addf %135, %134 : vector<8x128xf32>
    %137 = arith.divf %135, %136 : vector<8x128xf32>
    %138 = arith.mulf %129, %107 : vector<8x128xf32>
    %139 = arith.mulf %123, %131 : vector<8x128xf32>
    %140 = arith.addf %138, %139 : vector<8x128xf32>
    %141 = math.tanh %140 : vector<8x128xf32>
    %142 = arith.mulf %137, %141 : vector<8x128xf32>
    %143 = arith.index_cast %113 : i32 to index
    %c0_43 = arith.constant 0 : index
    %144 = vector.load %arg17[%143, %c0_43] : memref<64x128xf32, #tpu.memory_space<vmem>>, vector<8x128xf32>
    tpu.vector_store %arg17[%143, %c0_43], %142 {strides = array<i32>} : memref<64x128xf32, #tpu.memory_space<vmem>>, vector<8x128xf32>,
    %c4_i32 = arith.constant 4 : i32
    %c8_i32_44 = arith.constant 8 : i32
    %145 = arith.muli %c4_i32, %c8_i32_44 : i32
    %146 = tpu.assume_multiple %145, 8 : i32
    %147 = arith.index_cast %146 : i32 to index
    %c0_45 = arith.constant 0 : index
    %148 = vector.load %arg16[%147, %c0_45] : memref<64x512xf32, #tpu.memory_space<vmem>>, vector<8x512xf32>
    %cst_46 = arith.constant dense<0.000000e+00> : vector<8x512xf32>
    %149 = tpu.matmul %142, %0, %cst_46 {dimension_numbers = #tpu.dot_dimension_numbers<[1], [0], [0], [1], [0, 0, 1, 1], [], []>} : vector<8x128xf32>, vector<128x512xf32>, vector<8x512xf32> -> vector<8x512xf32>
    %150 = arith.addf %148, %149 : vector<8x512xf32>
    %151 = vector.extract_strided_slice %150 {offsets = [0, 0], sizes = [8, 128], strides = [1, 1]} : vector<8x512xf32> to vector<8x128xf32>
    %152 = arith.negf %151 : vector<8x128xf32>
    %153 = math.exp %152 : vector<8x128xf32>
    %cst_47 = arith.constant 1.000000e+00 : f32
    %154 = vector.broadcast %cst_47 : f32 to vector<8x128xf32>
    %155 = arith.addf %154, %153 : vector<8x128xf32>
    %156 = arith.divf %154, %155 : vector<8x128xf32>
    %157 = vector.extract_strided_slice %150 {offsets = [0, 128], sizes = [8, 128], strides = [1, 1]} : vector<8x512xf32> to vector<8x128xf32>
    %158 = arith.negf %157 : vector<8x128xf32>
    %159 = math.exp %158 : vector<8x128xf32>
    %cst_48 = arith.constant 1.000000e+00 : f32
    %160 = vector.broadcast %cst_48 : f32 to vector<8x128xf32>
    %161 = arith.addf %160, %159 : vector<8x128xf32>
    %162 = arith.divf %160, %161 : vector<8x128xf32>
    %163 = vector.extract_strided_slice %150 {offsets = [0, 256], sizes = [8, 128], strides = [1, 1]} : vector<8x512xf32> to vector<8x128xf32>
    %164 = math.tanh %163 : vector<8x128xf32>
    %165 = vector.extract_strided_slice %150 {offsets = [0, 384], sizes = [8, 128], strides = [1, 1]} : vector<8x512xf32> to vector<8x128xf32>
    %166 = arith.negf %165 : vector<8x128xf32>
    %167 = math.exp %166 : vector<8x128xf32>
    %cst_49 = arith.constant 1.000000e+00 : f32
    %168 = vector.broadcast %cst_49 : f32 to vector<8x128xf32>
    %169 = arith.addf %168, %167 : vector<8x128xf32>
    %170 = arith.divf %168, %169 : vector<8x128xf32>
    %171 = arith.mulf %162, %140 : vector<8x128xf32>
    %172 = arith.mulf %156, %164 : vector<8x128xf32>
    %173 = arith.addf %171, %172 : vector<8x128xf32>
    %174 = math.tanh %173 : vector<8x128xf32>
    %175 = arith.mulf %170, %174 : vector<8x128xf32>
    %176 = arith.index_cast %146 : i32 to index
    %c0_50 = arith.constant 0 : index
    %177 = vector.load %arg17[%176, %c0_50] : memref<64x128xf32, #tpu.memory_space<vmem>>, vector<8x128xf32>
    tpu.vector_store %arg17[%176, %c0_50], %175 {strides = array<i32>} : memref<64x128xf32, #tpu.memory_space<vmem>>, vector<8x128xf32>,
    %c5_i32 = arith.constant 5 : i32
    %c8_i32_51 = arith.constant 8 : i32
    %178 = arith.muli %c5_i32, %c8_i32_51 : i32
    %179 = tpu.assume_multiple %178, 8 : i32
    %180 = arith.index_cast %179 : i32 to index
    %c0_52 = arith.constant 0 : index
    %181 = vector.load %arg16[%180, %c0_52] : memref<64x512xf32, #tpu.memory_space<vmem>>, vector<8x512xf32>
    %cst_53 = arith.constant dense<0.000000e+00> : vector<8x512xf32>
    %182 = tpu.matmul %175, %0, %cst_53 {dimension_numbers = #tpu.dot_dimension_numbers<[1], [0], [0], [1], [0, 0, 1, 1], [], []>} : vector<8x128xf32>, vector<128x512xf32>, vector<8x512xf32> -> vector<8x512xf32>
    %183 = arith.addf %181, %182 : vector<8x512xf32>
    %184 = vector.extract_strided_slice %183 {offsets = [0, 0], sizes = [8, 128], strides = [1, 1]} : vector<8x512xf32> to vector<8x128xf32>
    %185 = arith.negf %184 : vector<8x128xf32>
    %186 = math.exp %185 : vector<8x128xf32>
    %cst_54 = arith.constant 1.000000e+00 : f32
    %187 = vector.broadcast %cst_54 : f32 to vector<8x128xf32>
    %188 = arith.addf %187, %186 : vector<8x128xf32>
    %189 = arith.divf %187, %188 : vector<8x128xf32>
    %190 = vector.extract_strided_slice %183 {offsets = [0, 128], sizes = [8, 128], strides = [1, 1]} : vector<8x512xf32> to vector<8x128xf32>
    %191 = arith.negf %190 : vector<8x128xf32>
    %192 = math.exp %191 : vector<8x128xf32>
    %cst_55 = arith.constant 1.000000e+00 : f32
    %193 = vector.broadcast %cst_55 : f32 to vector<8x128xf32>
    %194 = arith.addf %193, %192 : vector<8x128xf32>
    %195 = arith.divf %193, %194 : vector<8x128xf32>
    %196 = vector.extract_strided_slice %183 {offsets = [0, 256], sizes = [8, 128], strides = [1, 1]} : vector<8x512xf32> to vector<8x128xf32>
    %197 = math.tanh %196 : vector<8x128xf32>
    %198 = vector.extract_strided_slice %183 {offsets = [0, 384], sizes = [8, 128], strides = [1, 1]} : vector<8x512xf32> to vector<8x128xf32>
    %199 = arith.negf %198 : vector<8x128xf32>
    %200 = math.exp %199 : vector<8x128xf32>
    %cst_56 = arith.constant 1.000000e+00 : f32
    %201 = vector.broadcast %cst_56 : f32 to vector<8x128xf32>
    %202 = arith.addf %201, %200 : vector<8x128xf32>
    %203 = arith.divf %201, %202 : vector<8x128xf32>
    %204 = arith.mulf %195, %173 : vector<8x128xf32>
    %205 = arith.mulf %189, %197 : vector<8x128xf32>
    %206 = arith.addf %204, %205 : vector<8x128xf32>
    %207 = math.tanh %206 : vector<8x128xf32>
    %208 = arith.mulf %203, %207 : vector<8x128xf32>
    %209 = arith.index_cast %179 : i32 to index
    %c0_57 = arith.constant 0 : index
    %210 = vector.load %arg17[%209, %c0_57] : memref<64x128xf32, #tpu.memory_space<vmem>>, vector<8x128xf32>
    tpu.vector_store %arg17[%209, %c0_57], %208 {strides = array<i32>} : memref<64x128xf32, #tpu.memory_space<vmem>>, vector<8x128xf32>,
    %c6_i32 = arith.constant 6 : i32
    %c8_i32_58 = arith.constant 8 : i32
    %211 = arith.muli %c6_i32, %c8_i32_58 : i32
    %212 = tpu.assume_multiple %211, 8 : i32
    %213 = arith.index_cast %212 : i32 to index
    %c0_59 = arith.constant 0 : index
    %214 = vector.load %arg16[%213, %c0_59] : memref<64x512xf32, #tpu.memory_space<vmem>>, vector<8x512xf32>
    %cst_60 = arith.constant dense<0.000000e+00> : vector<8x512xf32>
    %215 = tpu.matmul %208, %0, %cst_60 {dimension_numbers = #tpu.dot_dimension_numbers<[1], [0], [0], [1], [0, 0, 1, 1], [], []>} : vector<8x128xf32>, vector<128x512xf32>, vector<8x512xf32> -> vector<8x512xf32>
    %216 = arith.addf %214, %215 : vector<8x512xf32>
    %217 = vector.extract_strided_slice %216 {offsets = [0, 0], sizes = [8, 128], strides = [1, 1]} : vector<8x512xf32> to vector<8x128xf32>
    %218 = arith.negf %217 : vector<8x128xf32>
    %219 = math.exp %218 : vector<8x128xf32>
    %cst_61 = arith.constant 1.000000e+00 : f32
    %220 = vector.broadcast %cst_61 : f32 to vector<8x128xf32>
    %221 = arith.addf %220, %219 : vector<8x128xf32>
    %222 = arith.divf %220, %221 : vector<8x128xf32>
    %223 = vector.extract_strided_slice %216 {offsets = [0, 128], sizes = [8, 128], strides = [1, 1]} : vector<8x512xf32> to vector<8x128xf32>
    %224 = arith.negf %223 : vector<8x128xf32>
    %225 = math.exp %224 : vector<8x128xf32>
    %cst_62 = arith.constant 1.000000e+00 : f32
    %226 = vector.broadcast %cst_62 : f32 to vector<8x128xf32>
    %227 = arith.addf %226, %225 : vector<8x128xf32>
    %228 = arith.divf %226, %227 : vector<8x128xf32>
    %229 = vector.extract_strided_slice %216 {offsets = [0, 256], sizes = [8, 128], strides = [1, 1]} : vector<8x512xf32> to vector<8x128xf32>
    %230 = math.tanh %229 : vector<8x128xf32>
    %231 = vector.extract_strided_slice %216 {offsets = [0, 384], sizes = [8, 128], strides = [1, 1]} : vector<8x512xf32> to vector<8x128xf32>
    %232 = arith.negf %231 : vector<8x128xf32>
    %233 = math.exp %232 : vector<8x128xf32>
    %cst_63 = arith.constant 1.000000e+00 : f32
    %234 = vector.broadcast %cst_63 : f32 to vector<8x128xf32>
    %235 = arith.addf %234, %233 : vector<8x128xf32>
    %236 = arith.divf %234, %235 : vector<8x128xf32>
    %237 = arith.mulf %228, %206 : vector<8x128xf32>
    %238 = arith.mulf %222, %230 : vector<8x128xf32>
    %239 = arith.addf %237, %238 : vector<8x128xf32>
    %240 = math.tanh %239 : vector<8x128xf32>
    %241 = arith.mulf %236, %240 : vector<8x128xf32>
    %242 = arith.index_cast %212 : i32 to index
    %c0_64 = arith.constant 0 : index
    %243 = vector.load %arg17[%242, %c0_64] : memref<64x128xf32, #tpu.memory_space<vmem>>, vector<8x128xf32>
    tpu.vector_store %arg17[%242, %c0_64], %241 {strides = array<i32>} : memref<64x128xf32, #tpu.memory_space<vmem>>, vector<8x128xf32>,
    %c7_i32 = arith.constant 7 : i32
    %c8_i32_65 = arith.constant 8 : i32
    %244 = arith.muli %c7_i32, %c8_i32_65 : i32
    %245 = tpu.assume_multiple %244, 8 : i32
    %246 = arith.index_cast %245 : i32 to index
    %c0_66 = arith.constant 0 : index
    %247 = vector.load %arg16[%246, %c0_66] : memref<64x512xf32, #tpu.memory_space<vmem>>, vector<8x512xf32>
    %cst_67 = arith.constant dense<0.000000e+00> : vector<8x512xf32>
    %248 = tpu.matmul %241, %0, %cst_67 {dimension_numbers = #tpu.dot_dimension_numbers<[1], [0], [0], [1], [0, 0, 1, 1], [], []>} : vector<8x128xf32>, vector<128x512xf32>, vector<8x512xf32> -> vector<8x512xf32>
    %249 = arith.addf %247, %248 : vector<8x512xf32>
    %250 = vector.extract_strided_slice %249 {offsets = [0, 0], sizes = [8, 128], strides = [1, 1]} : vector<8x512xf32> to vector<8x128xf32>
    %251 = arith.negf %250 : vector<8x128xf32>
    %252 = math.exp %251 : vector<8x128xf32>
    %cst_68 = arith.constant 1.000000e+00 : f32
    %253 = vector.broadcast %cst_68 : f32 to vector<8x128xf32>
    %254 = arith.addf %253, %252 : vector<8x128xf32>
    %255 = arith.divf %253, %254 : vector<8x128xf32>
    %256 = vector.extract_strided_slice %249 {offsets = [0, 128], sizes = [8, 128], strides = [1, 1]} : vector<8x512xf32> to vector<8x128xf32>
    %257 = arith.negf %256 : vector<8x128xf32>
    %258 = math.exp %257 : vector<8x128xf32>
    %cst_69 = arith.constant 1.000000e+00 : f32
    %259 = vector.broadcast %cst_69 : f32 to vector<8x128xf32>
    %260 = arith.addf %259, %258 : vector<8x128xf32>
    %261 = arith.divf %259, %260 : vector<8x128xf32>
    %262 = vector.extract_strided_slice %249 {offsets = [0, 256], sizes = [8, 128], strides = [1, 1]} : vector<8x512xf32> to vector<8x128xf32>
    %263 = math.tanh %262 : vector<8x128xf32>
    %264 = vector.extract_strided_slice %249 {offsets = [0, 384], sizes = [8, 128], strides = [1, 1]} : vector<8x512xf32> to vector<8x128xf32>
    %265 = arith.negf %264 : vector<8x128xf32>
    %266 = math.exp %265 : vector<8x128xf32>
    %cst_70 = arith.constant 1.000000e+00 : f32
    %267 = vector.broadcast %cst_70 : f32 to vector<8x128xf32>
    %268 = arith.addf %267, %266 : vector<8x128xf32>
    %269 = arith.divf %267, %268 : vector<8x128xf32>
    %270 = arith.mulf %261, %239 : vector<8x128xf32>
    %271 = arith.mulf %255, %263 : vector<8x128xf32>
    %272 = arith.addf %270, %271 : vector<8x128xf32>
    %273 = math.tanh %272 : vector<8x128xf32>
    %274 = arith.mulf %269, %273 : vector<8x128xf32>
    %275 = arith.index_cast %245 : i32 to index
    %c0_71 = arith.constant 0 : index
    %276 = vector.load %arg17[%275, %c0_71] : memref<64x128xf32, #tpu.memory_space<vmem>>, vector<8x128xf32>
    tpu.vector_store %arg17[%275, %c0_71], %274 {strides = array<i32>} : memref<64x128xf32, #tpu.memory_space<vmem>>, vector<8x128xf32>,
    %c8_i32_72 = arith.constant 8 : i32
    %c0_73 = arith.constant 0 : index
    %c0_74 = arith.constant 0 : index
    %c0_75 = arith.constant 0 : index
    %277 = vector.load %arg14[%c0_73, %c0_74, %c0_75] : memref<2x8x128xf32, #tpu.memory_space<vmem>>, vector<1x8x128xf32>
    %278 = vector.shape_cast %277 : vector<1x8x128xf32> to vector<8x128xf32>
    %279 = vector.shape_cast %274 : vector<8x128xf32> to vector<1x8x128xf32>
    tpu.vector_store %arg14[%c0_73, %c0_74, %c0_75], %279 {strides = array<i32>} : memref<2x8x128xf32, #tpu.memory_space<vmem>>, vector<1x8x128xf32>,
    %c0_76 = arith.constant 0 : index
    %c0_77 = arith.constant 0 : index
    %c0_78 = arith.constant 0 : index
    %280 = vector.load %arg15[%c0_76, %c0_77, %c0_78] : memref<2x8x128xf32, #tpu.memory_space<vmem>>, vector<1x8x128xf32>
    %281 = vector.shape_cast %280 : vector<1x8x128xf32> to vector<8x128xf32>
    %282 = vector.shape_cast %272 : vector<8x128xf32> to vector<1x8x128xf32>
    tpu.vector_store %arg15[%c0_76, %c0_77, %c0_78], %282 {strides = array<i32>} : memref<2x8x128xf32, #tpu.memory_space<vmem>>, vector<1x8x128xf32>,
    %c0_79 = arith.constant 0 : index
    %c0_80 = arith.constant 0 : index
    %283 = vector.load %arg17[%c0_79, %c0_80] : memref<64x128xf32, #tpu.memory_space<vmem>>, vector<64x128xf32>
    %c0_81 = arith.constant 0 : index
    %c0_82 = arith.constant 0 : index
    %284 = vector.load %arg6[%c0_81, %c0_82] : memref<128x512xf32, #tpu.memory_space<vmem>>, vector<128x512xf32>
    %cst_83 = arith.constant dense<0.000000e+00> : vector<64x512xf32>
    %285 = tpu.matmul %283, %284, %cst_83 {dimension_numbers = #tpu.dot_dimension_numbers<[1], [0], [0], [1], [0, 0, 1, 1], [], []>} : vector<64x128xf32>, vector<128x512xf32>, vector<64x512xf32> -> vector<64x512xf32>
    %c0_84 = arith.constant 0 : index
    %c0_85 = arith.constant 0 : index
    %286 = vector.load %arg8[%c0_84, %c0_85] : memref<1x512xf32, #tpu.memory_space<vmem>>, vector<1x512xf32>
    %287 = vector.broadcast %286 : vector<1x512xf32> to vector<64x512xf32>
    %288 = arith.addf %285, %287 : vector<64x512xf32>
    %c0_86 = arith.constant 0 : index
    %c0_87 = arith.constant 0 : index
    %289 = vector.load %arg16[%c0_86, %c0_87] : memref<64x512xf32, #tpu.memory_space<vmem>>, vector<64x512xf32>
    tpu.vector_store %arg16[%c0_86, %c0_87], %288 {strides = array<i32>} : memref<64x512xf32, #tpu.memory_space<vmem>>, vector<64x512xf32>,
    %c1 = arith.constant 1 : index
    %c0_88 = arith.constant 0 : index
    %c0_89 = arith.constant 0 : index
    %290 = vector.load %arg1[%c1, %c0_88, %c0_89] : memref<2x8x128xf32, #tpu.memory_space<vmem>>, vector<1x8x128xf32>
    %291 = vector.shape_cast %290 : vector<1x8x128xf32> to vector<8x128xf32>
    %c1_90 = arith.constant 1 : index
    %c0_91 = arith.constant 0 : index
    %c0_92 = arith.constant 0 : index
    %292 = vector.load %arg2[%c1_90, %c0_91, %c0_92] : memref<2x8x128xf32, #tpu.memory_space<vmem>>, vector<1x8x128xf32>
    %293 = vector.shape_cast %292 : vector<1x8x128xf32> to vector<8x128xf32>
    %c0_i32_93 = arith.constant 0 : i32
    %c8_i32_94 = arith.constant 8 : i32
    %294 = arith.muli %c0_i32_93, %c8_i32_94 : i32
    %295 = tpu.assume_multiple %294, 8 : i32
    %296 = arith.index_cast %295 : i32 to index
    %c0_95 = arith.constant 0 : index
    %297 = vector.load %arg16[%296, %c0_95] : memref<64x512xf32, #tpu.memory_space<vmem>>, vector<8x512xf32>
    %cst_96 = arith.constant dense<0.000000e+00> : vector<8x512xf32>
    %298 = tpu.matmul %291, %1, %cst_96 {dimension_numbers = #tpu.dot_dimension_numbers<[1], [0], [0], [1], [0, 0, 1, 1], [], []>} : vector<8x128xf32>, vector<128x512xf32>, vector<8x512xf32> -> vector<8x512xf32>
    %299 = arith.addf %297, %298 : vector<8x512xf32>
    %300 = vector.extract_strided_slice %299 {offsets = [0, 0], sizes = [8, 128], strides = [1, 1]} : vector<8x512xf32> to vector<8x128xf32>
    %301 = arith.negf %300 : vector<8x128xf32>
    %302 = math.exp %301 : vector<8x128xf32>
    %cst_97 = arith.constant 1.000000e+00 : f32
    %303 = vector.broadcast %cst_97 : f32 to vector<8x128xf32>
    %304 = arith.addf %303, %302 : vector<8x128xf32>
    %305 = arith.divf %303, %304 : vector<8x128xf32>
    %306 = vector.extract_strided_slice %299 {offsets = [0, 128], sizes = [8, 128], strides = [1, 1]} : vector<8x512xf32> to vector<8x128xf32>
    %307 = arith.negf %306 : vector<8x128xf32>
    %308 = math.exp %307 : vector<8x128xf32>
    %cst_98 = arith.constant 1.000000e+00 : f32
    %309 = vector.broadcast %cst_98 : f32 to vector<8x128xf32>
    %310 = arith.addf %309, %308 : vector<8x128xf32>
    %311 = arith.divf %309, %310 : vector<8x128xf32>
    %312 = vector.extract_strided_slice %299 {offsets = [0, 256], sizes = [8, 128], strides = [1, 1]} : vector<8x512xf32> to vector<8x128xf32>
    %313 = math.tanh %312 : vector<8x128xf32>
    %314 = vector.extract_strided_slice %299 {offsets = [0, 384], sizes = [8, 128], strides = [1, 1]} : vector<8x512xf32> to vector<8x128xf32>
    %315 = arith.negf %314 : vector<8x128xf32>
    %316 = math.exp %315 : vector<8x128xf32>
    %cst_99 = arith.constant 1.000000e+00 : f32
    %317 = vector.broadcast %cst_99 : f32 to vector<8x128xf32>
    %318 = arith.addf %317, %316 : vector<8x128xf32>
    %319 = arith.divf %317, %318 : vector<8x128xf32>
    %320 = arith.mulf %311, %293 : vector<8x128xf32>
    %321 = arith.mulf %305, %313 : vector<8x128xf32>
    %322 = arith.addf %320, %321 : vector<8x128xf32>
    %323 = math.tanh %322 : vector<8x128xf32>
    %324 = arith.mulf %319, %323 : vector<8x128xf32>
    %325 = arith.index_cast %295 : i32 to index
    %c0_100 = arith.constant 0 : index
    %326 = vector.load %arg17[%325, %c0_100] : memref<64x128xf32, #tpu.memory_space<vmem>>, vector<8x128xf32>
    tpu.vector_store %arg17[%325, %c0_100], %324 {strides = array<i32>} : memref<64x128xf32, #tpu.memory_space<vmem>>, vector<8x128xf32>,
    %c1_i32_101 = arith.constant 1 : i32
    %c8_i32_102 = arith.constant 8 : i32
    %327 = arith.muli %c1_i32_101, %c8_i32_102 : i32
    %328 = tpu.assume_multiple %327, 8 : i32
    %329 = arith.index_cast %328 : i32 to index
    %c0_103 = arith.constant 0 : index
    %330 = vector.load %arg16[%329, %c0_103] : memref<64x512xf32, #tpu.memory_space<vmem>>, vector<8x512xf32>
    %cst_104 = arith.constant dense<0.000000e+00> : vector<8x512xf32>
    %331 = tpu.matmul %324, %1, %cst_104 {dimension_numbers = #tpu.dot_dimension_numbers<[1], [0], [0], [1], [0, 0, 1, 1], [], []>} : vector<8x128xf32>, vector<128x512xf32>, vector<8x512xf32> -> vector<8x512xf32>
    %332 = arith.addf %330, %331 : vector<8x512xf32>
    %333 = vector.extract_strided_slice %332 {offsets = [0, 0], sizes = [8, 128], strides = [1, 1]} : vector<8x512xf32> to vector<8x128xf32>
    %334 = arith.negf %333 : vector<8x128xf32>
    %335 = math.exp %334 : vector<8x128xf32>
    %cst_105 = arith.constant 1.000000e+00 : f32
    %336 = vector.broadcast %cst_105 : f32 to vector<8x128xf32>
    %337 = arith.addf %336, %335 : vector<8x128xf32>
    %338 = arith.divf %336, %337 : vector<8x128xf32>
    %339 = vector.extract_strided_slice %332 {offsets = [0, 128], sizes = [8, 128], strides = [1, 1]} : vector<8x512xf32> to vector<8x128xf32>
    %340 = arith.negf %339 : vector<8x128xf32>
    %341 = math.exp %340 : vector<8x128xf32>
    %cst_106 = arith.constant 1.000000e+00 : f32
    %342 = vector.broadcast %cst_106 : f32 to vector<8x128xf32>
    %343 = arith.addf %342, %341 : vector<8x128xf32>
    %344 = arith.divf %342, %343 : vector<8x128xf32>
    %345 = vector.extract_strided_slice %332 {offsets = [0, 256], sizes = [8, 128], strides = [1, 1]} : vector<8x512xf32> to vector<8x128xf32>
    %346 = math.tanh %345 : vector<8x128xf32>
    %347 = vector.extract_strided_slice %332 {offsets = [0, 384], sizes = [8, 128], strides = [1, 1]} : vector<8x512xf32> to vector<8x128xf32>
    %348 = arith.negf %347 : vector<8x128xf32>
    %349 = math.exp %348 : vector<8x128xf32>
    %cst_107 = arith.constant 1.000000e+00 : f32
    %350 = vector.broadcast %cst_107 : f32 to vector<8x128xf32>
    %351 = arith.addf %350, %349 : vector<8x128xf32>
    %352 = arith.divf %350, %351 : vector<8x128xf32>
    %353 = arith.mulf %344, %322 : vector<8x128xf32>
    %354 = arith.mulf %338, %346 : vector<8x128xf32>
    %355 = arith.addf %353, %354 : vector<8x128xf32>
    %356 = math.tanh %355 : vector<8x128xf32>
    %357 = arith.mulf %352, %356 : vector<8x128xf32>
    %358 = arith.index_cast %328 : i32 to index
    %c0_108 = arith.constant 0 : index
    %359 = vector.load %arg17[%358, %c0_108] : memref<64x128xf32, #tpu.memory_space<vmem>>, vector<8x128xf32>
    tpu.vector_store %arg17[%358, %c0_108], %357 {strides = array<i32>} : memref<64x128xf32, #tpu.memory_space<vmem>>, vector<8x128xf32>,
    %c2_i32_109 = arith.constant 2 : i32
    %c8_i32_110 = arith.constant 8 : i32
    %360 = arith.muli %c2_i32_109, %c8_i32_110 : i32
    %361 = tpu.assume_multiple %360, 8 : i32
    %362 = arith.index_cast %361 : i32 to index
    %c0_111 = arith.constant 0 : index
    %363 = vector.load %arg16[%362, %c0_111] : memref<64x512xf32, #tpu.memory_space<vmem>>, vector<8x512xf32>
    %cst_112 = arith.constant dense<0.000000e+00> : vector<8x512xf32>
    %364 = tpu.matmul %357, %1, %cst_112 {dimension_numbers = #tpu.dot_dimension_numbers<[1], [0], [0], [1], [0, 0, 1, 1], [], []>} : vector<8x128xf32>, vector<128x512xf32>, vector<8x512xf32> -> vector<8x512xf32>
    %365 = arith.addf %363, %364 : vector<8x512xf32>
    %366 = vector.extract_strided_slice %365 {offsets = [0, 0], sizes = [8, 128], strides = [1, 1]} : vector<8x512xf32> to vector<8x128xf32>
    %367 = arith.negf %366 : vector<8x128xf32>
    %368 = math.exp %367 : vector<8x128xf32>
    %cst_113 = arith.constant 1.000000e+00 : f32
    %369 = vector.broadcast %cst_113 : f32 to vector<8x128xf32>
    %370 = arith.addf %369, %368 : vector<8x128xf32>
    %371 = arith.divf %369, %370 : vector<8x128xf32>
    %372 = vector.extract_strided_slice %365 {offsets = [0, 128], sizes = [8, 128], strides = [1, 1]} : vector<8x512xf32> to vector<8x128xf32>
    %373 = arith.negf %372 : vector<8x128xf32>
    %374 = math.exp %373 : vector<8x128xf32>
    %cst_114 = arith.constant 1.000000e+00 : f32
    %375 = vector.broadcast %cst_114 : f32 to vector<8x128xf32>
    %376 = arith.addf %375, %374 : vector<8x128xf32>
    %377 = arith.divf %375, %376 : vector<8x128xf32>
    %378 = vector.extract_strided_slice %365 {offsets = [0, 256], sizes = [8, 128], strides = [1, 1]} : vector<8x512xf32> to vector<8x128xf32>
    %379 = math.tanh %378 : vector<8x128xf32>
    %380 = vector.extract_strided_slice %365 {offsets = [0, 384], sizes = [8, 128], strides = [1, 1]} : vector<8x512xf32> to vector<8x128xf32>
    %381 = arith.negf %380 : vector<8x128xf32>
    %382 = math.exp %381 : vector<8x128xf32>
    %cst_115 = arith.constant 1.000000e+00 : f32
    %383 = vector.broadcast %cst_115 : f32 to vector<8x128xf32>
    %384 = arith.addf %383, %382 : vector<8x128xf32>
    %385 = arith.divf %383, %384 : vector<8x128xf32>
    %386 = arith.mulf %377, %355 : vector<8x128xf32>
    %387 = arith.mulf %371, %379 : vector<8x128xf32>
    %388 = arith.addf %386, %387 : vector<8x128xf32>
    %389 = math.tanh %388 : vector<8x128xf32>
    %390 = arith.mulf %385, %389 : vector<8x128xf32>
    %391 = arith.index_cast %361 : i32 to index
    %c0_116 = arith.constant 0 : index
    %392 = vector.load %arg17[%391, %c0_116] : memref<64x128xf32, #tpu.memory_space<vmem>>, vector<8x128xf32>
    tpu.vector_store %arg17[%391, %c0_116], %390 {strides = array<i32>} : memref<64x128xf32, #tpu.memory_space<vmem>>, vector<8x128xf32>,
    %c3_i32_117 = arith.constant 3 : i32
    %c8_i32_118 = arith.constant 8 : i32
    %393 = arith.muli %c3_i32_117, %c8_i32_118 : i32
    %394 = tpu.assume_multiple %393, 8 : i32
    %395 = arith.index_cast %394 : i32 to index
    %c0_119 = arith.constant 0 : index
    %396 = vector.load %arg16[%395, %c0_119] : memref<64x512xf32, #tpu.memory_space<vmem>>, vector<8x512xf32>
    %cst_120 = arith.constant dense<0.000000e+00> : vector<8x512xf32>
    %397 = tpu.matmul %390, %1, %cst_120 {dimension_numbers = #tpu.dot_dimension_numbers<[1], [0], [0], [1], [0, 0, 1, 1], [], []>} : vector<8x128xf32>, vector<128x512xf32>, vector<8x512xf32> -> vector<8x512xf32>
    %398 = arith.addf %396, %397 : vector<8x512xf32>
    %399 = vector.extract_strided_slice %398 {offsets = [0, 0], sizes = [8, 128], strides = [1, 1]} : vector<8x512xf32> to vector<8x128xf32>
    %400 = arith.negf %399 : vector<8x128xf32>
    %401 = math.exp %400 : vector<8x128xf32>
    %cst_121 = arith.constant 1.000000e+00 : f32
    %402 = vector.broadcast %cst_121 : f32 to vector<8x128xf32>
    %403 = arith.addf %402, %401 : vector<8x128xf32>
    %404 = arith.divf %402, %403 : vector<8x128xf32>
    %405 = vector.extract_strided_slice %398 {offsets = [0, 128], sizes = [8, 128], strides = [1, 1]} : vector<8x512xf32> to vector<8x128xf32>
    %406 = arith.negf %405 : vector<8x128xf32>
    %407 = math.exp %406 : vector<8x128xf32>
    %cst_122 = arith.constant 1.000000e+00 : f32
    %408 = vector.broadcast %cst_122 : f32 to vector<8x128xf32>
    %409 = arith.addf %408, %407 : vector<8x128xf32>
    %410 = arith.divf %408, %409 : vector<8x128xf32>
    %411 = vector.extract_strided_slice %398 {offsets = [0, 256], sizes = [8, 128], strides = [1, 1]} : vector<8x512xf32> to vector<8x128xf32>
    %412 = math.tanh %411 : vector<8x128xf32>
    %413 = vector.extract_strided_slice %398 {offsets = [0, 384], sizes = [8, 128], strides = [1, 1]} : vector<8x512xf32> to vector<8x128xf32>
    %414 = arith.negf %413 : vector<8x128xf32>
    %415 = math.exp %414 : vector<8x128xf32>
    %cst_123 = arith.constant 1.000000e+00 : f32
    %416 = vector.broadcast %cst_123 : f32 to vector<8x128xf32>
    %417 = arith.addf %416, %415 : vector<8x128xf32>
    %418 = arith.divf %416, %417 : vector<8x128xf32>
    %419 = arith.mulf %410, %388 : vector<8x128xf32>
    %420 = arith.mulf %404, %412 : vector<8x128xf32>
    %421 = arith.addf %419, %420 : vector<8x128xf32>
    %422 = math.tanh %421 : vector<8x128xf32>
    %423 = arith.mulf %418, %422 : vector<8x128xf32>
    %424 = arith.index_cast %394 : i32 to index
    %c0_124 = arith.constant 0 : index
    %425 = vector.load %arg17[%424, %c0_124] : memref<64x128xf32, #tpu.memory_space<vmem>>, vector<8x128xf32>
    tpu.vector_store %arg17[%424, %c0_124], %423 {strides = array<i32>} : memref<64x128xf32, #tpu.memory_space<vmem>>, vector<8x128xf32>,
    %c4_i32_125 = arith.constant 4 : i32
    %c8_i32_126 = arith.constant 8 : i32
    %426 = arith.muli %c4_i32_125, %c8_i32_126 : i32
    %427 = tpu.assume_multiple %426, 8 : i32
    %428 = arith.index_cast %427 : i32 to index
    %c0_127 = arith.constant 0 : index
    %429 = vector.load %arg16[%428, %c0_127] : memref<64x512xf32, #tpu.memory_space<vmem>>, vector<8x512xf32>
    %cst_128 = arith.constant dense<0.000000e+00> : vector<8x512xf32>
    %430 = tpu.matmul %423, %1, %cst_128 {dimension_numbers = #tpu.dot_dimension_numbers<[1], [0], [0], [1], [0, 0, 1, 1], [], []>} : vector<8x128xf32>, vector<128x512xf32>, vector<8x512xf32> -> vector<8x512xf32>
    %431 = arith.addf %429, %430 : vector<8x512xf32>
    %432 = vector.extract_strided_slice %431 {offsets = [0, 0], sizes = [8, 128], strides = [1, 1]} : vector<8x512xf32> to vector<8x128xf32>
    %433 = arith.negf %432 : vector<8x128xf32>
    %434 = math.exp %433 : vector<8x128xf32>
    %cst_129 = arith.constant 1.000000e+00 : f32
    %435 = vector.broadcast %cst_129 : f32 to vector<8x128xf32>
    %436 = arith.addf %435, %434 : vector<8x128xf32>
    %437 = arith.divf %435, %436 : vector<8x128xf32>
    %438 = vector.extract_strided_slice %431 {offsets = [0, 128], sizes = [8, 128], strides = [1, 1]} : vector<8x512xf32> to vector<8x128xf32>
    %439 = arith.negf %438 : vector<8x128xf32>
    %440 = math.exp %439 : vector<8x128xf32>
    %cst_130 = arith.constant 1.000000e+00 : f32
    %441 = vector.broadcast %cst_130 : f32 to vector<8x128xf32>
    %442 = arith.addf %441, %440 : vector<8x128xf32>
    %443 = arith.divf %441, %442 : vector<8x128xf32>
    %444 = vector.extract_strided_slice %431 {offsets = [0, 256], sizes = [8, 128], strides = [1, 1]} : vector<8x512xf32> to vector<8x128xf32>
    %445 = math.tanh %444 : vector<8x128xf32>
    %446 = vector.extract_strided_slice %431 {offsets = [0, 384], sizes = [8, 128], strides = [1, 1]} : vector<8x512xf32> to vector<8x128xf32>
    %447 = arith.negf %446 : vector<8x128xf32>
    %448 = math.exp %447 : vector<8x128xf32>
    %cst_131 = arith.constant 1.000000e+00 : f32
    %449 = vector.broadcast %cst_131 : f32 to vector<8x128xf32>
    %450 = arith.addf %449, %448 : vector<8x128xf32>
    %451 = arith.divf %449, %450 : vector<8x128xf32>
    %452 = arith.mulf %443, %421 : vector<8x128xf32>
    %453 = arith.mulf %437, %445 : vector<8x128xf32>
    %454 = arith.addf %452, %453 : vector<8x128xf32>
    %455 = math.tanh %454 : vector<8x128xf32>
    %456 = arith.mulf %451, %455 : vector<8x128xf32>
    %457 = arith.index_cast %427 : i32 to index
    %c0_132 = arith.constant 0 : index
    %458 = vector.load %arg17[%457, %c0_132] : memref<64x128xf32, #tpu.memory_space<vmem>>, vector<8x128xf32>
    tpu.vector_store %arg17[%457, %c0_132], %456 {strides = array<i32>} : memref<64x128xf32, #tpu.memory_space<vmem>>, vector<8x128xf32>,
    %c5_i32_133 = arith.constant 5 : i32
    %c8_i32_134 = arith.constant 8 : i32
    %459 = arith.muli %c5_i32_133, %c8_i32_134 : i32
    %460 = tpu.assume_multiple %459, 8 : i32
    %461 = arith.index_cast %460 : i32 to index
    %c0_135 = arith.constant 0 : index
    %462 = vector.load %arg16[%461, %c0_135] : memref<64x512xf32, #tpu.memory_space<vmem>>, vector<8x512xf32>
    %cst_136 = arith.constant dense<0.000000e+00> : vector<8x512xf32>
    %463 = tpu.matmul %456, %1, %cst_136 {dimension_numbers = #tpu.dot_dimension_numbers<[1], [0], [0], [1], [0, 0, 1, 1], [], []>} : vector<8x128xf32>, vector<128x512xf32>, vector<8x512xf32> -> vector<8x512xf32>
    %464 = arith.addf %462, %463 : vector<8x512xf32>
    %465 = vector.extract_strided_slice %464 {offsets = [0, 0], sizes = [8, 128], strides = [1, 1]} : vector<8x512xf32> to vector<8x128xf32>
    %466 = arith.negf %465 : vector<8x128xf32>
    %467 = math.exp %466 : vector<8x128xf32>
    %cst_137 = arith.constant 1.000000e+00 : f32
    %468 = vector.broadcast %cst_137 : f32 to vector<8x128xf32>
    %469 = arith.addf %468, %467 : vector<8x128xf32>
    %470 = arith.divf %468, %469 : vector<8x128xf32>
    %471 = vector.extract_strided_slice %464 {offsets = [0, 128], sizes = [8, 128], strides = [1, 1]} : vector<8x512xf32> to vector<8x128xf32>
    %472 = arith.negf %471 : vector<8x128xf32>
    %473 = math.exp %472 : vector<8x128xf32>
    %cst_138 = arith.constant 1.000000e+00 : f32
    %474 = vector.broadcast %cst_138 : f32 to vector<8x128xf32>
    %475 = arith.addf %474, %473 : vector<8x128xf32>
    %476 = arith.divf %474, %475 : vector<8x128xf32>
    %477 = vector.extract_strided_slice %464 {offsets = [0, 256], sizes = [8, 128], strides = [1, 1]} : vector<8x512xf32> to vector<8x128xf32>
    %478 = math.tanh %477 : vector<8x128xf32>
    %479 = vector.extract_strided_slice %464 {offsets = [0, 384], sizes = [8, 128], strides = [1, 1]} : vector<8x512xf32> to vector<8x128xf32>
    %480 = arith.negf %479 : vector<8x128xf32>
    %481 = math.exp %480 : vector<8x128xf32>
    %cst_139 = arith.constant 1.000000e+00 : f32
    %482 = vector.broadcast %cst_139 : f32 to vector<8x128xf32>
    %483 = arith.addf %482, %481 : vector<8x128xf32>
    %484 = arith.divf %482, %483 : vector<8x128xf32>
    %485 = arith.mulf %476, %454 : vector<8x128xf32>
    %486 = arith.mulf %470, %478 : vector<8x128xf32>
    %487 = arith.addf %485, %486 : vector<8x128xf32>
    %488 = math.tanh %487 : vector<8x128xf32>
    %489 = arith.mulf %484, %488 : vector<8x128xf32>
    %490 = arith.index_cast %460 : i32 to index
    %c0_140 = arith.constant 0 : index
    %491 = vector.load %arg17[%490, %c0_140] : memref<64x128xf32, #tpu.memory_space<vmem>>, vector<8x128xf32>
    tpu.vector_store %arg17[%490, %c0_140], %489 {strides = array<i32>} : memref<64x128xf32, #tpu.memory_space<vmem>>, vector<8x128xf32>,
    %c6_i32_141 = arith.constant 6 : i32
    %c8_i32_142 = arith.constant 8 : i32
    %492 = arith.muli %c6_i32_141, %c8_i32_142 : i32
    %493 = tpu.assume_multiple %492, 8 : i32
    %494 = arith.index_cast %493 : i32 to index
    %c0_143 = arith.constant 0 : index
    %495 = vector.load %arg16[%494, %c0_143] : memref<64x512xf32, #tpu.memory_space<vmem>>, vector<8x512xf32>
    %cst_144 = arith.constant dense<0.000000e+00> : vector<8x512xf32>
    %496 = tpu.matmul %489, %1, %cst_144 {dimension_numbers = #tpu.dot_dimension_numbers<[1], [0], [0], [1], [0, 0, 1, 1], [], []>} : vector<8x128xf32>, vector<128x512xf32>, vector<8x512xf32> -> vector<8x512xf32>
    %497 = arith.addf %495, %496 : vector<8x512xf32>
    %498 = vector.extract_strided_slice %497 {offsets = [0, 0], sizes = [8, 128], strides = [1, 1]} : vector<8x512xf32> to vector<8x128xf32>
    %499 = arith.negf %498 : vector<8x128xf32>
    %500 = math.exp %499 : vector<8x128xf32>
    %cst_145 = arith.constant 1.000000e+00 : f32
    %501 = vector.broadcast %cst_145 : f32 to vector<8x128xf32>
    %502 = arith.addf %501, %500 : vector<8x128xf32>
    %503 = arith.divf %501, %502 : vector<8x128xf32>
    %504 = vector.extract_strided_slice %497 {offsets = [0, 128], sizes = [8, 128], strides = [1, 1]} : vector<8x512xf32> to vector<8x128xf32>
    %505 = arith.negf %504 : vector<8x128xf32>
    %506 = math.exp %505 : vector<8x128xf32>
    %cst_146 = arith.constant 1.000000e+00 : f32
    %507 = vector.broadcast %cst_146 : f32 to vector<8x128xf32>
    %508 = arith.addf %507, %506 : vector<8x128xf32>
    %509 = arith.divf %507, %508 : vector<8x128xf32>
    %510 = vector.extract_strided_slice %497 {offsets = [0, 256], sizes = [8, 128], strides = [1, 1]} : vector<8x512xf32> to vector<8x128xf32>
    %511 = math.tanh %510 : vector<8x128xf32>
    %512 = vector.extract_strided_slice %497 {offsets = [0, 384], sizes = [8, 128], strides = [1, 1]} : vector<8x512xf32> to vector<8x128xf32>
    %513 = arith.negf %512 : vector<8x128xf32>
    %514 = math.exp %513 : vector<8x128xf32>
    %cst_147 = arith.constant 1.000000e+00 : f32
    %515 = vector.broadcast %cst_147 : f32 to vector<8x128xf32>
    %516 = arith.addf %515, %514 : vector<8x128xf32>
    %517 = arith.divf %515, %516 : vector<8x128xf32>
    %518 = arith.mulf %509, %487 : vector<8x128xf32>
    %519 = arith.mulf %503, %511 : vector<8x128xf32>
    %520 = arith.addf %518, %519 : vector<8x128xf32>
    %521 = math.tanh %520 : vector<8x128xf32>
    %522 = arith.mulf %517, %521 : vector<8x128xf32>
    %523 = arith.index_cast %493 : i32 to index
    %c0_148 = arith.constant 0 : index
    %524 = vector.load %arg17[%523, %c0_148] : memref<64x128xf32, #tpu.memory_space<vmem>>, vector<8x128xf32>
    tpu.vector_store %arg17[%523, %c0_148], %522 {strides = array<i32>} : memref<64x128xf32, #tpu.memory_space<vmem>>, vector<8x128xf32>,
    %c7_i32_149 = arith.constant 7 : i32
    %c8_i32_150 = arith.constant 8 : i32
    %525 = arith.muli %c7_i32_149, %c8_i32_150 : i32
    %526 = tpu.assume_multiple %525, 8 : i32
    %527 = arith.index_cast %526 : i32 to index
    %c0_151 = arith.constant 0 : index
    %528 = vector.load %arg16[%527, %c0_151] : memref<64x512xf32, #tpu.memory_space<vmem>>, vector<8x512xf32>
    %cst_152 = arith.constant dense<0.000000e+00> : vector<8x512xf32>
    %529 = tpu.matmul %522, %1, %cst_152 {dimension_numbers = #tpu.dot_dimension_numbers<[1], [0], [0], [1], [0, 0, 1, 1], [], []>} : vector<8x128xf32>, vector<128x512xf32>, vector<8x512xf32> -> vector<8x512xf32>
    %530 = arith.addf %528, %529 : vector<8x512xf32>
    %531 = vector.extract_strided_slice %530 {offsets = [0, 0], sizes = [8, 128], strides = [1, 1]} : vector<8x512xf32> to vector<8x128xf32>
    %532 = arith.negf %531 : vector<8x128xf32>
    %533 = math.exp %532 : vector<8x128xf32>
    %cst_153 = arith.constant 1.000000e+00 : f32
    %534 = vector.broadcast %cst_153 : f32 to vector<8x128xf32>
    %535 = arith.addf %534, %533 : vector<8x128xf32>
    %536 = arith.divf %534, %535 : vector<8x128xf32>
    %537 = vector.extract_strided_slice %530 {offsets = [0, 128], sizes = [8, 128], strides = [1, 1]} : vector<8x512xf32> to vector<8x128xf32>
    %538 = arith.negf %537 : vector<8x128xf32>
    %539 = math.exp %538 : vector<8x128xf32>
    %cst_154 = arith.constant 1.000000e+00 : f32
    %540 = vector.broadcast %cst_154 : f32 to vector<8x128xf32>
    %541 = arith.addf %540, %539 : vector<8x128xf32>
    %542 = arith.divf %540, %541 : vector<8x128xf32>
    %543 = vector.extract_strided_slice %530 {offsets = [0, 256], sizes = [8, 128], strides = [1, 1]} : vector<8x512xf32> to vector<8x128xf32>
    %544 = math.tanh %543 : vector<8x128xf32>
    %545 = vector.extract_strided_slice %530 {offsets = [0, 384], sizes = [8, 128], strides = [1, 1]} : vector<8x512xf32> to vector<8x128xf32>
    %546 = arith.negf %545 : vector<8x128xf32>
    %547 = math.exp %546 : vector<8x128xf32>
    %cst_155 = arith.constant 1.000000e+00 : f32
    %548 = vector.broadcast %cst_155 : f32 to vector<8x128xf32>
    %549 = arith.addf %548, %547 : vector<8x128xf32>
    %550 = arith.divf %548, %549 : vector<8x128xf32>
    %551 = arith.mulf %542, %520 : vector<8x128xf32>
    %552 = arith.mulf %536, %544 : vector<8x128xf32>
    %553 = arith.addf %551, %552 : vector<8x128xf32>
    %554 = math.tanh %553 : vector<8x128xf32>
    %555 = arith.mulf %550, %554 : vector<8x128xf32>
    %556 = arith.index_cast %526 : i32 to index
    %c0_156 = arith.constant 0 : index
    %557 = vector.load %arg17[%556, %c0_156] : memref<64x128xf32, #tpu.memory_space<vmem>>, vector<8x128xf32>
    tpu.vector_store %arg17[%556, %c0_156], %555 {strides = array<i32>} : memref<64x128xf32, #tpu.memory_space<vmem>>, vector<8x128xf32>,
    %c8_i32_157 = arith.constant 8 : i32
    %c1_158 = arith.constant 1 : index
    %c0_159 = arith.constant 0 : index
    %c0_160 = arith.constant 0 : index
    %558 = vector.load %arg14[%c1_158, %c0_159, %c0_160] : memref<2x8x128xf32, #tpu.memory_space<vmem>>, vector<1x8x128xf32>
    %559 = vector.shape_cast %558 : vector<1x8x128xf32> to vector<8x128xf32>
    %560 = vector.shape_cast %555 : vector<8x128xf32> to vector<1x8x128xf32>
    tpu.vector_store %arg14[%c1_158, %c0_159, %c0_160], %560 {strides = array<i32>} : memref<2x8x128xf32, #tpu.memory_space<vmem>>, vector<1x8x128xf32>,
    %c1_161 = arith.constant 1 : index
    %c0_162 = arith.constant 0 : index
    %c0_163 = arith.constant 0 : index
    %561 = vector.load %arg15[%c1_161, %c0_162, %c0_163] : memref<2x8x128xf32, #tpu.memory_space<vmem>>, vector<1x8x128xf32>
    %562 = vector.shape_cast %561 : vector<1x8x128xf32> to vector<8x128xf32>
    %563 = vector.shape_cast %553 : vector<8x128xf32> to vector<1x8x128xf32>
    tpu.vector_store %arg15[%c1_161, %c0_162, %c0_163], %563 {strides = array<i32>} : memref<2x8x128xf32, #tpu.memory_space<vmem>>, vector<1x8x128xf32>,
    %c0_164 = arith.constant 0 : index
    %c0_165 = arith.constant 0 : index
    %564 = vector.load %arg17[%c0_164, %c0_165] : memref<64x128xf32, #tpu.memory_space<vmem>>, vector<64x128xf32>
    %c0_166 = arith.constant 0 : index
    %c0_167 = arith.constant 0 : index
    %565 = vector.load %arg9[%c0_166, %c0_167] : memref<128x128xf32, #tpu.memory_space<vmem>>, vector<128x128xf32>
    %cst_168 = arith.constant dense<0.000000e+00> : vector<64x128xf32>
    %566 = tpu.matmul %564, %565, %cst_168 {dimension_numbers = #tpu.dot_dimension_numbers<[1], [0], [0], [1], [0, 0, 1, 1], [], []>} : vector<64x128xf32>, vector<128x128xf32>, vector<64x128xf32> -> vector<64x128xf32>
    %c0_169 = arith.constant 0 : index
    %c0_170 = arith.constant 0 : index
    %567 = vector.load %arg10[%c0_169, %c0_170] : memref<1x128xf32, #tpu.memory_space<vmem>>, vector<1x128xf32>
    %568 = vector.broadcast %567 : vector<1x128xf32> to vector<64x128xf32>
    %569 = arith.addf %566, %568 : vector<64x128xf32>
    %c0_171 = arith.constant 0 : index
    %c0_172 = arith.constant 0 : index
    %570 = vector.load %arg12[%c0_171, %c0_172] : memref<1x128xf32, #tpu.memory_space<vmem>>, vector<1x128xf32>
    %c0_173 = arith.constant 0 : index
    %c0_174 = arith.constant 0 : index
    %571 = vector.load %arg11[%c0_173, %c0_174] : memref<1x128xf32, #tpu.memory_space<vmem>>, vector<1x128xf32>
    %572 = arith.subf %570, %571 : vector<1x128xf32>
    %cst_175 = arith.constant 5.000000e-01 : f32
    %573 = vector.broadcast %cst_175 : f32 to vector<1x128xf32>
    %574 = arith.mulf %572, %573 : vector<1x128xf32>
    %c0_176 = arith.constant 0 : index
    %c0_177 = arith.constant 0 : index
    %575 = vector.load %arg11[%c0_176, %c0_177] : memref<1x128xf32, #tpu.memory_space<vmem>>, vector<1x128xf32>
    %576 = arith.addf %575, %574 : vector<1x128xf32>
    %577 = math.tanh %569 : vector<64x128xf32>
    %578 = vector.broadcast %574 : vector<1x128xf32> to vector<64x128xf32>
    %579 = arith.mulf %578, %577 : vector<64x128xf32>
    %580 = vector.broadcast %576 : vector<1x128xf32> to vector<64x128xf32>
    %581 = arith.addf %580, %579 : vector<64x128xf32>
    %c0_178 = arith.constant 0 : index
    %c0_179 = arith.constant 0 : index
    %582 = vector.load %arg13[%c0_178, %c0_179] : memref<64x128xf32, #tpu.memory_space<vmem>>, vector<64x128xf32>
    tpu.vector_store %arg13[%c0_178, %c0_179], %581 {strides = array<i32>} : memref<64x128xf32, #tpu.memory_space<vmem>>, vector<64x128xf32>,
    return
  }
}

</mosaic_0001>

<llo_original>
// kernel: rnn_forward.1
$region0: #{rnn_forward.1}
  #allocation0 [shape = 'u32[]', space=smem, size = 0x4, offset = 0x4, fixed_abs, tag = 'smem constant byte address 0x4 - core index']
  #allocation1 [shape = 'u32[144,128]{1,0:T(1,128)}', space=vmem, size = 0x12000, scoped, tag = 'internal scratch']
  #allocation2 [shape = 'f32[64,512]{1,0:T(8,128)}', space=vmem, size = 0x20000, scoped, tag = 'scratch operand']
  #allocation3 [shape = 'f32[64,128]{1,0:T(8,128)}', space=vmem, size = 0x8000, scoped, tag = 'scratch operand']
  %s0 = inlined_call_operand.vmem [shape: f32[64,12], index: 0, kind: input, shape index: {}]
  %s1 = inlined_call_operand.vmem [shape: f32[2,8,128], index: 1, kind: input, shape index: {}]
  %s2 = inlined_call_operand.vmem [shape: f32[2,8,128], index: 2, kind: input, shape index: {}]
  %s3 = inlined_call_operand.vmem [shape: f32[12,512], index: 3, kind: input, shape index: {}]
  %s4 = inlined_call_operand.vmem [shape: f32[128,512], index: 4, kind: input, shape index: {}]
  %s5 = inlined_call_operand.vmem [shape: f32[1,512], index: 5, kind: input, shape index: {}]
  %s6 = inlined_call_operand.vmem [shape: f32[128,512], index: 6, kind: input, shape index: {}]
  %s7 = inlined_call_operand.vmem [shape: f32[128,512], index: 7, kind: input, shape index: {}]
  %s8 = inlined_call_operand.vmem [shape: f32[1,512], index: 8, kind: input, shape index: {}]
  %s9 = inlined_call_operand.vmem [shape: f32[128,128], index: 9, kind: input, shape index: {}]
  %s10 = inlined_call_operand.vmem [shape: f32[1,128], index: 10, kind: input, shape index: {}]
  %s11 = inlined_call_operand.vmem [shape: f32[1,128], index: 11, kind: input, shape index: {}]
  %s12 = inlined_call_operand.vmem [shape: f32[1,128], index: 12, kind: input, shape index: {}]
  %s13 = inlined_call_operand.vmem [shape: f32[64,128], index: 13, kind: output, shape index: {0}]
  %s14 = inlined_call_operand.vmem [shape: f32[2,8,128], index: 14, kind: output, shape index: {1}]
  %s15 = inlined_call_operand.vmem [shape: f32[2,8,128], index: 15, kind: output, shape index: {2}]
  %16 = xla_tuple %s13, %s14, %s15
  %s17 = sld [smem:[#allocation0]]
  $region78: #{rnn_forward.1} parent=0
    _
  %s19 = ssub.s32 1, %s17
  %s20 = scalar_select 0, %s19, %s17
  // Predicated region
  $region2: #{rnn_forward.1} parent=0 // pred_check
    _
  $region3: #{rnn_forward.1} parent=0 // pred_check_branch
    %22 = sbr.rel (0) target = $region5
  $region4: #{rnn_forward.1} parent=0 // pred_region
    _
  $region5: #{rnn_forward.1} parent=0 // pred_fallthru
    _
  // Predicated region
  $region6: #{rnn_forward.1} parent=0 // pred_check
    _
  $region7: #{rnn_forward.1} parent=0 // pred_check_branch
    %24 = sbr.rel (0) target = $region9
  $region8: #{rnn_forward.1} parent=0 // pred_region
    _
  $region9: #{rnn_forward.1} parent=0 // pred_fallthru
    _
  // Predicated region
  $region10: #{rnn_forward.1} parent=0 // pred_check
    _
  $region11: #{rnn_forward.1} parent=0 // pred_check_branch
    %26 = sbr.rel (0) target = $region13
  $region12: #{rnn_forward.1} parent=0 // pred_region
    _
  $region13: #{rnn_forward.1} parent=0 // pred_fallthru
    _
  // Predicated region
  $region14: #{rnn_forward.1} parent=0 // pred_check
    _
  $region15: #{rnn_forward.1} parent=0 // pred_check_branch
    %28 = sbr.rel (0) target = $region17
  $region16: #{rnn_forward.1} parent=0 // pred_region
    _
  $region17: #{rnn_forward.1} parent=0 // pred_fallthru
    _
  // Predicated region
  $region18: #{rnn_forward.1} parent=0 // pred_check
    _
  $region19: #{rnn_forward.1} parent=0 // pred_check_branch
    %30 = sbr.rel (0) target = $region21
  $region20: #{rnn_forward.1} parent=0 // pred_region
    _
  $region21: #{rnn_forward.1} parent=0 // pred_fallthru
    _
  // Predicated region
  $region22: #{rnn_forward.1} parent=0 // pred_check
    _
  $region23: #{rnn_forward.1} parent=0 // pred_check_branch
    %32 = sbr.rel (0) target = $region25
  $region24: #{rnn_forward.1} parent=0 // pred_region
    _
  $region25: #{rnn_forward.1} parent=0 // pred_fallthru
    _
  // Predicated region
  $region26: #{rnn_forward.1} parent=0 // pred_check
    _
  $region27: #{rnn_forward.1} parent=0 // pred_check_branch
    %34 = sbr.rel (0) target = $region29
  $region28: #{rnn_forward.1} parent=0 // pred_region
    _
  $region29: #{rnn_forward.1} parent=0 // pred_fallthru
    _
  // Predicated region
  $region30: #{rnn_forward.1} parent=0 // pred_check
    _
  $region31: #{rnn_forward.1} parent=0 // pred_check_branch
    %36 = sbr.rel (0) target = $region33
  $region32: #{rnn_forward.1} parent=0 // pred_region
    _
  $region33: #{rnn_forward.1} parent=0 // pred_fallthru
    _
  // Predicated region
  $region34: #{rnn_forward.1} parent=0 // pred_check
    _
  $region35: #{rnn_forward.1} parent=0 // pred_check_branch
    %38 = sbr.rel (0) target = $region37
  $region36: #{rnn_forward.1} parent=0 // pred_region
    _
  $region37: #{rnn_forward.1} parent=0 // pred_fallthru
    _
  // Predicated region
  $region38: #{rnn_forward.1} parent=0 // pred_check
    _
  $region39: #{rnn_forward.1} parent=0 // pred_check_branch
    %40 = sbr.rel (0) target = $region41
  $region40: #{rnn_forward.1} parent=0 // pred_region
    _
  $region41: #{rnn_forward.1} parent=0 // pred_fallthru
    _
  // Predicated region
  $region42: #{rnn_forward.1} parent=0 // pred_check
    _
  $region43: #{rnn_forward.1} parent=0 // pred_check_branch
    %42 = sbr.rel (0) target = $region45
  $region44: #{rnn_forward.1} parent=0 // pred_region
    _
  $region45: #{rnn_forward.1} parent=0 // pred_fallthru
    _
  // Predicated region
  $region46: #{rnn_forward.1} parent=0 // pred_check
    _
  $region47: #{rnn_forward.1} parent=0 // pred_check_branch
    %44 = sbr.rel (0) target = $region49
  $region48: #{rnn_forward.1} parent=0 // pred_region
    _
  $region49: #{rnn_forward.1} parent=0 // pred_fallthru
    _
  // Predicated region
  $region50: #{rnn_forward.1} parent=0 // pred_check
    _
  $region51: #{rnn_forward.1} parent=0 // pred_check_branch
    %46 = sbr.rel (0) target = $region53
  $region52: #{rnn_forward.1} parent=0 // pred_region
    _
  $region53: #{rnn_forward.1} parent=0 // pred_fallthru
    _
  %v47 = vld [vmem:[%s4] sm:$0xff]
  %v48 = vld [vmem:[%s4 + $0x8] sm:$0xff]
  %v49 = vld [vmem:[%s4 + $0x10] sm:$0xff]
  %v50 = vld [vmem:[%s4 + $0x18] sm:$0xff]
  %v51 = vld [vmem:[%s4 + $0x20] sm:$0xff]
  %v52 = vld [vmem:[%s4 + $0x28] sm:$0xff]
  %v53 = vld [vmem:[%s4 + $0x30] sm:$0xff]
  %v54 = vld [vmem:[%s4 + $0x38] sm:$0xff]
  %v55 = vld [vmem:[%s4 + $0x40] sm:$0xff]
  %v56 = vld [vmem:[%s4 + $0x48] sm:$0xff]
  %v57 = vld [vmem:[%s4 + $0x50] sm:$0xff]
  %v58 = vld [vmem:[%s4 + $0x58] sm:$0xff]
  %v59 = vld [vmem:[%s4 + $0x60] sm:$0xff]
  %v60 = vld [vmem:[%s4 + $0x68] sm:$0xff]
  %v61 = vld [vmem:[%s4 + $0x70] sm:$0xff]
  %v62 = vld [vmem:[%s4 + $0x78] sm:$0xff]
  %v63 = vld [vmem:[%s4 + $0x80] sm:$0xff]
  %v64 = vld [vmem:[%s4 + $0x88] sm:$0xff]
  %v65 = vld [vmem:[%s4 + $0x90] sm:$0xff]
  %v66 = vld [vmem:[%s4 + $0x98] sm:$0xff]
  %v67 = vld [vmem:[%s4 + $0xa0] sm:$0xff]
  %v68 = vld [vmem:[%s4 + $0xa8] sm:$0xff]
  %v69 = vld [vmem:[%s4 + $0xb0] sm:$0xff]
  %v70 = vld [vmem:[%s4 + $0xb8] sm:$0xff]
  %v71 = vld [vmem:[%s4 + $0xc0] sm:$0xff]
  %v72 = vld [vmem:[%s4 + $0xc8] sm:$0xff]
  %v73 = vld [vmem:[%s4 + $0xd0] sm:$0xff]
  %v74 = vld [vmem:[%s4 + $0xd8] sm:$0xff]
  %v75 = vld [vmem:[%s4 + $0xe0] sm:$0xff]
  %v76 = vld [vmem:[%s4 + $0xe8] sm:$0xff]
  %v77 = vld [vmem:[%s4 + $0xf0] sm:$0xff]
  %v78 = vld [vmem:[%s4 + $0xf8] sm:$0xff]
  %v79 = vld [vmem:[%s4 + $0x100] sm:$0xff]
  %v80 = vld [vmem:[%s4 + $0x108] sm:$0xff]
  %v81 = vld [vmem:[%s4 + $0x110] sm:$0xff]
  %v82 = vld [vmem:[%s4 + $0x118] sm:$0xff]
  %v83 = vld [vmem:[%s4 + $0x120] sm:$0xff]
  %v84 = vld [vmem:[%s4 + $0x128] sm:$0xff]
  %v85 = vld [vmem:[%s4 + $0x130] sm:$0xff]
  %v86 = vld [vmem:[%s4 + $0x138] sm:$0xff]
  %v87 = vld [vmem:[%s4 + $0x140] sm:$0xff]
  %v88 = vld [vmem:[%s4 + $0x148] sm:$0xff]
  %v89 = vld [vmem:[%s4 + $0x150] sm:$0xff]
  %v90 = vld [vmem:[%s4 + $0x158] sm:$0xff]
  %v91 = vld [vmem:[%s4 + $0x160] sm:$0xff]
  %v92 = vld [vmem:[%s4 + $0x168] sm:$0xff]
  %v93 = vld [vmem:[%s4 + $0x170] sm:$0xff]
  %v94 = vld [vmem:[%s4 + $0x178] sm:$0xff]
  %v95 = vld [vmem:[%s4 + $0x180] sm:$0xff]
  %v96 = vld [vmem:[%s4 + $0x188] sm:$0xff]
  %v97 = vld [vmem:[%s4 + $0x190] sm:$0xff]
  %v98 = vld [vmem:[%s4 + $0x198] sm:$0xff]
  %v99 = vld [vmem:[%s4 + $0x1a0] sm:$0xff]
  %v100 = vld [vmem:[%s4 + $0x1a8] sm:$0xff]
  %v101 = vld [vmem:[%s4 + $0x1b0] sm:$0xff]
  %v102 = vld [vmem:[%s4 + $0x1b8] sm:$0xff]
  %v103 = vld [vmem:[%s4 + $0x1c0] sm:$0xff]
  %v104 = vld [vmem:[%s4 + $0x1c8] sm:$0xff]
  %v105 = vld [vmem:[%s4 + $0x1d0] sm:$0xff]
  %v106 = vld [vmem:[%s4 + $0x1d8] sm:$0xff]
  %v107 = vld [vmem:[%s4 + $0x1e0] sm:$0xff]
  %v108 = vld [vmem:[%s4 + $0x1e8] sm:$0xff]
  %v109 = vld [vmem:[%s4 + $0x1f0] sm:$0xff]
  %v110 = vld [vmem:[%s4 + $0x1f8] sm:$0xff]
  %v111 = vld [vmem:[%s7] sm:$0xff]
  %v112 = vld [vmem:[%s7 + $0x8] sm:$0xff]
  %v113 = vld [vmem:[%s7 + $0x10] sm:$0xff]
  %v114 = vld [vmem:[%s7 + $0x18] sm:$0xff]
  %v115 = vld [vmem:[%s7 + $0x20] sm:$0xff]
  %v116 = vld [vmem:[%s7 + $0x28] sm:$0xff]
  %v117 = vld [vmem:[%s7 + $0x30] sm:$0xff]
  %v118 = vld [vmem:[%s7 + $0x38] sm:$0xff]
  %v119 = vld [vmem:[%s7 + $0x40] sm:$0xff]
  %v120 = vld [vmem:[%s7 + $0x48] sm:$0xff]
  %v121 = vld [vmem:[%s7 + $0x50] sm:$0xff]
  %v122 = vld [vmem:[%s7 + $0x58] sm:$0xff]
  %v123 = vld [vmem:[%s7 + $0x60] sm:$0xff]
  %v124 = vld [vmem:[%s7 + $0x68] sm:$0xff]
  %v125 = vld [vmem:[%s7 + $0x70] sm:$0xff]
  %v126 = vld [vmem:[%s7 + $0x78] sm:$0xff]
  %v127 = vld [vmem:[%s7 + $0x80] sm:$0xff]
  %v128 = vld [vmem:[%s7 + $0x88] sm:$0xff]
  %v129 = vld [vmem:[%s7 + $0x90] sm:$0xff]
  %v130 = vld [vmem:[%s7 + $0x98] sm:$0xff]
  %v131 = vld [vmem:[%s7 + $0xa0] sm:$0xff]
  %v132 = vld [vmem:[%s7 + $0xa8] sm:$0xff]
  %v133 = vld [vmem:[%s7 + $0xb0] sm:$0xff]
  %v134 = vld [vmem:[%s7 + $0xb8] sm:$0xff]
  %v135 = vld [vmem:[%s7 + $0xc0] sm:$0xff]
  %v136 = vld [vmem:[%s7 + $0xc8] sm:$0xff]
  %v137 = vld [vmem:[%s7 + $0xd0] sm:$0xff]
  %v138 = vld [vmem:[%s7 + $0xd8] sm:$0xff]
  %v139 = vld [vmem:[%s7 + $0xe0] sm:$0xff]
  %v140 = vld [vmem:[%s7 + $0xe8] sm:$0xff]
  %v141 = vld [vmem:[%s7 + $0xf0] sm:$0xff]
  %v142 = vld [vmem:[%s7 + $0xf8] sm:$0xff]
  %v143 = vld [vmem:[%s7 + $0x100] sm:$0xff]
  %v144 = vld [vmem:[%s7 + $0x108] sm:$0xff]
  %v145 = vld [vmem:[%s7 + $0x110] sm:$0xff]
  %v146 = vld [vmem:[%s7 + $0x118] sm:$0xff]
  %v147 = vld [vmem:[%s7 + $0x120] sm:$0xff]
  %v148 = vld [vmem:[%s7 + $0x128] sm:$0xff]
  %v149 = vld [vmem:[%s7 + $0x130] sm:$0xff]
  %v150 = vld [vmem:[%s7 + $0x138] sm:$0xff]
  %v151 = vld [vmem:[%s7 + $0x140] sm:$0xff]
  %v152 = vld [vmem:[%s7 + $0x148] sm:$0xff]
  %v153 = vld [vmem:[%s7 + $0x150] sm:$0xff]
  %v154 = vld [vmem:[%s7 + $0x158] sm:$0xff]
  %v155 = vld [vmem:[%s7 + $0x160] sm:$0xff]
  %v156 = vld [vmem:[%s7 + $0x168] sm:$0xff]
  %v157 = vld [vmem:[%s7 + $0x170] sm:$0xff]
  %v158 = vld [vmem:[%s7 + $0x178] sm:$0xff]
  %v159 = vld [vmem:[%s7 + $0x180] sm:$0xff]
  %v160 = vld [vmem:[%s7 + $0x188] sm:$0xff]
  %v161 = vld [vmem:[%s7 + $0x190] sm:$0xff]
  %v162 = vld [vmem:[%s7 + $0x198] sm:$0xff]
  %v163 = vld [vmem:[%s7 + $0x1a0] sm:$0xff]
  %v164 = vld [vmem:[%s7 + $0x1a8] sm:$0xff]
  %v165 = vld [vmem:[%s7 + $0x1b0] sm:$0xff]
  %v166 = vld [vmem:[%s7 + $0x1b8] sm:$0xff]
  %v167 = vld [vmem:[%s7 + $0x1c0] sm:$0xff]
  %v168 = vld [vmem:[%s7 + $0x1c8] sm:$0xff]
  %v169 = vld [vmem:[%s7 + $0x1d0] sm:$0xff]
  %v170 = vld [vmem:[%s7 + $0x1d8] sm:$0xff]
  %v171 = vld [vmem:[%s7 + $0x1e0] sm:$0xff]
  %v172 = vld [vmem:[%s7 + $0x1e8] sm:$0xff]
  %v173 = vld [vmem:[%s7 + $0x1f0] sm:$0xff]
  %v174 = vld [vmem:[%s7 + $0x1f8] sm:$0xff]
  %v175 = vld [vmem:[%s0] sm:$0xff]
  %v176 = vld [vmem:[%s0 + $0x8] sm:$0xff]
  %v177 = vld [vmem:[%s0 + $0x10] sm:$0xff]
  %v178 = vld [vmem:[%s0 + $0x18] sm:$0xff]
  %v179 = vld [vmem:[%s0 + $0x20] sm:$0xff]
  %v180 = vld [vmem:[%s0 + $0x28] sm:$0xff]
  %v181 = vld [vmem:[%s0 + $0x30] sm:$0xff]
  %v182 = vld [vmem:[%s0 + $0x38] sm:$0xff]
  %v183 = vld [vmem:[%s3] sm:$0xff]
  %v184 = vld [vmem:[%s3 + $0x8] sm:$0xff]
  %v185 = vld [vmem:[%s3 + $0x10] sm:$0xff]
  %v186 = vld [vmem:[%s3 + $0x18] sm:$0xff]
  %v187 = vld [vmem:[%s3 + $0x20] sm:$0xf]
  %v188 = vld [vmem:[%s3 + $0x28] sm:$0xf]
  %v189 = vld [vmem:[%s3 + $0x30] sm:$0xf]
  %v190 = vld [vmem:[%s3 + $0x38] sm:$0xf]
  %v191 = vld [vmem:[%s5] sm:$0xf]
  %v193 = vlaneseq
  %v194 = vshrl.u32 %v193, 7
  %v195 = vsub.s32 0, %v194
  %v196 = vrot.slane %v191, %v195
  %v197 = vlaneseq
  %v198 = vshrl.u32 %v197, 7
  %v199 = vsub.s32 1, %v198
  %v200 = vrot.slane %v191, %v199
  %v201 = vlaneseq
  %v202 = vshrl.u32 %v201, 7
  %v203 = vsub.s32 2, %v202
  %v204 = vrot.slane %v191, %v203
  %v205 = vlaneseq
  %v206 = vshrl.u32 %v205, 7
  %v207 = vsub.s32 3, %v206
  %v208 = vrot.slane %v191, %v207
  %vm213 = vcmask 97280
  %v215 = vsel %vm213, %v175, 0
  %v218 = vsel %vm213, %v176, 0
  %v221 = vsel %vm213, %v177, 0
  %v224 = vsel %vm213, %v178, 0
  %v227 = vsel %vm213, %v179, 0
  %v230 = vsel %vm213, %v180, 0
  %v233 = vsel %vm213, %v181, 0
  %v236 = vsel %vm213, %v182, 0
  %vm238 = vcmask 1043456
  %v240 = vsel %vm238, %v187, 0
  %v243 = vsel %vm238, %v188, 0
  %v246 = vsel %vm238, %v189, 0
  %v249 = vsel %vm238, %v190, 0
  %251 = vmatprep.subr.mxu0 %v184
  %252 = vmatpush1.msra.mxu0 %v183
  %253 = vmatprep.subr.mxu0 %v243
  %254 = vmatpush1.msra.mxu0 %v240
  %255 = vmatprep.subr.mxu0 0.0
  %256 = vmatpush1.msra.mxu0 0.0
  %257 = vmatprep.subr.mxu0 0.0
  %258 = vmatpush1.msra.mxu0 0.0
  %259 = vmatprep.subr.mxu0 0.0
  %260 = vmatpush1.msra.mxu0 0.0
  %261 = vmatprep.subr.mxu0 0.0
  %262 = vmatpush1.msra.mxu0 0.0
  %263 = vmatprep.subr.mxu0 0.0
  %264 = vmatpush1.msra.mxu0 0.0
  %265 = vmatprep.subr.mxu0 0.0
  %266 = vmatpush1.msra.mxu0 0.0
  %267 = vmatprep.subr.mxu0 0.0
  %268 = vmatpush1.msra.mxu0 0.0
  %269 = vmatprep.subr.mxu0 0.0
  %270 = vmatpush1.msra.mxu0 0.0
  %271 = vmatprep.subr.mxu0 0.0
  %272 = vmatpush1.msra.mxu0 0.0
  %273 = vmatprep.subr.mxu0 0.0
  %274 = vmatpush1.msra.mxu0 0.0
  %275 = vmatprep.subr.mxu0 0.0
  %276 = vmatpush1.msra.mxu0 0.0
  %277 = vmatprep.subr.mxu0 0.0
  %278 = vmatpush1.msra.mxu0 0.0
  %279 = vmatprep.subr.mxu0 0.0
  %280 = vmatpush1.msra.mxu0 0.0
  %281 = vmatprep.subr.mxu0 0.0
  %282 = vmatpush1.msra.mxu0 0.0
  %283 = vmatprep.subr.mxu0 0.0
  %284 = vmatpush1.msra.mxu0 0.0
  %285 = vmatprep.subr.mxu0 0.0
  %286 = vmatpush1.msra.mxu0 0.0
  %287 = vmatprep.subr.mxu0 0.0
  %288 = vmatpush1.msra.mxu0 0.0
  %289 = vmatprep.subr.mxu0 0.0
  %290 = vmatpush1.msra.mxu0 0.0
  %291 = vmatprep.subr.mxu0 0.0
  %292 = vmatpush1.msra.mxu0 0.0
  %293 = vmatprep.subr.mxu0 0.0
  %294 = vmatpush1.msra.mxu0 0.0
  %295 = vmatprep.subr.mxu0 0.0
  %296 = vmatpush1.msra.mxu0 0.0
  %297 = vmatprep.subr.mxu0 0.0
  %298 = vmatpush1.msra.mxu0 0.0
  %299 = vmatprep.subr.mxu0 0.0
  %300 = vmatpush1.msra.mxu0 0.0
  %301 = vmatprep.subr.mxu0 0.0
  %302 = vmatpush1.msra.mxu0 0.0
  %303 = vmatprep.subr.mxu0 0.0
  %304 = vmatpush1.msra.mxu0 0.0
  %305 = vmatprep.subr.mxu0 0.0
  %306 = vmatpush1.msra.mxu0 0.0
  %307 = vmatprep.subr.mxu0 0.0
  %308 = vmatpush1.msra.mxu0 0.0
  %309 = vmatprep.subr.mxu0 0.0
  %310 = vmatpush1.msra.mxu0 0.0
  %311 = vmatprep.subr.mxu0 0.0
  %312 = vmatpush1.msra.mxu0 0.0
  %313 = vmatprep.subr.mxu0 0.0
  %314 = vmatpush1.msra.mxu0 0.0
  %315 = vmatprep.mubr.f32.mxu0 0.0
  %316 = vmatmul.mubr.f32.gmra.mrb[0].mxu0 %v215
  %v317 = vpop.f32.mrb[0].mxu0
  %v318 = vadd.f32 %v196, %v317
  %v319 = vpop.f32.mrb[0].mxu0
  %v320 = vadd.f32 %v200, %v319
  %321 = vmatprep.mubr.f32.mxu0 0.0
  %322 = vmatmul.mubr.f32.gmra.mrb[0].mxu0 %v218
  %v323 = vpop.f32.mrb[0].mxu0
  %v324 = vadd.f32 %v196, %v323
  %v325 = vpop.f32.mrb[0].mxu0
  %v326 = vadd.f32 %v200, %v325
  %327 = vmatprep.mubr.f32.mxu0 0.0
  %328 = vmatmul.mubr.f32.gmra.mrb[0].mxu0 %v221
  %v329 = vpop.f32.mrb[0].mxu0
  %v330 = vadd.f32 %v196, %v329
  %v331 = vpop.f32.mrb[0].mxu0
  %v332 = vadd.f32 %v200, %v331
  %333 = vmatprep.mubr.f32.mxu0 0.0
  %334 = vmatmul.mubr.f32.gmra.mrb[0].mxu0 %v224
  %v335 = vpop.f32.mrb[0].mxu0
  %v336 = vadd.f32 %v196, %v335
  %v337 = vpop.f32.mrb[0].mxu0
  %v338 = vadd.f32 %v200, %v337
  %339 = vmatprep.mubr.f32.mxu0 0.0
  %340 = vmatmul.mubr.f32.gmra.mrb[0].mxu0 %v227
  %v341 = vpop.f32.mrb[0].mxu0
  %v342 = vadd.f32 %v196, %v341
  %v343 = vpop.f32.mrb[0].mxu0
  %v344 = vadd.f32 %v200, %v343
  %345 = vmatprep.mubr.f32.mxu0 0.0
  %346 = vmatmul.mubr.f32.gmra.mrb[0].mxu0 %v230
  %v347 = vpop.f32.mrb[0].mxu0
  %v348 = vadd.f32 %v196, %v347
  %v349 = vpop.f32.mrb[0].mxu0
  %v350 = vadd.f32 %v200, %v349
  %351 = vmatprep.mubr.f32.mxu0 0.0
  %352 = vmatmul.mubr.f32.gmra.mrb[0].mxu0 %v233
  %v353 = vpop.f32.mrb[0].mxu0
  %v354 = vadd.f32 %v196, %v353
  %v355 = vpop.f32.mrb[0].mxu0
  %v356 = vadd.f32 %v200, %v355
  %357 = vmatprep.mubr.f32.mxu0 0.0
  %358 = vmatmul.mubr.f32.gmra.mrb[0].mxu0 %v236
  %v359 = vpop.f32.mrb[0].mxu0
  %v360 = vadd.f32 %v196, %v359
  %v361 = vpop.f32.mrb[0].mxu0
  %v362 = vadd.f32 %v200, %v361
  %363 = vdwg.mxu0
  %364 = vmatprep.subr.mxu0 %v186
  %365 = vmatpush1.msra.mxu0 %v185
  %366 = vmatprep.subr.mxu0 %v249
  %367 = vmatpush1.msra.mxu0 %v246
  %368 = vmatprep.subr.mxu0 0.0
  %369 = vmatpush1.msra.mxu0 0.0
  %370 = vmatprep.subr.mxu0 0.0
  %371 = vmatpush1.msra.mxu0 0.0
  %372 = vmatprep.subr.mxu0 0.0
  %373 = vmatpush1.msra.mxu0 0.0
  %374 = vmatprep.subr.mxu0 0.0
  %375 = vmatpush1.msra.mxu0 0.0
  %376 = vmatprep.subr.mxu0 0.0
  %377 = vmatpush1.msra.mxu0 0.0
  %378 = vmatprep.subr.mxu0 0.0
  %379 = vmatpush1.msra.mxu0 0.0
  %380 = vmatprep.subr.mxu0 0.0
  %381 = vmatpush1.msra.mxu0 0.0
  %382 = vmatprep.subr.mxu0 0.0
  %383 = vmatpush1.msra.mxu0 0.0
  %384 = vmatprep.subr.mxu0 0.0
  %385 = vmatpush1.msra.mxu0 0.0
  %386 = vmatprep.subr.mxu0 0.0
  %387 = vmatpush1.msra.mxu0 0.0
  %388 = vmatprep.subr.mxu0 0.0
  %389 = vmatpush1.msra.mxu0 0.0
  %390 = vmatprep.subr.mxu0 0.0
  %391 = vmatpush1.msra.mxu0 0.0
  %392 = vmatprep.subr.mxu0 0.0
  %393 = vmatpush1.msra.mxu0 0.0
  %394 = vmatprep.subr.mxu0 0.0
  %395 = vmatpush1.msra.mxu0 0.0
  %396 = vmatprep.subr.mxu0 0.0
  %397 = vmatpush1.msra.mxu0 0.0
  %398 = vmatprep.subr.mxu0 0.0
  %399 = vmatpush1.msra.mxu0 0.0
  %400 = vmatprep.subr.mxu0 0.0
  %401 = vmatpush1.msra.mxu0 0.0
  %402 = vmatprep.subr.mxu0 0.0
  %403 = vmatpush1.msra.mxu0 0.0
  %404 = vmatprep.subr.mxu0 0.0
  %405 = vmatpush1.msra.mxu0 0.0
  %406 = vmatprep.subr.mxu0 0.0
  %407 = vmatpush1.msra.mxu0 0.0
  %408 = vmatprep.subr.mxu0 0.0
  %409 = vmatpush1.msra.mxu0 0.0
  %410 = vmatprep.subr.mxu0 0.0
  %411 = vmatpush1.msra.mxu0 0.0
  %412 = vmatprep.subr.mxu0 0.0
  %413 = vmatpush1.msra.mxu0 0.0
  %414 = vmatprep.subr.mxu0 0.0
  %415 = vmatpush1.msra.mxu0 0.0
  %416 = vmatprep.subr.mxu0 0.0
  %417 = vmatpush1.msra.mxu0 0.0
  %418 = vmatprep.subr.mxu0 0.0
  %419 = vmatpush1.msra.mxu0 0.0
  %420 = vmatprep.subr.mxu0 0.0
  %421 = vmatpush1.msra.mxu0 0.0
  %422 = vmatprep.subr.mxu0 0.0
  %423 = vmatpush1.msra.mxu0 0.0
  %424 = vmatprep.subr.mxu0 0.0
  %425 = vmatpush1.msra.mxu0 0.0
  %426 = vmatprep.subr.mxu0 0.0
  %427 = vmatpush1.msra.mxu0 0.0
  %428 = vmatprep.mubr.f32.mxu0 0.0
  %429 = vmatmul.mubr.f32.gmra.mrb[0].mxu0 %v215
  %v430 = vpop.f32.mrb[0].mxu0
  %v431 = vadd.f32 %v204, %v430
  %v432 = vpop.f32.mrb[0].mxu0
  %v433 = vadd.f32 %v208, %v432
  %434 = vmatprep.mubr.f32.mxu0 0.0
  %435 = vmatmul.mubr.f32.gmra.mrb[0].mxu0 %v218
  %v436 = vpop.f32.mrb[0].mxu0
  %v437 = vadd.f32 %v204, %v436
  %v438 = vpop.f32.mrb[0].mxu0
  %v439 = vadd.f32 %v208, %v438
  %440 = vmatprep.mubr.f32.mxu0 0.0
  %441 = vmatmul.mubr.f32.gmra.mrb[0].mxu0 %v221
  %v442 = vpop.f32.mrb[0].mxu0
  %v443 = vadd.f32 %v204, %v442
  %v444 = vpop.f32.mrb[0].mxu0
  %v445 = vadd.f32 %v208, %v444
  %446 = vmatprep.mubr.f32.mxu0 0.0
  %447 = vmatmul.mubr.f32.gmra.mrb[0].mxu0 %v224
  %v448 = vpop.f32.mrb[0].mxu0
  %v449 = vadd.f32 %v204, %v448
  %v450 = vpop.f32.mrb[0].mxu0
  %v451 = vadd.f32 %v208, %v450
  %452 = vmatprep.mubr.f32.mxu0 0.0
  %453 = vmatmul.mubr.f32.gmra.mrb[0].mxu0 %v227
  %v454 = vpop.f32.mrb[0].mxu0
  %v455 = vadd.f32 %v204, %v454
  %v456 = vpop.f32.mrb[0].mxu0
  %v457 = vadd.f32 %v208, %v456
  %458 = vmatprep.mubr.f32.mxu0 0.0
  %459 = vmatmul.mubr.f32.gmra.mrb[0].mxu0 %v230
  %v460 = vpop.f32.mrb[0].mxu0
  %v461 = vadd.f32 %v204, %v460
  %v462 = vpop.f32.mrb[0].mxu0
  %v463 = vadd.f32 %v208, %v462
  %464 = vmatprep.mubr.f32.mxu0 0.0
  %465 = vmatmul.mubr.f32.gmra.mrb[0].mxu0 %v233
  %v466 = vpop.f32.mrb[0].mxu0
  %v467 = vadd.f32 %v204, %v466
  %v468 = vpop.f32.mrb[0].mxu0
  %v469 = vadd.f32 %v208, %v468
  %470 = vmatprep.mubr.f32.mxu0 0.0
  %471 = vmatmul.mubr.f32.gmra.mrb[0].mxu0 %v236
  %v472 = vpop.f32.mrb[0].mxu0
  %v473 = vadd.f32 %v204, %v472
  %v474 = vpop.f32.mrb[0].mxu0
  %v475 = vadd.f32 %v208, %v474
  %476 = vdwg.mxu0
  %477 = vst [vmem:[#allocation2] sm:$0xff] %v318
  %478 = vst [vmem:[#allocation2 + $0x8] sm:$0xff] %v320
  %479 = vst [vmem:[#allocation2 + $0x10] sm:$0xff] %v431
  %480 = vst [vmem:[#allocation2 + $0x18] sm:$0xff] %v433
  %481 = vst [vmem:[#allocation2 + $0x20] sm:$0xff] %v324
  %482 = vst [vmem:[#allocation2 + $0x28] sm:$0xff] %v326
  %483 = vst [vmem:[#allocation2 + $0x30] sm:$0xff] %v437
  %484 = vst [vmem:[#allocation2 + $0x38] sm:$0xff] %v439
  %485 = vst [vmem:[#allocation2 + $0x40] sm:$0xff] %v330
  %486 = vst [vmem:[#allocation2 + $0x48] sm:$0xff] %v332
  %487 = vst [vmem:[#allocation2 + $0x50] sm:$0xff] %v443
  %488 = vst [vmem:[#allocation2 + $0x58] sm:$0xff] %v445
  %489 = vst [vmem:[#allocation2 + $0x60] sm:$0xff] %v336
  %490 = vst [vmem:[#allocation2 + $0x68] sm:$0xff] %v338
  %491 = vst [vmem:[#allocation2 + $0x70] sm:$0xff] %v449
  %492 = vst [vmem:[#allocation2 + $0x78] sm:$0xff] %v451
  %493 = vst [vmem:[#allocation2 + $0x80] sm:$0xff] %v342
  %494 = vst [vmem:[#allocation2 + $0x88] sm:$0xff] %v344
  %495 = vst [vmem:[#allocation2 + $0x90] sm:$0xff] %v455
  %496 = vst [vmem:[#allocation2 + $0x98] sm:$0xff] %v457
  %497 = vst [vmem:[#allocation2 + $0xa0] sm:$0xff] %v348
  %498 = vst [vmem:[#allocation2 + $0xa8] sm:$0xff] %v350
  %499 = vst [vmem:[#allocation2 + $0xb0] sm:$0xff] %v461
  %500 = vst [vmem:[#allocation2 + $0xb8] sm:$0xff] %v463
  %501 = vst [vmem:[#allocation2 + $0xc0] sm:$0xff] %v354
  %502 = vst [vmem:[#allocation2 + $0xc8] sm:$0xff] %v356
  %503 = vst [vmem:[#allocation2 + $0xd0] sm:$0xff] %v467
  %504 = vst [vmem:[#allocation2 + $0xd8] sm:$0xff] %v469
  %505 = vst [vmem:[#allocation2 + $0xe0] sm:$0xff] %v360
  %506 = vst [vmem:[#allocation2 + $0xe8] sm:$0xff] %v362
  %507 = vst [vmem:[#allocation2 + $0xf0] sm:$0xff] %v473
  %508 = vst [vmem:[#allocation2 + $0xf8] sm:$0xff] %v475
  %v509 = vld [vmem:[%s1] sm:$0xff]
  %v510 = vld [vmem:[%s2] sm:$0xff]
  %s511 = smul.u32 0, 4
  %s512 = smul.addr %s511, 8
  %s513 = scalar_lea.vmem [#allocation2], %s512
  %v514 = vld [vmem:[%s513] sm:$0xff]
  %v515 = vld [vmem:[%s513 + $0x8] sm:$0xff]
  %v516 = vld [vmem:[%s513 + $0x10] sm:$0xff]
  %v517 = vld [vmem:[%s513 + $0x18] sm:$0xff]
  %518 = vmatprep.subr.mxu0 %v48
  %519 = vmatpush1.msra.mxu0 %v47
  %520 = vmatprep.subr.mxu0 %v52
  %521 = vmatpush1.msra.mxu0 %v51
  %522 = vmatprep.subr.mxu0 %v56
  %523 = vmatpush1.msra.mxu0 %v55
  %524 = vmatprep.subr.mxu0 %v60
  %525 = vmatpush1.msra.mxu0 %v59
  %526 = vmatprep.subr.mxu0 %v64
  %527 = vmatpush1.msra.mxu0 %v63
  %528 = vmatprep.subr.mxu0 %v68
  %529 = vmatpush1.msra.mxu0 %v67
  %530 = vmatprep.subr.mxu0 %v72
  %531 = vmatpush1.msra.mxu0 %v71
  %532 = vmatprep.subr.mxu0 %v76
  %533 = vmatpush1.msra.mxu0 %v75
  %534 = vmatprep.subr.mxu0 %v80
  %535 = vmatpush1.msra.mxu0 %v79
  %536 = vmatprep.subr.mxu0 %v84
  %537 = vmatpush1.msra.mxu0 %v83
  %538 = vmatprep.subr.mxu0 %v88
  %539 = vmatpush1.msra.mxu0 %v87
  %540 = vmatprep.subr.mxu0 %v92
  %541 = vmatpush1.msra.mxu0 %v91
  %542 = vmatprep.subr.mxu0 %v96
  %543 = vmatpush1.msra.mxu0 %v95
  %544 = vmatprep.subr.mxu0 %v100
  %545 = vmatpush1.msra.mxu0 %v99
  %546 = vmatprep.subr.mxu0 %v104
  %547 = vmatpush1.msra.mxu0 %v103
  %548 = vmatprep.subr.mxu0 %v108
  %549 = vmatpush1.msra.mxu0 %v107
  %550 = vmatprep.subr.mxu0 0.0
  %551 = vmatpush1.msra.mxu0 0.0
  %552 = vmatprep.subr.mxu0 0.0
  %553 = vmatpush1.msra.mxu0 0.0
  %554 = vmatprep.subr.mxu0 0.0
  %555 = vmatpush1.msra.mxu0 0.0
  %556 = vmatprep.subr.mxu0 0.0
  %557 = vmatpush1.msra.mxu0 0.0
  %558 = vmatprep.subr.mxu0 0.0
  %559 = vmatpush1.msra.mxu0 0.0
  %560 = vmatprep.subr.mxu0 0.0
  %561 = vmatpush1.msra.mxu0 0.0
  %562 = vmatprep.subr.mxu0 0.0
  %563 = vmatpush1.msra.mxu0 0.0
  %564 = vmatprep.subr.mxu0 0.0
  %565 = vmatpush1.msra.mxu0 0.0
  %566 = vmatprep.subr.mxu0 0.0
  %567 = vmatpush1.msra.mxu0 0.0
  %568 = vmatprep.subr.mxu0 0.0
  %569 = vmatpush1.msra.mxu0 0.0
  %570 = vmatprep.subr.mxu0 0.0
  %571 = vmatpush1.msra.mxu0 0.0
  %572 = vmatprep.subr.mxu0 0.0
  %573 = vmatpush1.msra.mxu0 0.0
  %574 = vmatprep.subr.mxu0 0.0
  %575 = vmatpush1.msra.mxu0 0.0
  %576 = vmatprep.subr.mxu0 0.0
  %577 = vmatpush1.msra.mxu0 0.0
  %578 = vmatprep.subr.mxu0 0.0
  %579 = vmatpush1.msra.mxu0 0.0
  %580 = vmatprep.subr.mxu0 0.0
  %581 = vmatpush1.msra.mxu0 0.0
  %582 = vmatprep.mubr.f32.mxu0 0.0
  %583 = vmatmul.mubr.f32.gmra.mrb[0].mxu0 %v509
  %v584 = vpop.f32.mrb[0].mxu0
  %v585 = vadd.f32 0.0, %v584
  %v586 = vpop.f32.mrb[0].mxu0
  %v587 = vadd.f32 0.0, %v586
  %588 = vdwg.mxu0
  %589 = vmatprep.subr.mxu0 %v50
  %590 = vmatpush1.msra.mxu0 %v49
  %591 = vmatprep.subr.mxu0 %v54
  %592 = vmatpush1.msra.mxu0 %v53
  %593 = vmatprep.subr.mxu0 %v58
  %594 = vmatpush1.msra.mxu0 %v57
  %595 = vmatprep.subr.mxu0 %v62
  %596 = vmatpush1.msra.mxu0 %v61
  %597 = vmatprep.subr.mxu0 %v66
  %598 = vmatpush1.msra.mxu0 %v65
  %599 = vmatprep.subr.mxu0 %v70
  %600 = vmatpush1.msra.mxu0 %v69
  %601 = vmatprep.subr.mxu0 %v74
  %602 = vmatpush1.msra.mxu0 %v73
  %603 = vmatprep.subr.mxu0 %v78
  %604 = vmatpush1.msra.mxu0 %v77
  %605 = vmatprep.subr.mxu0 %v82
  %606 = vmatpush1.msra.mxu0 %v81
  %607 = vmatprep.subr.mxu0 %v86
  %608 = vmatpush1.msra.mxu0 %v85
  %609 = vmatprep.subr.mxu0 %v90
  %610 = vmatpush1.msra.mxu0 %v89
  %611 = vmatprep.subr.mxu0 %v94
  %612 = vmatpush1.msra.mxu0 %v93
  %613 = vmatprep.subr.mxu0 %v98
  %614 = vmatpush1.msra.mxu0 %v97
  %615 = vmatprep.subr.mxu0 %v102
  %616 = vmatpush1.msra.mxu0 %v101
  %617 = vmatprep.subr.mxu0 %v106
  %618 = vmatpush1.msra.mxu0 %v105
  %619 = vmatprep.subr.mxu0 %v110
  %620 = vmatpush1.msra.mxu0 %v109
  %621 = vmatprep.subr.mxu0 0.0
  %622 = vmatpush1.msra.mxu0 0.0
  %623 = vmatprep.subr.mxu0 0.0
  %624 = vmatpush1.msra.mxu0 0.0
  %625 = vmatprep.subr.mxu0 0.0
  %626 = vmatpush1.msra.mxu0 0.0
  %627 = vmatprep.subr.mxu0 0.0
  %628 = vmatpush1.msra.mxu0 0.0
  %629 = vmatprep.subr.mxu0 0.0
  %630 = vmatpush1.msra.mxu0 0.0
  %631 = vmatprep.subr.mxu0 0.0
  %632 = vmatpush1.msra.mxu0 0.0
  %633 = vmatprep.subr.mxu0 0.0
  %634 = vmatpush1.msra.mxu0 0.0
  %635 = vmatprep.subr.mxu0 0.0
  %636 = vmatpush1.msra.mxu0 0.0
  %637 = vmatprep.subr.mxu0 0.0
  %638 = vmatpush1.msra.mxu0 0.0
  %639 = vmatprep.subr.mxu0 0.0
  %640 = vmatpush1.msra.mxu0 0.0
  %641 = vmatprep.subr.mxu0 0.0
  %642 = vmatpush1.msra.mxu0 0.0
  %643 = vmatprep.subr.mxu0 0.0
  %644 = vmatpush1.msra.mxu0 0.0
  %645 = vmatprep.subr.mxu0 0.0
  %646 = vmatpush1.msra.mxu0 0.0
  %647 = vmatprep.subr.mxu0 0.0
  %648 = vmatpush1.msra.mxu0 0.0
  %649 = vmatprep.subr.mxu0 0.0
  %650 = vmatpush1.msra.mxu0 0.0
  %651 = vmatprep.subr.mxu0 0.0
  %652 = vmatpush1.msra.mxu0 0.0
  %653 = vmatprep.mubr.f32.mxu0 0.0
  %654 = vmatmul.mubr.f32.gmra.mrb[0].mxu0 %v509
  %v655 = vpop.f32.mrb[0].mxu0
  %v656 = vadd.f32 0.0, %v655
  %v657 = vpop.f32.mrb[0].mxu0
  %v658 = vadd.f32 0.0, %v657
  %659 = vdwg.mxu0
  %v660 = vadd.f32 %v514, %v585
  %v661 = vadd.f32 %v515, %v587
  %v662 = vadd.f32 %v516, %v656
  %v663 = vadd.f32 %v517, %v658
  %v664 = vxor.u32 %v660, 2147483648
  %v665 = vmul.f32 %v664, 1.442695
  %v666 = vpow.pop %v665
  %v667 = vadd.f32 %v666, 1.0
  %v668 = vrcp.pop %v667
  %v669 = vmul.f32 1.0, %v668
  %v670 = vxor.u32 %v661, 2147483648
  %v671 = vmul.f32 %v670, 1.442695
  %v672 = vpow.pop %v671
  %v673 = vadd.f32 %v672, 1.0
  %v674 = vrcp.pop %v673
  %v675 = vmul.f32 1.0, %v674
  %v676 = vtanh.pop %v662
  %v677 = vxor.u32 %v663, 2147483648
  %v678 = vmul.f32 %v677, 1.442695
  %v679 = vpow.pop %v678
  %v680 = vadd.f32 %v679, 1.0
  %v681 = vrcp.pop %v680
  %v682 = vmul.f32 1.0, %v681
  %v683 = vmul.f32 %v675, %v510
  %v684 = vmul.f32 %v669, %v676
  %v685 = vadd.f32 %v683, %v684
  %v686 = vtanh.pop %v685
  %v687 = vmul.f32 %v682, %v686
  %688 = vst [vmem:[#allocation3] sm:$0xff] %v687
  %s689 = smul.u32 1, 4
  %s690 = smul.addr %s689, 8
  %s691 = scalar_lea.vmem [#allocation2], %s690
  %v692 = vld [vmem:[%s691] sm:$0xff]
  %v693 = vld [vmem:[%s691 + $0x8] sm:$0xff]
  %v694 = vld [vmem:[%s691 + $0x10] sm:$0xff]
  %v695 = vld [vmem:[%s691 + $0x18] sm:$0xff]
  %696 = vmatprep.subr.mxu0 %v48
  %697 = vmatpush1.msra.mxu0 %v47
  %698 = vmatprep.subr.mxu0 %v52
  %699 = vmatpush1.msra.mxu0 %v51
  %700 = vmatprep.subr.mxu0 %v56
  %701 = vmatpush1.msra.mxu0 %v55
  %702 = vmatprep.subr.mxu0 %v60
  %703 = vmatpush1.msra.mxu0 %v59
  %704 = vmatprep.subr.mxu0 %v64
  %705 = vmatpush1.msra.mxu0 %v63
  %706 = vmatprep.subr.mxu0 %v68
  %707 = vmatpush1.msra.mxu0 %v67
  %708 = vmatprep.subr.mxu0 %v72
  %709 = vmatpush1.msra.mxu0 %v71
  %710 = vmatprep.subr.mxu0 %v76
  %711 = vmatpush1.msra.mxu0 %v75
  %712 = vmatprep.subr.mxu0 %v80
  %713 = vmatpush1.msra.mxu0 %v79
  %714 = vmatprep.subr.mxu0 %v84
  %715 = vmatpush1.msra.mxu0 %v83
  %716 = vmatprep.subr.mxu0 %v88
  %717 = vmatpush1.msra.mxu0 %v87
  %718 = vmatprep.subr.mxu0 %v92
  %719 = vmatpush1.msra.mxu0 %v91
  %720 = vmatprep.subr.mxu0 %v96
  %721 = vmatpush1.msra.mxu0 %v95
  %722 = vmatprep.subr.mxu0 %v100
  %723 = vmatpush1.msra.mxu0 %v99
  %724 = vmatprep.subr.mxu0 %v104
  %725 = vmatpush1.msra.mxu0 %v103
  %726 = vmatprep.subr.mxu0 %v108
  %727 = vmatpush1.msra.mxu0 %v107
  %728 = vmatprep.subr.mxu0 0.0
  %729 = vmatpush1.msra.mxu0 0.0
  %730 = vmatprep.subr.mxu0 0.0
  %731 = vmatpush1.msra.mxu0 0.0
  %732 = vmatprep.subr.mxu0 0.0
  %733 = vmatpush1.msra.mxu0 0.0
  %734 = vmatprep.subr.mxu0 0.0
  %735 = vmatpush1.msra.mxu0 0.0
  %736 = vmatprep.subr.mxu0 0.0
  %737 = vmatpush1.msra.mxu0 0.0
  %738 = vmatprep.subr.mxu0 0.0
  %739 = vmatpush1.msra.mxu0 0.0
  %740 = vmatprep.subr.mxu0 0.0
  %741 = vmatpush1.msra.mxu0 0.0
  %742 = vmatprep.subr.mxu0 0.0
  %743 = vmatpush1.msra.mxu0 0.0
  %744 = vmatprep.subr.mxu0 0.0
  %745 = vmatpush1.msra.mxu0 0.0
  %746 = vmatprep.subr.mxu0 0.0
  %747 = vmatpush1.msra.mxu0 0.0
  %748 = vmatprep.subr.mxu0 0.0
  %749 = vmatpush1.msra.mxu0 0.0
  %750 = vmatprep.subr.mxu0 0.0
  %751 = vmatpush1.msra.mxu0 0.0
  %752 = vmatprep.subr.mxu0 0.0
  %753 = vmatpush1.msra.mxu0 0.0
  %754 = vmatprep.subr.mxu0 0.0
  %755 = vmatpush1.msra.mxu0 0.0
  %756 = vmatprep.subr.mxu0 0.0
  %757 = vmatpush1.msra.mxu0 0.0
  %758 = vmatprep.subr.mxu0 0.0
  %759 = vmatpush1.msra.mxu0 0.0
  %760 = vmatprep.mubr.f32.mxu0 0.0
  %761 = vmatmul.mubr.f32.gmra.mrb[0].mxu0 %v687
  %v762 = vpop.f32.mrb[0].mxu0
  %v763 = vadd.f32 0.0, %v762
  %v764 = vpop.f32.mrb[0].mxu0
  %v765 = vadd.f32 0.0, %v764
  %766 = vdwg.mxu0
  %767 = vmatprep.subr.mxu0 %v50
  %768 = vmatpush1.msra.mxu0 %v49
  %769 = vmatprep.subr.mxu0 %v54
  %770 = vmatpush1.msra.mxu0 %v53
  %771 = vmatprep.subr.mxu0 %v58
  %772 = vmatpush1.msra.mxu0 %v57
  %773 = vmatprep.subr.mxu0 %v62
  %774 = vmatpush1.msra.mxu0 %v61
  %775 = vmatprep.subr.mxu0 %v66
  %776 = vmatpush1.msra.mxu0 %v65
  %777 = vmatprep.subr.mxu0 %v70
  %778 = vmatpush1.msra.mxu0 %v69
  %779 = vmatprep.subr.mxu0 %v74
  %780 = vmatpush1.msra.mxu0 %v73
  %781 = vmatprep.subr.mxu0 %v78
  %782 = vmatpush1.msra.mxu0 %v77
  %783 = vmatprep.subr.mxu0 %v82
  %784 = vmatpush1.msra.mxu0 %v81
  %785 = vmatprep.subr.mxu0 %v86
  %786 = vmatpush1.msra.mxu0 %v85
  %787 = vmatprep.subr.mxu0 %v90
  %788 = vmatpush1.msra.mxu0 %v89
  %789 = vmatprep.subr.mxu0 %v94
  %790 = vmatpush1.msra.mxu0 %v93
  %791 = vmatprep.subr.mxu0 %v98
  %792 = vmatpush1.msra.mxu0 %v97
  %793 = vmatprep.subr.mxu0 %v102
  %794 = vmatpush1.msra.mxu0 %v101
  %795 = vmatprep.subr.mxu0 %v106
  %796 = vmatpush1.msra.mxu0 %v105
  %797 = vmatprep.subr.mxu0 %v110
  %798 = vmatpush1.msra.mxu0 %v109
  %799 = vmatprep.subr.mxu0 0.0
  %800 = vmatpush1.msra.mxu0 0.0
  %801 = vmatprep.subr.mxu0 0.0
  %802 = vmatpush1.msra.mxu0 0.0
  %803 = vmatprep.subr.mxu0 0.0
  %804 = vmatpush1.msra.mxu0 0.0
  %805 = vmatprep.subr.mxu0 0.0
  %806 = vmatpush1.msra.mxu0 0.0
  %807 = vmatprep.subr.mxu0 0.0
  %808 = vmatpush1.msra.mxu0 0.0
  %809 = vmatprep.subr.mxu0 0.0
  %810 = vmatpush1.msra.mxu0 0.0
  %811 = vmatprep.subr.mxu0 0.0
  %812 = vmatpush1.msra.mxu0 0.0
  %813 = vmatprep.subr.mxu0 0.0
  %814 = vmatpush1.msra.mxu0 0.0
  %815 = vmatprep.subr.mxu0 0.0
  %816 = vmatpush1.msra.mxu0 0.0
  %817 = vmatprep.subr.mxu0 0.0
  %818 = vmatpush1.msra.mxu0 0.0
  %819 = vmatprep.subr.mxu0 0.0
  %820 = vmatpush1.msra.mxu0 0.0
  %821 = vmatprep.subr.mxu0 0.0
  %822 = vmatpush1.msra.mxu0 0.0
  %823 = vmatprep.subr.mxu0 0.0
  %824 = vmatpush1.msra.mxu0 0.0
  %825 = vmatprep.subr.mxu0 0.0
  %826 = vmatpush1.msra.mxu0 0.0
  %827 = vmatprep.subr.mxu0 0.0
  %828 = vmatpush1.msra.mxu0 0.0
  %829 = vmatprep.subr.mxu0 0.0
  %830 = vmatpush1.msra.mxu0 0.0
  %831 = vmatprep.mubr.f32.mxu0 0.0
  %832 = vmatmul.mubr.f32.gmra.mrb[0].mxu0 %v687
  %v833 = vpop.f32.mrb[0].mxu0
  %v834 = vadd.f32 0.0, %v833
  %v835 = vpop.f32.mrb[0].mxu0
  %v836 = vadd.f32 0.0, %v835
  %837 = vdwg.mxu0
  %v838 = vadd.f32 %v692, %v763
  %v839 = vadd.f32 %v693, %v765
  %v840 = vadd.f32 %v694, %v834
  %v841 = vadd.f32 %v695, %v836
  %v842 = vxor.u32 %v838, 2147483648
  %v843 = vmul.f32 %v842, 1.442695
  %v844 = vpow.pop %v843
  %v845 = vadd.f32 %v844, 1.0
  %v846 = vrcp.pop %v845
  %v847 = vmul.f32 1.0, %v846
  %v848 = vxor.u32 %v839, 2147483648
  %v849 = vmul.f32 %v848, 1.442695
  %v850 = vpow.pop %v849
  %v851 = vadd.f32 %v850, 1.0
  %v852 = vrcp.pop %v851
  %v853 = vmul.f32 1.0, %v852
  %v854 = vtanh.pop %v840
  %v855 = vxor.u32 %v841, 2147483648
  %v856 = vmul.f32 %v855, 1.442695
  %v857 = vpow.pop %v856
  %v858 = vadd.f32 %v857, 1.0
  %v859 = vrcp.pop %v858
  %v860 = vmul.f32 1.0, %v859
  %v861 = vmul.f32 %v853, %v685
  %v862 = vmul.f32 %v847, %v854
  %v863 = vadd.f32 %v861, %v862
  %v864 = vtanh.pop %v863
  %v865 = vmul.f32 %v860, %v864
  %s866 = scalar_lea.vmem [#allocation3], 8
  %867 = vst [vmem:[%s866] sm:$0xff] %v865
  %s868 = smul.u32 2, 4
  %s869 = smul.addr %s868, 8
  %s870 = scalar_lea.vmem [#allocation2], %s869
  %v871 = vld [vmem:[%s870] sm:$0xff]
  %v872 = vld [vmem:[%s870 + $0x8] sm:$0xff]
  %v873 = vld [vmem:[%s870 + $0x10] sm:$0xff]
  %v874 = vld [vmem:[%s870 + $0x18] sm:$0xff]
  %875 = vmatprep.subr.mxu0 %v48
  %876 = vmatpush1.msra.mxu0 %v47
  %877 = vmatprep.subr.mxu0 %v52
  %878 = vmatpush1.msra.mxu0 %v51
  %879 = vmatprep.subr.mxu0 %v56
  %880 = vmatpush1.msra.mxu0 %v55
  %881 = vmatprep.subr.mxu0 %v60
  %882 = vmatpush1.msra.mxu0 %v59
  %883 = vmatprep.subr.mxu0 %v64
  %884 = vmatpush1.msra.mxu0 %v63
  %885 = vmatprep.subr.mxu0 %v68
  %886 = vmatpush1.msra.mxu0 %v67
  %887 = vmatprep.subr.mxu0 %v72
  %888 = vmatpush1.msra.mxu0 %v71
  %889 = vmatprep.subr.mxu0 %v76
  %890 = vmatpush1.msra.mxu0 %v75
  %891 = vmatprep.subr.mxu0 %v80
  %892 = vmatpush1.msra.mxu0 %v79
  %893 = vmatprep.subr.mxu0 %v84
  %894 = vmatpush1.msra.mxu0 %v83
  %895 = vmatprep.subr.mxu0 %v88
  %896 = vmatpush1.msra.mxu0 %v87
  %897 = vmatprep.subr.mxu0 %v92
  %898 = vmatpush1.msra.mxu0 %v91
  %899 = vmatprep.subr.mxu0 %v96
  %900 = vmatpush1.msra.mxu0 %v95
  %901 = vmatprep.subr.mxu0 %v100
  %902 = vmatpush1.msra.mxu0 %v99
  %903 = vmatprep.subr.mxu0 %v104
  %904 = vmatpush1.msra.mxu0 %v103
  %905 = vmatprep.subr.mxu0 %v108
  %906 = vmatpush1.msra.mxu0 %v107
  %907 = vmatprep.subr.mxu0 0.0
  %908 = vmatpush1.msra.mxu0 0.0
  %909 = vmatprep.subr.mxu0 0.0
  %910 = vmatpush1.msra.mxu0 0.0
  %911 = vmatprep.subr.mxu0 0.0
  %912 = vmatpush1.msra.mxu0 0.0
  %913 = vmatprep.subr.mxu0 0.0
  %914 = vmatpush1.msra.mxu0 0.0
  %915 = vmatprep.subr.mxu0 0.0
  %916 = vmatpush1.msra.mxu0 0.0
  %917 = vmatprep.subr.mxu0 0.0
  %918 = vmatpush1.msra.mxu0 0.0
  %919 = vmatprep.subr.mxu0 0.0
  %920 = vmatpush1.msra.mxu0 0.0
  %921 = vmatprep.subr.mxu0 0.0
  %922 = vmatpush1.msra.mxu0 0.0
  %923 = vmatprep.subr.mxu0 0.0
  %924 = vmatpush1.msra.mxu0 0.0
  %925 = vmatprep.subr.mxu0 0.0
  %926 = vmatpush1.msra.mxu0 0.0
  %927 = vmatprep.subr.mxu0 0.0
  %928 = vmatpush1.msra.mxu0 0.0
  %929 = vmatprep.subr.mxu0 0.0
  %930 = vmatpush1.msra.mxu0 0.0
  %931 = vmatprep.subr.mxu0 0.0
  %932 = vmatpush1.msra.mxu0 0.0
  %933 = vmatprep.subr.mxu0 0.0
  %934 = vmatpush1.msra.mxu0 0.0
  %935 = vmatprep.subr.mxu0 0.0
  %936 = vmatpush1.msra.mxu0 0.0
  %937 = vmatprep.subr.mxu0 0.0
  %938 = vmatpush1.msra.mxu0 0.0
  %939 = vmatprep.mubr.f32.mxu0 0.0
  %940 = vmatmul.mubr.f32.gmra.mrb[0].mxu0 %v865
  %v941 = vpop.f32.mrb[0].mxu0
  %v942 = vadd.f32 0.0, %v941
  %v943 = vpop.f32.mrb[0].mxu0
  %v944 = vadd.f32 0.0, %v943
  %945 = vdwg.mxu0
  %946 = vmatprep.subr.mxu0 %v50
  %947 = vmatpush1.msra.mxu0 %v49
  %948 = vmatprep.subr.mxu0 %v54
  %949 = vmatpush1.msra.mxu0 %v53
  %950 = vmatprep.subr.mxu0 %v58
  %951 = vmatpush1.msra.mxu0 %v57
  %952 = vmatprep.subr.mxu0 %v62
  %953 = vmatpush1.msra.mxu0 %v61
  %954 = vmatprep.subr.mxu0 %v66
  %955 = vmatpush1.msra.mxu0 %v65
  %956 = vmatprep.subr.mxu0 %v70
  %957 = vmatpush1.msra.mxu0 %v69
  %958 = vmatprep.subr.mxu0 %v74
  %959 = vmatpush1.msra.mxu0 %v73
  %960 = vmatprep.subr.mxu0 %v78
  %961 = vmatpush1.msra.mxu0 %v77
  %962 = vmatprep.subr.mxu0 %v82
  %963 = vmatpush1.msra.mxu0 %v81
  %964 = vmatprep.subr.mxu0 %v86
  %965 = vmatpush1.msra.mxu0 %v85
  %966 = vmatprep.subr.mxu0 %v90
  %967 = vmatpush1.msra.mxu0 %v89
  %968 = vmatprep.subr.mxu0 %v94
  %969 = vmatpush1.msra.mxu0 %v93
  %970 = vmatprep.subr.mxu0 %v98
  %971 = vmatpush1.msra.mxu0 %v97
  %972 = vmatprep.subr.mxu0 %v102
  %973 = vmatpush1.msra.mxu0 %v101
  %974 = vmatprep.subr.mxu0 %v106
  %975 = vmatpush1.msra.mxu0 %v105
  %976 = vmatprep.subr.mxu0 %v110
  %977 = vmatpush1.msra.mxu0 %v109
  %978 = vmatprep.subr.mxu0 0.0
  %979 = vmatpush1.msra.mxu0 0.0
  %980 = vmatprep.subr.mxu0 0.0
  %981 = vmatpush1.msra.mxu0 0.0
  %982 = vmatprep.subr.mxu0 0.0
  %983 = vmatpush1.msra.mxu0 0.0
  %984 = vmatprep.subr.mxu0 0.0
  %985 = vmatpush1.msra.mxu0 0.0
  %986 = vmatprep.subr.mxu0 0.0
  %987 = vmatpush1.msra.mxu0 0.0
  %988 = vmatprep.subr.mxu0 0.0
  %989 = vmatpush1.msra.mxu0 0.0
  %990 = vmatprep.subr.mxu0 0.0
  %991 = vmatpush1.msra.mxu0 0.0
  %992 = vmatprep.subr.mxu0 0.0
  %993 = vmatpush1.msra.mxu0 0.0
  %994 = vmatprep.subr.mxu0 0.0
  %995 = vmatpush1.msra.mxu0 0.0
  %996 = vmatprep.subr.mxu0 0.0
  %997 = vmatpush1.msra.mxu0 0.0
  %998 = vmatprep.subr.mxu0 0.0
  %999 = vmatpush1.msra.mxu0 0.0
  %1000 = vmatprep.subr.mxu0 0.0
  %1001 = vmatpush1.msra.mxu0 0.0
  %1002 = vmatprep.subr.mxu0 0.0
  %1003 = vmatpush1.msra.mxu0 0.0
  %1004 = vmatprep.subr.mxu0 0.0
  %1005 = vmatpush1.msra.mxu0 0.0
  %1006 = vmatprep.subr.mxu0 0.0
  %1007 = vmatpush1.msra.mxu0 0.0
  %1008 = vmatprep.subr.mxu0 0.0
  %1009 = vmatpush1.msra.mxu0 0.0
  %1010 = vmatprep.mubr.f32.mxu0 0.0
  %1011 = vmatmul.mubr.f32.gmra.mrb[0].mxu0 %v865
  %v1012 = vpop.f32.mrb[0].mxu0
  %v1013 = vadd.f32 0.0, %v1012
  %v1014 = vpop.f32.mrb[0].mxu0
  %v1015 = vadd.f32 0.0, %v1014
  %1016 = vdwg.mxu0
  %v1017 = vadd.f32 %v871, %v942
  %v1018 = vadd.f32 %v872, %v944
  %v1019 = vadd.f32 %v873, %v1013
  %v1020 = vadd.f32 %v874, %v1015
  %v1021 = vxor.u32 %v1017, 2147483648
  %v1022 = vmul.f32 %v1021, 1.442695
  %v1023 = vpow.pop %v1022
  %v1024 = vadd.f32 %v1023, 1.0
  %v1025 = vrcp.pop %v1024
  %v1026 = vmul.f32 1.0, %v1025
  %v1027 = vxor.u32 %v1018, 2147483648
  %v1028 = vmul.f32 %v1027, 1.442695
  %v1029 = vpow.pop %v1028
  %v1030 = vadd.f32 %v1029, 1.0
  %v1031 = vrcp.pop %v1030
  %v1032 = vmul.f32 1.0, %v1031
  %v1033 = vtanh.pop %v1019
  %v1034 = vxor.u32 %v1020, 2147483648
  %v1035 = vmul.f32 %v1034, 1.442695
  %v1036 = vpow.pop %v1035
  %v1037 = vadd.f32 %v1036, 1.0
  %v1038 = vrcp.pop %v1037
  %v1039 = vmul.f32 1.0, %v1038
  %v1040 = vmul.f32 %v1032, %v863
  %v1041 = vmul.f32 %v1026, %v1033
  %v1042 = vadd.f32 %v1040, %v1041
  %v1043 = vtanh.pop %v1042
  %v1044 = vmul.f32 %v1039, %v1043
  %s1045 = scalar_lea.vmem [#allocation3], 16
  %1046 = vst [vmem:[%s1045] sm:$0xff] %v1044
  %s1047 = smul.u32 3, 4
  %s1048 = smul.addr %s1047, 8
  %s1049 = scalar_lea.vmem [#allocation2], %s1048
  %v1050 = vld [vmem:[%s1049] sm:$0xff]
  %v1051 = vld [vmem:[%s1049 + $0x8] sm:$0xff]
  %v1052 = vld [vmem:[%s1049 + $0x10] sm:$0xff]
  %v1053 = vld [vmem:[%s1049 + $0x18] sm:$0xff]
  %1054 = vmatprep.subr.mxu0 %v48
  %1055 = vmatpush1.msra.mxu0 %v47
  %1056 = vmatprep.subr.mxu0 %v52
  %1057 = vmatpush1.msra.mxu0 %v51
  %1058 = vmatprep.subr.mxu0 %v56
  %1059 = vmatpush1.msra.mxu0 %v55
  %1060 = vmatprep.subr.mxu0 %v60
  %1061 = vmatpush1.msra.mxu0 %v59
  %1062 = vmatprep.subr.mxu0 %v64
  %1063 = vmatpush1.msra.mxu0 %v63
  %1064 = vmatprep.subr.mxu0 %v68
  %1065 = vmatpush1.msra.mxu0 %v67
  %1066 = vmatprep.subr.mxu0 %v72
  %1067 = vmatpush1.msra.mxu0 %v71
  %1068 = vmatprep.subr.mxu0 %v76
  %1069 = vmatpush1.msra.mxu0 %v75
  %1070 = vmatprep.subr.mxu0 %v80
  %1071 = vmatpush1.msra.mxu0 %v79
  %1072 = vmatprep.subr.mxu0 %v84
  %1073 = vmatpush1.msra.mxu0 %v83
  %1074 = vmatprep.subr.mxu0 %v88
  %1075 = vmatpush1.msra.mxu0 %v87
  %1076 = vmatprep.subr.mxu0 %v92
  %1077 = vmatpush1.msra.mxu0 %v91
  %1078 = vmatprep.subr.mxu0 %v96
  %1079 = vmatpush1.msra.mxu0 %v95
  %1080 = vmatprep.subr.mxu0 %v100
  %1081 = vmatpush1.msra.mxu0 %v99
  %1082 = vmatprep.subr.mxu0 %v104
  %1083 = vmatpush1.msra.mxu0 %v103
  %1084 = vmatprep.subr.mxu0 %v108
  %1085 = vmatpush1.msra.mxu0 %v107
  %1086 = vmatprep.subr.mxu0 0.0
  %1087 = vmatpush1.msra.mxu0 0.0
  %1088 = vmatprep.subr.mxu0 0.0
  %1089 = vmatpush1.msra.mxu0 0.0
  %1090 = vmatprep.subr.mxu0 0.0
  %1091 = vmatpush1.msra.mxu0 0.0
  %1092 = vmatprep.subr.mxu0 0.0
  %1093 = vmatpush1.msra.mxu0 0.0
  %1094 = vmatprep.subr.mxu0 0.0
  %1095 = vmatpush1.msra.mxu0 0.0
  %1096 = vmatprep.subr.mxu0 0.0
  %1097 = vmatpush1.msra.mxu0 0.0
  %1098 = vmatprep.subr.mxu0 0.0
  %1099 = vmatpush1.msra.mxu0 0.0
  %1100 = vmatprep.subr.mxu0 0.0
  %1101 = vmatpush1.msra.mxu0 0.0
  %1102 = vmatprep.subr.mxu0 0.0
  %1103 = vmatpush1.msra.mxu0 0.0
  %1104 = vmatprep.subr.mxu0 0.0
  %1105 = vmatpush1.msra.mxu0 0.0
  %1106 = vmatprep.subr.mxu0 0.0
  %1107 = vmatpush1.msra.mxu0 0.0
  %1108 = vmatprep.subr.mxu0 0.0
  %1109 = vmatpush1.msra.mxu0 0.0
  %1110 = vmatprep.subr.mxu0 0.0
  %1111 = vmatpush1.msra.mxu0 0.0
  %1112 = vmatprep.subr.mxu0 0.0
  %1113 = vmatpush1.msra.mxu0 0.0
  %1114 = vmatprep.subr.mxu0 0.0
  %1115 = vmatpush1.msra.mxu0 0.0
  %1116 = vmatprep.subr.mxu0 0.0
  %1117 = vmatpush1.msra.mxu0 0.0
  %1118 = vmatprep.mubr.f32.mxu0 0.0
  %1119 = vmatmul.mubr.f32.gmra.mrb[0].mxu0 %v1044
  %v1120 = vpop.f32.mrb[0].mxu0
  %v1121 = vadd.f32 0.0, %v1120
  %v1122 = vpop.f32.mrb[0].mxu0
  %v1123 = vadd.f32 0.0, %v1122
  %1124 = vdwg.mxu0
  %1125 = vmatprep.subr.mxu0 %v50
  %1126 = vmatpush1.msra.mxu0 %v49
  %1127 = vmatprep.subr.mxu0 %v54
  %1128 = vmatpush1.msra.mxu0 %v53
  %1129 = vmatprep.subr.mxu0 %v58
  %1130 = vmatpush1.msra.mxu0 %v57
  %1131 = vmatprep.subr.mxu0 %v62
  %1132 = vmatpush1.msra.mxu0 %v61
  %1133 = vmatprep.subr.mxu0 %v66
  %1134 = vmatpush1.msra.mxu0 %v65
  %1135 = vmatprep.subr.mxu0 %v70
  %1136 = vmatpush1.msra.mxu0 %v69
  %1137 = vmatprep.subr.mxu0 %v74
  %1138 = vmatpush1.msra.mxu0 %v73
  %1139 = vmatprep.subr.mxu0 %v78
  %1140 = vmatpush1.msra.mxu0 %v77
  %1141 = vmatprep.subr.mxu0 %v82
  %1142 = vmatpush1.msra.mxu0 %v81
  %1143 = vmatprep.subr.mxu0 %v86
  %1144 = vmatpush1.msra.mxu0 %v85
  %1145 = vmatprep.subr.mxu0 %v90
  %1146 = vmatpush1.msra.mxu0 %v89
  %1147 = vmatprep.subr.mxu0 %v94
  %1148 = vmatpush1.msra.mxu0 %v93
  %1149 = vmatprep.subr.mxu0 %v98
  %1150 = vmatpush1.msra.mxu0 %v97
  %1151 = vmatprep.subr.mxu0 %v102
  %1152 = vmatpush1.msra.mxu0 %v101
  %1153 = vmatprep.subr.mxu0 %v106
  %1154 = vmatpush1.msra.mxu0 %v105
  %1155 = vmatprep.subr.mxu0 %v110
  %1156 = vmatpush1.msra.mxu0 %v109
  %1157 = vmatprep.subr.mxu0 0.0
  %1158 = vmatpush1.msra.mxu0 0.0
  %1159 = vmatprep.subr.mxu0 0.0
  %1160 = vmatpush1.msra.mxu0 0.0
  %1161 = vmatprep.subr.mxu0 0.0
  %1162 = vmatpush1.msra.mxu0 0.0
  %1163 = vmatprep.subr.mxu0 0.0
  %1164 = vmatpush1.msra.mxu0 0.0
  %1165 = vmatprep.subr.mxu0 0.0
  %1166 = vmatpush1.msra.mxu0 0.0
  %1167 = vmatprep.subr.mxu0 0.0
  %1168 = vmatpush1.msra.mxu0 0.0
  %1169 = vmatprep.subr.mxu0 0.0
  %1170 = vmatpush1.msra.mxu0 0.0
  %1171 = vmatprep.subr.mxu0 0.0
  %1172 = vmatpush1.msra.mxu0 0.0
  %1173 = vmatprep.subr.mxu0 0.0
  %1174 = vmatpush1.msra.mxu0 0.0
  %1175 = vmatprep.subr.mxu0 0.0
  %1176 = vmatpush1.msra.mxu0 0.0
  %1177 = vmatprep.subr.mxu0 0.0
  %1178 = vmatpush1.msra.mxu0 0.0
  %1179 = vmatprep.subr.mxu0 0.0
  %1180 = vmatpush1.msra.mxu0 0.0
  %1181 = vmatprep.subr.mxu0 0.0
  %1182 = vmatpush1.msra.mxu0 0.0
  %1183 = vmatprep.subr.mxu0 0.0
  %1184 = vmatpush1.msra.mxu0 0.0
  %1185 = vmatprep.subr.mxu0 0.0
  %1186 = vmatpush1.msra.mxu0 0.0
  %1187 = vmatprep.subr.mxu0 0.0
  %1188 = vmatpush1.msra.mxu0 0.0
  %1189 = vmatprep.mubr.f32.mxu0 0.0
  %1190 = vmatmul.mubr.f32.gmra.mrb[0].mxu0 %v1044
  %v1191 = vpop.f32.mrb[0].mxu0
  %v1192 = vadd.f32 0.0, %v1191
  %v1193 = vpop.f32.mrb[0].mxu0
  %v1194 = vadd.f32 0.0, %v1193
  %1195 = vdwg.mxu0
  %v1196 = vadd.f32 %v1050, %v1121
  %v1197 = vadd.f32 %v1051, %v1123
  %v1198 = vadd.f32 %v1052, %v1192
  %v1199 = vadd.f32 %v1053, %v1194
  %v1200 = vxor.u32 %v1196, 2147483648
  %v1201 = vmul.f32 %v1200, 1.442695
  %v1202 = vpow.pop %v1201
  %v1203 = vadd.f32 %v1202, 1.0
  %v1204 = vrcp.pop %v1203
  %v1205 = vmul.f32 1.0, %v1204
  %v1206 = vxor.u32 %v1197, 2147483648
  %v1207 = vmul.f32 %v1206, 1.442695
  %v1208 = vpow.pop %v1207
  %v1209 = vadd.f32 %v1208, 1.0
  %v1210 = vrcp.pop %v1209
  %v1211 = vmul.f32 1.0, %v1210
  %v1212 = vtanh.pop %v1198
  %v1213 = vxor.u32 %v1199, 2147483648
  %v1214 = vmul.f32 %v1213, 1.442695
  %v1215 = vpow.pop %v1214
  %v1216 = vadd.f32 %v1215, 1.0
  %v1217 = vrcp.pop %v1216
  %v1218 = vmul.f32 1.0, %v1217
  %v1219 = vmul.f32 %v1211, %v1042
  %v1220 = vmul.f32 %v1205, %v1212
  %v1221 = vadd.f32 %v1219, %v1220
  %v1222 = vtanh.pop %v1221
  %v1223 = vmul.f32 %v1218, %v1222
  %s1224 = scalar_lea.vmem [#allocation3], 24
  %1225 = vst [vmem:[%s1224] sm:$0xff] %v1223
  %s1226 = smul.u32 4, 4
  %s1227 = smul.addr %s1226, 8
  %s1228 = scalar_lea.vmem [#allocation2], %s1227
  %v1229 = vld [vmem:[%s1228] sm:$0xff]
  %v1230 = vld [vmem:[%s1228 + $0x8] sm:$0xff]
  %v1231 = vld [vmem:[%s1228 + $0x10] sm:$0xff]
  %v1232 = vld [vmem:[%s1228 + $0x18] sm:$0xff]
  %1233 = vmatprep.subr.mxu0 %v48
  %1234 = vmatpush1.msra.mxu0 %v47
  %1235 = vmatprep.subr.mxu0 %v52
  %1236 = vmatpush1.msra.mxu0 %v51
  %1237 = vmatprep.subr.mxu0 %v56
  %1238 = vmatpush1.msra.mxu0 %v55
  %1239 = vmatprep.subr.mxu0 %v60
  %1240 = vmatpush1.msra.mxu0 %v59
  %1241 = vmatprep.subr.mxu0 %v64
  %1242 = vmatpush1.msra.mxu0 %v63
  %1243 = vmatprep.subr.mxu0 %v68
  %1244 = vmatpush1.msra.mxu0 %v67
  %1245 = vmatprep.subr.mxu0 %v72
  %1246 = vmatpush1.msra.mxu0 %v71
  %1247 = vmatprep.subr.mxu0 %v76
  %1248 = vmatpush1.msra.mxu0 %v75
  %1249 = vmatprep.subr.mxu0 %v80
  %1250 = vmatpush1.msra.mxu0 %v79
  %1251 = vmatprep.subr.mxu0 %v84
  %1252 = vmatpush1.msra.mxu0 %v83
  %1253 = vmatprep.subr.mxu0 %v88
  %1254 = vmatpush1.msra.mxu0 %v87
  %1255 = vmatprep.subr.mxu0 %v92
  %1256 = vmatpush1.msra.mxu0 %v91
  %1257 = vmatprep.subr.mxu0 %v96
  %1258 = vmatpush1.msra.mxu0 %v95
  %1259 = vmatprep.subr.mxu0 %v100
  %1260 = vmatpush1.msra.mxu0 %v99
  %1261 = vmatprep.subr.mxu0 %v104
  %1262 = vmatpush1.msra.mxu0 %v103
  %1263 = vmatprep.subr.mxu0 %v108
  %1264 = vmatpush1.msra.mxu0 %v107
  %1265 = vmatprep.subr.mxu0 0.0
  %1266 = vmatpush1.msra.mxu0 0.0
  %1267 = vmatprep.subr.mxu0 0.0
  %1268 = vmatpush1.msra.mxu0 0.0
  %1269 = vmatprep.subr.mxu0 0.0
  %1270 = vmatpush1.msra.mxu0 0.0
  %1271 = vmatprep.subr.mxu0 0.0
  %1272 = vmatpush1.msra.mxu0 0.0
  %1273 = vmatprep.subr.mxu0 0.0
  %1274 = vmatpush1.msra.mxu0 0.0
  %1275 = vmatprep.subr.mxu0 0.0
  %1276 = vmatpush1.msra.mxu0 0.0
  %1277 = vmatprep.subr.mxu0 0.0
  %1278 = vmatpush1.msra.mxu0 0.0
  %1279 = vmatprep.subr.mxu0 0.0
  %1280 = vmatpush1.msra.mxu0 0.0
  %1281 = vmatprep.subr.mxu0 0.0
  %1282 = vmatpush1.msra.mxu0 0.0
  %1283 = vmatprep.subr.mxu0 0.0
  %1284 = vmatpush1.msra.mxu0 0.0
  %1285 = vmatprep.subr.mxu0 0.0
  %1286 = vmatpush1.msra.mxu0 0.0
  %1287 = vmatprep.subr.mxu0 0.0
  %1288 = vmatpush1.msra.mxu0 0.0
  %1289 = vmatprep.subr.mxu0 0.0
  %1290 = vmatpush1.msra.mxu0 0.0
  %1291 = vmatprep.subr.mxu0 0.0
  %1292 = vmatpush1.msra.mxu0 0.0
  %1293 = vmatprep.subr.mxu0 0.0
  %1294 = vmatpush1.msra.mxu0 0.0
  %1295 = vmatprep.subr.mxu0 0.0
  %1296 = vmatpush1.msra.mxu0 0.0
  %1297 = vmatprep.mubr.f32.mxu0 0.0
  %1298 = vmatmul.mubr.f32.gmra.mrb[0].mxu0 %v1223
  %v1299 = vpop.f32.mrb[0].mxu0
  %v1300 = vadd.f32 0.0, %v1299
  %v1301 = vpop.f32.mrb[0].mxu0
  %v1302 = vadd.f32 0.0, %v1301
  %1303 = vdwg.mxu0
  %1304 = vmatprep.subr.mxu0 %v50
  %1305 = vmatpush1.msra.mxu0 %v49
  %1306 = vmatprep.subr.mxu0 %v54
  %1307 = vmatpush1.msra.mxu0 %v53
  %1308 = vmatprep.subr.mxu0 %v58
  %1309 = vmatpush1.msra.mxu0 %v57
  %1310 = vmatprep.subr.mxu0 %v62
  %1311 = vmatpush1.msra.mxu0 %v61
  %1312 = vmatprep.subr.mxu0 %v66
  %1313 = vmatpush1.msra.mxu0 %v65
  %1314 = vmatprep.subr.mxu0 %v70
  %1315 = vmatpush1.msra.mxu0 %v69
  %1316 = vmatprep.subr.mxu0 %v74
  %1317 = vmatpush1.msra.mxu0 %v73
  %1318 = vmatprep.subr.mxu0 %v78
  %1319 = vmatpush1.msra.mxu0 %v77
  %1320 = vmatprep.subr.mxu0 %v82
  %1321 = vmatpush1.msra.mxu0 %v81
  %1322 = vmatprep.subr.mxu0 %v86
  %1323 = vmatpush1.msra.mxu0 %v85
  %1324 = vmatprep.subr.mxu0 %v90
  %1325 = vmatpush1.msra.mxu0 %v89
  %1326 = vmatprep.subr.mxu0 %v94
  %1327 = vmatpush1.msra.mxu0 %v93
  %1328 = vmatprep.subr.mxu0 %v98
  %1329 = vmatpush1.msra.mxu0 %v97
  %1330 = vmatprep.subr.mxu0 %v102
  %1331 = vmatpush1.msra.mxu0 %v101
  %1332 = vmatprep.subr.mxu0 %v106
  %1333 = vmatpush1.msra.mxu0 %v105
  %1334 = vmatprep.subr.mxu0 %v110
  %1335 = vmatpush1.msra.mxu0 %v109
  %1336 = vmatprep.subr.mxu0 0.0
  %1337 = vmatpush1.msra.mxu0 0.0
  %1338 = vmatprep.subr.mxu0 0.0
  %1339 = vmatpush1.msra.mxu0 0.0
  %1340 = vmatprep.subr.mxu0 0.0
  %1341 = vmatpush1.msra.mxu0 0.0
  %1342 = vmatprep.subr.mxu0 0.0
  %1343 = vmatpush1.msra.mxu0 0.0
  %1344 = vmatprep.subr.mxu0 0.0
  %1345 = vmatpush1.msra.mxu0 0.0
  %1346 = vmatprep.subr.mxu0 0.0
  %1347 = vmatpush1.msra.mxu0 0.0
  %1348 = vmatprep.subr.mxu0 0.0
  %1349 = vmatpush1.msra.mxu0 0.0
  %1350 = vmatprep.subr.mxu0 0.0
  %1351 = vmatpush1.msra.mxu0 0.0
  %1352 = vmatprep.subr.mxu0 0.0
  %1353 = vmatpush1.msra.mxu0 0.0
  %1354 = vmatprep.subr.mxu0 0.0
  %1355 = vmatpush1.msra.mxu0 0.0
  %1356 = vmatprep.subr.mxu0 0.0
  %1357 = vmatpush1.msra.mxu0 0.0
  %1358 = vmatprep.subr.mxu0 0.0
  %1359 = vmatpush1.msra.mxu0 0.0
  %1360 = vmatprep.subr.mxu0 0.0
  %1361 = vmatpush1.msra.mxu0 0.0
  %1362 = vmatprep.subr.mxu0 0.0
  %1363 = vmatpush1.msra.mxu0 0.0
  %1364 = vmatprep.subr.mxu0 0.0
  %1365 = vmatpush1.msra.mxu0 0.0
  %1366 = vmatprep.subr.mxu0 0.0
  %1367 = vmatpush1.msra.mxu0 0.0
  %1368 = vmatprep.mubr.f32.mxu0 0.0
  %1369 = vmatmul.mubr.f32.gmra.mrb[0].mxu0 %v1223
  %v1370 = vpop.f32.mrb[0].mxu0
  %v1371 = vadd.f32 0.0, %v1370
  %v1372 = vpop.f32.mrb[0].mxu0
  %v1373 = vadd.f32 0.0, %v1372
  %1374 = vdwg.mxu0
  %v1375 = vadd.f32 %v1229, %v1300
  %v1376 = vadd.f32 %v1230, %v1302
  %v1377 = vadd.f32 %v1231, %v1371
  %v1378 = vadd.f32 %v1232, %v1373
  %v1379 = vxor.u32 %v1375, 2147483648
  %v1380 = vmul.f32 %v1379, 1.442695
  %v1381 = vpow.pop %v1380
  %v1382 = vadd.f32 %v1381, 1.0
  %v1383 = vrcp.pop %v1382
  %v1384 = vmul.f32 1.0, %v1383
  %v1385 = vxor.u32 %v1376, 2147483648
  %v1386 = vmul.f32 %v1385, 1.442695
  %v1387 = vpow.pop %v1386
  %v1388 = vadd.f32 %v1387, 1.0
  %v1389 = vrcp.pop %v1388
  %v1390 = vmul.f32 1.0, %v1389
  %v1391 = vtanh.pop %v1377
  %v1392 = vxor.u32 %v1378, 2147483648
  %v1393 = vmul.f32 %v1392, 1.442695
  %v1394 = vpow.pop %v1393
  %v1395 = vadd.f32 %v1394, 1.0
  %v1396 = vrcp.pop %v1395
  %v1397 = vmul.f32 1.0, %v1396
  %v1398 = vmul.f32 %v1390, %v1221
  %v1399 = vmul.f32 %v1384, %v1391
  %v1400 = vadd.f32 %v1398, %v1399
  %v1401 = vtanh.pop %v1400
  %v1402 = vmul.f32 %v1397, %v1401
  %s1403 = scalar_lea.vmem [#allocation3], 32
  %1404 = vst [vmem:[%s1403] sm:$0xff] %v1402
  %s1405 = smul.u32 5, 4
  %s1406 = smul.addr %s1405, 8
  %s1407 = scalar_lea.vmem [#allocation2], %s1406
  %v1408 = vld [vmem:[%s1407] sm:$0xff]
  %v1409 = vld [vmem:[%s1407 + $0x8] sm:$0xff]
  %v1410 = vld [vmem:[%s1407 + $0x10] sm:$0xff]
  %v1411 = vld [vmem:[%s1407 + $0x18] sm:$0xff]
  %1412 = vmatprep.subr.mxu0 %v48
  %1413 = vmatpush1.msra.mxu0 %v47
  %1414 = vmatprep.subr.mxu0 %v52
  %1415 = vmatpush1.msra.mxu0 %v51
  %1416 = vmatprep.subr.mxu0 %v56
  %1417 = vmatpush1.msra.mxu0 %v55
  %1418 = vmatprep.subr.mxu0 %v60
  %1419 = vmatpush1.msra.mxu0 %v59
  %1420 = vmatprep.subr.mxu0 %v64
  %1421 = vmatpush1.msra.mxu0 %v63
  %1422 = vmatprep.subr.mxu0 %v68
  %1423 = vmatpush1.msra.mxu0 %v67
  %1424 = vmatprep.subr.mxu0 %v72
  %1425 = vmatpush1.msra.mxu0 %v71
  %1426 = vmatprep.subr.mxu0 %v76
  %1427 = vmatpush1.msra.mxu0 %v75
  %1428 = vmatprep.subr.mxu0 %v80
  %1429 = vmatpush1.msra.mxu0 %v79
  %1430 = vmatprep.subr.mxu0 %v84
  %1431 = vmatpush1.msra.mxu0 %v83
  %1432 = vmatprep.subr.mxu0 %v88
  %1433 = vmatpush1.msra.mxu0 %v87
  %1434 = vmatprep.subr.mxu0 %v92
  %1435 = vmatpush1.msra.mxu0 %v91
  %1436 = vmatprep.subr.mxu0 %v96
  %1437 = vmatpush1.msra.mxu0 %v95
  %1438 = vmatprep.subr.mxu0 %v100
  %1439 = vmatpush1.msra.mxu0 %v99
  %1440 = vmatprep.subr.mxu0 %v104
  %1441 = vmatpush1.msra.mxu0 %v103
  %1442 = vmatprep.subr.mxu0 %v108
  %1443 = vmatpush1.msra.mxu0 %v107
  %1444 = vmatprep.subr.mxu0 0.0
  %1445 = vmatpush1.msra.mxu0 0.0
  %1446 = vmatprep.subr.mxu0 0.0
  %1447 = vmatpush1.msra.mxu0 0.0
  %1448 = vmatprep.subr.mxu0 0.0
  %1449 = vmatpush1.msra.mxu0 0.0
  %1450 = vmatprep.subr.mxu0 0.0
  %1451 = vmatpush1.msra.mxu0 0.0
  %1452 = vmatprep.subr.mxu0 0.0
  %1453 = vmatpush1.msra.mxu0 0.0
  %1454 = vmatprep.subr.mxu0 0.0
  %1455 = vmatpush1.msra.mxu0 0.0
  %1456 = vmatprep.subr.mxu0 0.0
  %1457 = vmatpush1.msra.mxu0 0.0
  %1458 = vmatprep.subr.mxu0 0.0
  %1459 = vmatpush1.msra.mxu0 0.0
  %1460 = vmatprep.subr.mxu0 0.0
  %1461 = vmatpush1.msra.mxu0 0.0
  %1462 = vmatprep.subr.mxu0 0.0
  %1463 = vmatpush1.msra.mxu0 0.0
  %1464 = vmatprep.subr.mxu0 0.0
  %1465 = vmatpush1.msra.mxu0 0.0
  %1466 = vmatprep.subr.mxu0 0.0
  %1467 = vmatpush1.msra.mxu0 0.0
  %1468 = vmatprep.subr.mxu0 0.0
  %1469 = vmatpush1.msra.mxu0 0.0
  %1470 = vmatprep.subr.mxu0 0.0
  %1471 = vmatpush1.msra.mxu0 0.0
  %1472 = vmatprep.subr.mxu0 0.0
  %1473 = vmatpush1.msra.mxu0 0.0
  %1474 = vmatprep.subr.mxu0 0.0
  %1475 = vmatpush1.msra.mxu0 0.0
  %1476 = vmatprep.mubr.f32.mxu0 0.0
  %1477 = vmatmul.mubr.f32.gmra.mrb[0].mxu0 %v1402
  %v1478 = vpop.f32.mrb[0].mxu0
  %v1479 = vadd.f32 0.0, %v1478
  %v1480 = vpop.f32.mrb[0].mxu0
  %v1481 = vadd.f32 0.0, %v1480
  %1482 = vdwg.mxu0
  %1483 = vmatprep.subr.mxu0 %v50
  %1484 = vmatpush1.msra.mxu0 %v49
  %1485 = vmatprep.subr.mxu0 %v54
  %1486 = vmatpush1.msra.mxu0 %v53
  %1487 = vmatprep.subr.mxu0 %v58
  %1488 = vmatpush1.msra.mxu0 %v57
  %1489 = vmatprep.subr.mxu0 %v62
  %1490 = vmatpush1.msra.mxu0 %v61
  %1491 = vmatprep.subr.mxu0 %v66
  %1492 = vmatpush1.msra.mxu0 %v65
  %1493 = vmatprep.subr.mxu0 %v70
  %1494 = vmatpush1.msra.mxu0 %v69
  %1495 = vmatprep.subr.mxu0 %v74
  %1496 = vmatpush1.msra.mxu0 %v73
  %1497 = vmatprep.subr.mxu0 %v78
  %1498 = vmatpush1.msra.mxu0 %v77
  %1499 = vmatprep.subr.mxu0 %v82
  %1500 = vmatpush1.msra.mxu0 %v81
  %1501 = vmatprep.subr.mxu0 %v86
  %1502 = vmatpush1.msra.mxu0 %v85
  %1503 = vmatprep.subr.mxu0 %v90
  %1504 = vmatpush1.msra.mxu0 %v89
  %1505 = vmatprep.subr.mxu0 %v94
  %1506 = vmatpush1.msra.mxu0 %v93
  %1507 = vmatprep.subr.mxu0 %v98
  %1508 = vmatpush1.msra.mxu0 %v97
  %1509 = vmatprep.subr.mxu0 %v102
  %1510 = vmatpush1.msra.mxu0 %v101
  %1511 = vmatprep.subr.mxu0 %v106
  %1512 = vmatpush1.msra.mxu0 %v105
  %1513 = vmatprep.subr.mxu0 %v110
  %1514 = vmatpush1.msra.mxu0 %v109
  %1515 = vmatprep.subr.mxu0 0.0
  %1516 = vmatpush1.msra.mxu0 0.0
  %1517 = vmatprep.subr.mxu0 0.0
  %1518 = vmatpush1.msra.mxu0 0.0
  %1519 = vmatprep.subr.mxu0 0.0
  %1520 = vmatpush1.msra.mxu0 0.0
  %1521 = vmatprep.subr.mxu0 0.0
  %1522 = vmatpush1.msra.mxu0 0.0
  %1523 = vmatprep.subr.mxu0 0.0
  %1524 = vmatpush1.msra.mxu0 0.0
  %1525 = vmatprep.subr.mxu0 0.0
  %1526 = vmatpush1.msra.mxu0 0.0
  %1527 = vmatprep.subr.mxu0 0.0
  %1528 = vmatpush1.msra.mxu0 0.0
  %1529 = vmatprep.subr.mxu0 0.0
  %1530 = vmatpush1.msra.mxu0 0.0
  %1531 = vmatprep.subr.mxu0 0.0
  %1532 = vmatpush1.msra.mxu0 0.0
  %1533 = vmatprep.subr.mxu0 0.0
  %1534 = vmatpush1.msra.mxu0 0.0
  %1535 = vmatprep.subr.mxu0 0.0
  %1536 = vmatpush1.msra.mxu0 0.0
  %1537 = vmatprep.subr.mxu0 0.0
  %1538 = vmatpush1.msra.mxu0 0.0
  %1539 = vmatprep.subr.mxu0 0.0
  %1540 = vmatpush1.msra.mxu0 0.0
  %1541 = vmatprep.subr.mxu0 0.0
  %1542 = vmatpush1.msra.mxu0 0.0
  %1543 = vmatprep.subr.mxu0 0.0
  %1544 = vmatpush1.msra.mxu0 0.0
  %1545 = vmatprep.subr.mxu0 0.0
  %1546 = vmatpush1.msra.mxu0 0.0
  %1547 = vmatprep.mubr.f32.mxu0 0.0
  %1548 = vmatmul.mubr.f32.gmra.mrb[0].mxu0 %v1402
  %v1549 = vpop.f32.mrb[0].mxu0
  %v1550 = vadd.f32 0.0, %v1549
  %v1551 = vpop.f32.mrb[0].mxu0
  %v1552 = vadd.f32 0.0, %v1551
  %1553 = vdwg.mxu0
  %v1554 = vadd.f32 %v1408, %v1479
  %v1555 = vadd.f32 %v1409, %v1481
  %v1556 = vadd.f32 %v1410, %v1550
  %v1557 = vadd.f32 %v1411, %v1552
  %v1558 = vxor.u32 %v1554, 2147483648
  %v1559 = vmul.f32 %v1558, 1.442695
  %v1560 = vpow.pop %v1559
  %v1561 = vadd.f32 %v1560, 1.0
  %v1562 = vrcp.pop %v1561
  %v1563 = vmul.f32 1.0, %v1562
  %v1564 = vxor.u32 %v1555, 2147483648
  %v1565 = vmul.f32 %v1564, 1.442695
  %v1566 = vpow.pop %v1565
  %v1567 = vadd.f32 %v1566, 1.0
  %v1568 = vrcp.pop %v1567
  %v1569 = vmul.f32 1.0, %v1568
  %v1570 = vtanh.pop %v1556
  %v1571 = vxor.u32 %v1557, 2147483648
  %v1572 = vmul.f32 %v1571, 1.442695
  %v1573 = vpow.pop %v1572
  %v1574 = vadd.f32 %v1573, 1.0
  %v1575 = vrcp.pop %v1574
  %v1576 = vmul.f32 1.0, %v1575
  %v1577 = vmul.f32 %v1569, %v1400
  %v1578 = vmul.f32 %v1563, %v1570
  %v1579 = vadd.f32 %v1577, %v1578
  %v1580 = vtanh.pop %v1579
  %v1581 = vmul.f32 %v1576, %v1580
  %s1582 = scalar_lea.vmem [#allocation3], 40
  %1583 = vst [vmem:[%s1582] sm:$0xff] %v1581
  %s1584 = smul.u32 6, 4
  %s1585 = smul.addr %s1584, 8
  %s1586 = scalar_lea.vmem [#allocation2], %s1585
  %v1587 = vld [vmem:[%s1586] sm:$0xff]
  %v1588 = vld [vmem:[%s1586 + $0x8] sm:$0xff]
  %v1589 = vld [vmem:[%s1586 + $0x10] sm:$0xff]
  %v1590 = vld [vmem:[%s1586 + $0x18] sm:$0xff]
  %1591 = vmatprep.subr.mxu0 %v48
  %1592 = vmatpush1.msra.mxu0 %v47
  %1593 = vmatprep.subr.mxu0 %v52
  %1594 = vmatpush1.msra.mxu0 %v51
  %1595 = vmatprep.subr.mxu0 %v56
  %1596 = vmatpush1.msra.mxu0 %v55
  %1597 = vmatprep.subr.mxu0 %v60
  %1598 = vmatpush1.msra.mxu0 %v59
  %1599 = vmatprep.subr.mxu0 %v64
  %1600 = vmatpush1.msra.mxu0 %v63
  %1601 = vmatprep.subr.mxu0 %v68
  %1602 = vmatpush1.msra.mxu0 %v67
  %1603 = vmatprep.subr.mxu0 %v72
  %1604 = vmatpush1.msra.mxu0 %v71
  %1605 = vmatprep.subr.mxu0 %v76
  %1606 = vmatpush1.msra.mxu0 %v75
  %1607 = vmatprep.subr.mxu0 %v80
  %1608 = vmatpush1.msra.mxu0 %v79
  %1609 = vmatprep.subr.mxu0 %v84
  %1610 = vmatpush1.msra.mxu0 %v83
  %1611 = vmatprep.subr.mxu0 %v88
  %1612 = vmatpush1.msra.mxu0 %v87
  %1613 = vmatprep.subr.mxu0 %v92
  %1614 = vmatpush1.msra.mxu0 %v91
  %1615 = vmatprep.subr.mxu0 %v96
  %1616 = vmatpush1.msra.mxu0 %v95
  %1617 = vmatprep.subr.mxu0 %v100
  %1618 = vmatpush1.msra.mxu0 %v99
  %1619 = vmatprep.subr.mxu0 %v104
  %1620 = vmatpush1.msra.mxu0 %v103
  %1621 = vmatprep.subr.mxu0 %v108
  %1622 = vmatpush1.msra.mxu0 %v107
  %1623 = vmatprep.subr.mxu0 0.0
  %1624 = vmatpush1.msra.mxu0 0.0
  %1625 = vmatprep.subr.mxu0 0.0
  %1626 = vmatpush1.msra.mxu0 0.0
  %1627 = vmatprep.subr.mxu0 0.0
  %1628 = vmatpush1.msra.mxu0 0.0
  %1629 = vmatprep.subr.mxu0 0.0
  %1630 = vmatpush1.msra.mxu0 0.0
  %1631 = vmatprep.subr.mxu0 0.0
  %1632 = vmatpush1.msra.mxu0 0.0
  %1633 = vmatprep.subr.mxu0 0.0
  %1634 = vmatpush1.msra.mxu0 0.0
  %1635 = vmatprep.subr.mxu0 0.0
  %1636 = vmatpush1.msra.mxu0 0.0
  %1637 = vmatprep.subr.mxu0 0.0
  %1638 = vmatpush1.msra.mxu0 0.0
  %1639 = vmatprep.subr.mxu0 0.0
  %1640 = vmatpush1.msra.mxu0 0.0
  %1641 = vmatprep.subr.mxu0 0.0
  %1642 = vmatpush1.msra.mxu0 0.0
  %1643 = vmatprep.subr.mxu0 0.0
  %1644 = vmatpush1.msra.mxu0 0.0
  %1645 = vmatprep.subr.mxu0 0.0
  %1646 = vmatpush1.msra.mxu0 0.0
  %1647 = vmatprep.subr.mxu0 0.0
  %1648 = vmatpush1.msra.mxu0 0.0
  %1649 = vmatprep.subr.mxu0 0.0
  %1650 = vmatpush1.msra.mxu0 0.0
  %1651 = vmatprep.subr.mxu0 0.0
  %1652 = vmatpush1.msra.mxu0 0.0
  %1653 = vmatprep.subr.mxu0 0.0
  %1654 = vmatpush1.msra.mxu0 0.0
  %1655 = vmatprep.mubr.f32.mxu0 0.0
  %1656 = vmatmul.mubr.f32.gmra.mrb[0].mxu0 %v1581
  %v1657 = vpop.f32.mrb[0].mxu0
  %v1658 = vadd.f32 0.0, %v1657
  %v1659 = vpop.f32.mrb[0].mxu0
  %v1660 = vadd.f32 0.0, %v1659
  %1661 = vdwg.mxu0
  %1662 = vmatprep.subr.mxu0 %v50
  %1663 = vmatpush1.msra.mxu0 %v49
  %1664 = vmatprep.subr.mxu0 %v54
  %1665 = vmatpush1.msra.mxu0 %v53
  %1666 = vmatprep.subr.mxu0 %v58
  %1667 = vmatpush1.msra.mxu0 %v57
  %1668 = vmatprep.subr.mxu0 %v62
  %1669 = vmatpush1.msra.mxu0 %v61
  %1670 = vmatprep.subr.mxu0 %v66
  %1671 = vmatpush1.msra.mxu0 %v65
  %1672 = vmatprep.subr.mxu0 %v70
  %1673 = vmatpush1.msra.mxu0 %v69
  %1674 = vmatprep.subr.mxu0 %v74
  %1675 = vmatpush1.msra.mxu0 %v73
  %1676 = vmatprep.subr.mxu0 %v78
  %1677 = vmatpush1.msra.mxu0 %v77
  %1678 = vmatprep.subr.mxu0 %v82
  %1679 = vmatpush1.msra.mxu0 %v81
  %1680 = vmatprep.subr.mxu0 %v86
  %1681 = vmatpush1.msra.mxu0 %v85
  %1682 = vmatprep.subr.mxu0 %v90
  %1683 = vmatpush1.msra.mxu0 %v89
  %1684 = vmatprep.subr.mxu0 %v94
  %1685 = vmatpush1.msra.mxu0 %v93
  %1686 = vmatprep.subr.mxu0 %v98
  %1687 = vmatpush1.msra.mxu0 %v97
  %1688 = vmatprep.subr.mxu0 %v102
  %1689 = vmatpush1.msra.mxu0 %v101
  %1690 = vmatprep.subr.mxu0 %v106
  %1691 = vmatpush1.msra.mxu0 %v105
  %1692 = vmatprep.subr.mxu0 %v110
  %1693 = vmatpush1.msra.mxu0 %v109
  %1694 = vmatprep.subr.mxu0 0.0
  %1695 = vmatpush1.msra.mxu0 0.0
  %1696 = vmatprep.subr.mxu0 0.0
  %1697 = vmatpush1.msra.mxu0 0.0
  %1698 = vmatprep.subr.mxu0 0.0
  %1699 = vmatpush1.msra.mxu0 0.0
  %1700 = vmatprep.subr.mxu0 0.0
  %1701 = vmatpush1.msra.mxu0 0.0
  %1702 = vmatprep.subr.mxu0 0.0
  %1703 = vmatpush1.msra.mxu0 0.0
  %1704 = vmatprep.subr.mxu0 0.0
  %1705 = vmatpush1.msra.mxu0 0.0
  %1706 = vmatprep.subr.mxu0 0.0
  %1707 = vmatpush1.msra.mxu0 0.0
  %1708 = vmatprep.subr.mxu0 0.0
  %1709 = vmatpush1.msra.mxu0 0.0
  %1710 = vmatprep.subr.mxu0 0.0
  %1711 = vmatpush1.msra.mxu0 0.0
  %1712 = vmatprep.subr.mxu0 0.0
  %1713 = vmatpush1.msra.mxu0 0.0
  %1714 = vmatprep.subr.mxu0 0.0
  %1715 = vmatpush1.msra.mxu0 0.0
  %1716 = vmatprep.subr.mxu0 0.0
  %1717 = vmatpush1.msra.mxu0 0.0
  %1718 = vmatprep.subr.mxu0 0.0
  %1719 = vmatpush1.msra.mxu0 0.0
  %1720 = vmatprep.subr.mxu0 0.0
  %1721 = vmatpush1.msra.mxu0 0.0
  %1722 = vmatprep.subr.mxu0 0.0
  %1723 = vmatpush1.msra.mxu0 0.0
  %1724 = vmatprep.subr.mxu0 0.0
  %1725 = vmatpush1.msra.mxu0 0.0
  %1726 = vmatprep.mubr.f32.mxu0 0.0
  %1727 = vmatmul.mubr.f32.gmra.mrb[0].mxu0 %v1581
  %v1728 = vpop.f32.mrb[0].mxu0
  %v1729 = vadd.f32 0.0, %v1728
  %v1730 = vpop.f32.mrb[0].mxu0
  %v1731 = vadd.f32 0.0, %v1730
  %1732 = vdwg.mxu0
  %v1733 = vadd.f32 %v1587, %v1658
  %v1734 = vadd.f32 %v1588, %v1660
  %v1735 = vadd.f32 %v1589, %v1729
  %v1736 = vadd.f32 %v1590, %v1731
  %v1737 = vxor.u32 %v1733, 2147483648
  %v1738 = vmul.f32 %v1737, 1.442695
  %v1739 = vpow.pop %v1738
  %v1740 = vadd.f32 %v1739, 1.0
  %v1741 = vrcp.pop %v1740
  %v1742 = vmul.f32 1.0, %v1741
  %v1743 = vxor.u32 %v1734, 2147483648
  %v1744 = vmul.f32 %v1743, 1.442695
  %v1745 = vpow.pop %v1744
  %v1746 = vadd.f32 %v1745, 1.0
  %v1747 = vrcp.pop %v1746
  %v1748 = vmul.f32 1.0, %v1747
  %v1749 = vtanh.pop %v1735
  %v1750 = vxor.u32 %v1736, 2147483648
  %v1751 = vmul.f32 %v1750, 1.442695
  %v1752 = vpow.pop %v1751
  %v1753 = vadd.f32 %v1752, 1.0
  %v1754 = vrcp.pop %v1753
  %v1755 = vmul.f32 1.0, %v1754
  %v1756 = vmul.f32 %v1748, %v1579
  %v1757 = vmul.f32 %v1742, %v1749
  %v1758 = vadd.f32 %v1756, %v1757
  %v1759 = vtanh.pop %v1758
  %v1760 = vmul.f32 %v1755, %v1759
  %s1761 = scalar_lea.vmem [#allocation3], 48
  %1762 = vst [vmem:[%s1761] sm:$0xff] %v1760
  %s1763 = smul.u32 7, 4
  %s1764 = smul.addr %s1763, 8
  %s1765 = scalar_lea.vmem [#allocation2], %s1764
  %v1766 = vld [vmem:[%s1765] sm:$0xff]
  %v1767 = vld [vmem:[%s1765 + $0x8] sm:$0xff]
  %v1768 = vld [vmem:[%s1765 + $0x10] sm:$0xff]
  %v1769 = vld [vmem:[%s1765 + $0x18] sm:$0xff]
  %1770 = vmatprep.subr.mxu0 %v48
  %1771 = vmatpush1.msra.mxu0 %v47
  %1772 = vmatprep.subr.mxu0 %v52
  %1773 = vmatpush1.msra.mxu0 %v51
  %1774 = vmatprep.subr.mxu0 %v56
  %1775 = vmatpush1.msra.mxu0 %v55
  %1776 = vmatprep.subr.mxu0 %v60
  %1777 = vmatpush1.msra.mxu0 %v59
  %1778 = vmatprep.subr.mxu0 %v64
  %1779 = vmatpush1.msra.mxu0 %v63
  %1780 = vmatprep.subr.mxu0 %v68
  %1781 = vmatpush1.msra.mxu0 %v67
  %1782 = vmatprep.subr.mxu0 %v72
  %1783 = vmatpush1.msra.mxu0 %v71
  %1784 = vmatprep.subr.mxu0 %v76
  %1785 = vmatpush1.msra.mxu0 %v75
  %1786 = vmatprep.subr.mxu0 %v80
  %1787 = vmatpush1.msra.mxu0 %v79
  %1788 = vmatprep.subr.mxu0 %v84
  %1789 = vmatpush1.msra.mxu0 %v83
  %1790 = vmatprep.subr.mxu0 %v88
  %1791 = vmatpush1.msra.mxu0 %v87
  %1792 = vmatprep.subr.mxu0 %v92
  %1793 = vmatpush1.msra.mxu0 %v91
  %1794 = vmatprep.subr.mxu0 %v96
  %1795 = vmatpush1.msra.mxu0 %v95
  %1796 = vmatprep.subr.mxu0 %v100
  %1797 = vmatpush1.msra.mxu0 %v99
  %1798 = vmatprep.subr.mxu0 %v104
  %1799 = vmatpush1.msra.mxu0 %v103
  %1800 = vmatprep.subr.mxu0 %v108
  %1801 = vmatpush1.msra.mxu0 %v107
  %1802 = vmatprep.subr.mxu0 0.0
  %1803 = vmatpush1.msra.mxu0 0.0
  %1804 = vmatprep.subr.mxu0 0.0
  %1805 = vmatpush1.msra.mxu0 0.0
  %1806 = vmatprep.subr.mxu0 0.0
  %1807 = vmatpush1.msra.mxu0 0.0
  %1808 = vmatprep.subr.mxu0 0.0
  %1809 = vmatpush1.msra.mxu0 0.0
  %1810 = vmatprep.subr.mxu0 0.0
  %1811 = vmatpush1.msra.mxu0 0.0
  %1812 = vmatprep.subr.mxu0 0.0
  %1813 = vmatpush1.msra.mxu0 0.0
  %1814 = vmatprep.subr.mxu0 0.0
  %1815 = vmatpush1.msra.mxu0 0.0
  %1816 = vmatprep.subr.mxu0 0.0
  %1817 = vmatpush1.msra.mxu0 0.0
  %1818 = vmatprep.subr.mxu0 0.0
  %1819 = vmatpush1.msra.mxu0 0.0
  %1820 = vmatprep.subr.mxu0 0.0
  %1821 = vmatpush1.msra.mxu0 0.0
  %1822 = vmatprep.subr.mxu0 0.0
  %1823 = vmatpush1.msra.mxu0 0.0
  %1824 = vmatprep.subr.mxu0 0.0
  %1825 = vmatpush1.msra.mxu0 0.0
  %1826 = vmatprep.subr.mxu0 0.0
  %1827 = vmatpush1.msra.mxu0 0.0
  %1828 = vmatprep.subr.mxu0 0.0
  %1829 = vmatpush1.msra.mxu0 0.0
  %1830 = vmatprep.subr.mxu0 0.0
  %1831 = vmatpush1.msra.mxu0 0.0
  %1832 = vmatprep.subr.mxu0 0.0
  %1833 = vmatpush1.msra.mxu0 0.0
  %1834 = vmatprep.mubr.f32.mxu0 0.0
  %1835 = vmatmul.mubr.f32.gmra.mrb[0].mxu0 %v1760
  %v1836 = vpop.f32.mrb[0].mxu0
  %v1837 = vadd.f32 0.0, %v1836
  %v1838 = vpop.f32.mrb[0].mxu0
  %v1839 = vadd.f32 0.0, %v1838
  %1840 = vdwg.mxu0
  %1841 = vmatprep.subr.mxu0 %v50
  %1842 = vmatpush1.msra.mxu0 %v49
  %1843 = vmatprep.subr.mxu0 %v54
  %1844 = vmatpush1.msra.mxu0 %v53
  %1845 = vmatprep.subr.mxu0 %v58
  %1846 = vmatpush1.msra.mxu0 %v57
  %1847 = vmatprep.subr.mxu0 %v62
  %1848 = vmatpush1.msra.mxu0 %v61
  %1849 = vmatprep.subr.mxu0 %v66
  %1850 = vmatpush1.msra.mxu0 %v65
  %1851 = vmatprep.subr.mxu0 %v70
  %1852 = vmatpush1.msra.mxu0 %v69
  %1853 = vmatprep.subr.mxu0 %v74
  %1854 = vmatpush1.msra.mxu0 %v73
  %1855 = vmatprep.subr.mxu0 %v78
  %1856 = vmatpush1.msra.mxu0 %v77
  %1857 = vmatprep.subr.mxu0 %v82
  %1858 = vmatpush1.msra.mxu0 %v81
  %1859 = vmatprep.subr.mxu0 %v86
  %1860 = vmatpush1.msra.mxu0 %v85
  %1861 = vmatprep.subr.mxu0 %v90
  %1862 = vmatpush1.msra.mxu0 %v89
  %1863 = vmatprep.subr.mxu0 %v94
  %1864 = vmatpush1.msra.mxu0 %v93
  %1865 = vmatprep.subr.mxu0 %v98
  %1866 = vmatpush1.msra.mxu0 %v97
  %1867 = vmatprep.subr.mxu0 %v102
  %1868 = vmatpush1.msra.mxu0 %v101
  %1869 = vmatprep.subr.mxu0 %v106
  %1870 = vmatpush1.msra.mxu0 %v105
  %1871 = vmatprep.subr.mxu0 %v110
  %1872 = vmatpush1.msra.mxu0 %v109
  %1873 = vmatprep.subr.mxu0 0.0
  %1874 = vmatpush1.msra.mxu0 0.0
  %1875 = vmatprep.subr.mxu0 0.0
  %1876 = vmatpush1.msra.mxu0 0.0
  %1877 = vmatprep.subr.mxu0 0.0
  %1878 = vmatpush1.msra.mxu0 0.0
  %1879 = vmatprep.subr.mxu0 0.0
  %1880 = vmatpush1.msra.mxu0 0.0
  %1881 = vmatprep.subr.mxu0 0.0
  %1882 = vmatpush1.msra.mxu0 0.0
  %1883 = vmatprep.subr.mxu0 0.0
  %1884 = vmatpush1.msra.mxu0 0.0
  %1885 = vmatprep.subr.mxu0 0.0
  %1886 = vmatpush1.msra.mxu0 0.0
  %1887 = vmatprep.subr.mxu0 0.0
  %1888 = vmatpush1.msra.mxu0 0.0
  %1889 = vmatprep.subr.mxu0 0.0
  %1890 = vmatpush1.msra.mxu0 0.0
  %1891 = vmatprep.subr.mxu0 0.0
  %1892 = vmatpush1.msra.mxu0 0.0
  %1893 = vmatprep.subr.mxu0 0.0
  %1894 = vmatpush1.msra.mxu0 0.0
  %1895 = vmatprep.subr.mxu0 0.0
  %1896 = vmatpush1.msra.mxu0 0.0
  %1897 = vmatprep.subr.mxu0 0.0
  %1898 = vmatpush1.msra.mxu0 0.0
  %1899 = vmatprep.subr.mxu0 0.0
  %1900 = vmatpush1.msra.mxu0 0.0
  %1901 = vmatprep.subr.mxu0 0.0
  %1902 = vmatpush1.msra.mxu0 0.0
  %1903 = vmatprep.subr.mxu0 0.0
  %1904 = vmatpush1.msra.mxu0 0.0
  %1905 = vmatprep.mubr.f32.mxu0 0.0
  %1906 = vmatmul.mubr.f32.gmra.mrb[0].mxu0 %v1760
  %v1907 = vpop.f32.mrb[0].mxu0
  %v1908 = vadd.f32 0.0, %v1907
  %v1909 = vpop.f32.mrb[0].mxu0
  %v1910 = vadd.f32 0.0, %v1909
  %1911 = vdwg.mxu0
  %v1912 = vadd.f32 %v1766, %v1837
  %v1913 = vadd.f32 %v1767, %v1839
  %v1914 = vadd.f32 %v1768, %v1908
  %v1915 = vadd.f32 %v1769, %v1910
  %v1916 = vxor.u32 %v1912, 2147483648
  %v1917 = vmul.f32 %v1916, 1.442695
  %v1918 = vpow.pop %v1917
  %v1919 = vadd.f32 %v1918, 1.0
  %v1920 = vrcp.pop %v1919
  %v1921 = vmul.f32 1.0, %v1920
  %v1922 = vxor.u32 %v1913, 2147483648
  %v1923 = vmul.f32 %v1922, 1.442695
  %v1924 = vpow.pop %v1923
  %v1925 = vadd.f32 %v1924, 1.0
  %v1926 = vrcp.pop %v1925
  %v1927 = vmul.f32 1.0, %v1926
  %v1928 = vtanh.pop %v1914
  %v1929 = vxor.u32 %v1915, 2147483648
  %v1930 = vmul.f32 %v1929, 1.442695
  %v1931 = vpow.pop %v1930
  %v1932 = vadd.f32 %v1931, 1.0
  %v1933 = vrcp.pop %v1932
  %v1934 = vmul.f32 1.0, %v1933
  %v1935 = vmul.f32 %v1927, %v1758
  %v1936 = vmul.f32 %v1921, %v1928
  %v1937 = vadd.f32 %v1935, %v1936
  %v1938 = vtanh.pop %v1937
  %v1939 = vmul.f32 %v1934, %v1938
  %s1940 = scalar_lea.vmem [#allocation3], 56
  %1941 = vst [vmem:[%s1940] sm:$0xff] %v1939
  %1942 = vst [vmem:[%s14] sm:$0xff] %v1939
  %1943 = vst [vmem:[%s15] sm:$0xff] %v1937
  %v1944 = vld [vmem:[#allocation3] sm:$0xff]
  %v1945 = vld [vmem:[#allocation3 + $0x8] sm:$0xff]
  %v1946 = vld [vmem:[#allocation3 + $0x10] sm:$0xff]
  %v1947 = vld [vmem:[#allocation3 + $0x18] sm:$0xff]
  %v1948 = vld [vmem:[#allocation3 + $0x20] sm:$0xff]
  %v1949 = vld [vmem:[#allocation3 + $0x28] sm:$0xff]
  %v1950 = vld [vmem:[#allocation3 + $0x30] sm:$0xff]
  %v1951 = vld [vmem:[#allocation3 + $0x38] sm:$0xff]
  %v1952 = vld [vmem:[%s6] sm:$0xff]
  %v1953 = vld [vmem:[%s6 + $0x8] sm:$0xff]
  %v1954 = vld [vmem:[%s6 + $0x10] sm:$0xff]
  %v1955 = vld [vmem:[%s6 + $0x18] sm:$0xff]
  %v1956 = vld [vmem:[%s6 + $0x20] sm:$0xff]
  %v1957 = vld [vmem:[%s6 + $0x28] sm:$0xff]
  %v1958 = vld [vmem:[%s6 + $0x30] sm:$0xff]
  %v1959 = vld [vmem:[%s6 + $0x38] sm:$0xff]
  %v1960 = vld [vmem:[%s6 + $0x40] sm:$0xff]
  %v1961 = vld [vmem:[%s6 + $0x48] sm:$0xff]
  %v1962 = vld [vmem:[%s6 + $0x50] sm:$0xff]
  %v1963 = vld [vmem:[%s6 + $0x58] sm:$0xff]
  %v1964 = vld [vmem:[%s6 + $0x60] sm:$0xff]
  %v1965 = vld [vmem:[%s6 + $0x68] sm:$0xff]
  %v1966 = vld [vmem:[%s6 + $0x70] sm:$0xff]
  %v1967 = vld [vmem:[%s6 + $0x78] sm:$0xff]
  %v1968 = vld [vmem:[%s6 + $0x80] sm:$0xff]
  %v1969 = vld [vmem:[%s6 + $0x88] sm:$0xff]
  %v1970 = vld [vmem:[%s6 + $0x90] sm:$0xff]
  %v1971 = vld [vmem:[%s6 + $0x98] sm:$0xff]
  %v1972 = vld [vmem:[%s6 + $0xa0] sm:$0xff]
  %v1973 = vld [vmem:[%s6 + $0xa8] sm:$0xff]
  %v1974 = vld [vmem:[%s6 + $0xb0] sm:$0xff]
  %v1975 = vld [vmem:[%s6 + $0xb8] sm:$0xff]
  %v1976 = vld [vmem:[%s6 + $0xc0] sm:$0xff]
  %v1977 = vld [vmem:[%s6 + $0xc8] sm:$0xff]
  %v1978 = vld [vmem:[%s6 + $0xd0] sm:$0xff]
  %v1979 = vld [vmem:[%s6 + $0xd8] sm:$0xff]
  %v1980 = vld [vmem:[%s6 + $0xe0] sm:$0xff]
  %v1981 = vld [vmem:[%s6 + $0xe8] sm:$0xff]
  %v1982 = vld [vmem:[%s6 + $0xf0] sm:$0xff]
  %v1983 = vld [vmem:[%s6 + $0xf8] sm:$0xff]
  %v1984 = vld [vmem:[%s6 + $0x100] sm:$0xff]
  %v1985 = vld [vmem:[%s6 + $0x108] sm:$0xff]
  %v1986 = vld [vmem:[%s6 + $0x110] sm:$0xff]
  %v1987 = vld [vmem:[%s6 + $0x118] sm:$0xff]
  %v1988 = vld [vmem:[%s6 + $0x120] sm:$0xff]
  %v1989 = vld [vmem:[%s6 + $0x128] sm:$0xff]
  %v1990 = vld [vmem:[%s6 + $0x130] sm:$0xff]
  %v1991 = vld [vmem:[%s6 + $0x138] sm:$0xff]
  %v1992 = vld [vmem:[%s6 + $0x140] sm:$0xff]
  %v1993 = vld [vmem:[%s6 + $0x148] sm:$0xff]
  %v1994 = vld [vmem:[%s6 + $0x150] sm:$0xff]
  %v1995 = vld [vmem:[%s6 + $0x158] sm:$0xff]
  %v1996 = vld [vmem:[%s6 + $0x160] sm:$0xff]
  %v1997 = vld [vmem:[%s6 + $0x168] sm:$0xff]
  %v1998 = vld [vmem:[%s6 + $0x170] sm:$0xff]
  %v1999 = vld [vmem:[%s6 + $0x178] sm:$0xff]
  %v2000 = vld [vmem:[%s6 + $0x180] sm:$0xff]
  %v2001 = vld [vmem:[%s6 + $0x188] sm:$0xff]
  %v2002 = vld [vmem:[%s6 + $0x190] sm:$0xff]
  %v2003 = vld [vmem:[%s6 + $0x198] sm:$0xff]
  %v2004 = vld [vmem:[%s6 + $0x1a0] sm:$0xff]
  %v2005 = vld [vmem:[%s6 + $0x1a8] sm:$0xff]
  %v2006 = vld [vmem:[%s6 + $0x1b0] sm:$0xff]
  %v2007 = vld [vmem:[%s6 + $0x1b8] sm:$0xff]
  %v2008 = vld [vmem:[%s6 + $0x1c0] sm:$0xff]
  %v2009 = vld [vmem:[%s6 + $0x1c8] sm:$0xff]
  %v2010 = vld [vmem:[%s6 + $0x1d0] sm:$0xff]
  %v2011 = vld [vmem:[%s6 + $0x1d8] sm:$0xff]
  %v2012 = vld [vmem:[%s6 + $0x1e0] sm:$0xff]
  %v2013 = vld [vmem:[%s6 + $0x1e8] sm:$0xff]
  %v2014 = vld [vmem:[%s6 + $0x1f0] sm:$0xff]
  %v2015 = vld [vmem:[%s6 + $0x1f8] sm:$0xff]
  %v2016 = vld [vmem:[%s8] sm:$0xf]
  %v2018 = vlaneseq
  %v2019 = vshrl.u32 %v2018, 7
  %v2020 = vsub.s32 0, %v2019
  %v2021 = vrot.slane %v2016, %v2020
  %v2022 = vlaneseq
  %v2023 = vshrl.u32 %v2022, 7
  %v2024 = vsub.s32 1, %v2023
  %v2025 = vrot.slane %v2016, %v2024
  %v2026 = vlaneseq
  %v2027 = vshrl.u32 %v2026, 7
  %v2028 = vsub.s32 2, %v2027
  %v2029 = vrot.slane %v2016, %v2028
  %v2030 = vlaneseq
  %v2031 = vshrl.u32 %v2030, 7
  %v2032 = vsub.s32 3, %v2031
  %v2033 = vrot.slane %v2016, %v2032
  %2038 = vmatprep.subr.mxu0 %v1953
  %2039 = vmatpush1.msra.mxu0 %v1952
  %2040 = vmatprep.subr.mxu0 %v1957
  %2041 = vmatpush1.msra.mxu0 %v1956
  %2042 = vmatprep.subr.mxu0 %v1961
  %2043 = vmatpush1.msra.mxu0 %v1960
  %2044 = vmatprep.subr.mxu0 %v1965
  %2045 = vmatpush1.msra.mxu0 %v1964
  %2046 = vmatprep.subr.mxu0 %v1969
  %2047 = vmatpush1.msra.mxu0 %v1968
  %2048 = vmatprep.subr.mxu0 %v1973
  %2049 = vmatpush1.msra.mxu0 %v1972
  %2050 = vmatprep.subr.mxu0 %v1977
  %2051 = vmatpush1.msra.mxu0 %v1976
  %2052 = vmatprep.subr.mxu0 %v1981
  %2053 = vmatpush1.msra.mxu0 %v1980
  %2054 = vmatprep.subr.mxu0 %v1985
  %2055 = vmatpush1.msra.mxu0 %v1984
  %2056 = vmatprep.subr.mxu0 %v1989
  %2057 = vmatpush1.msra.mxu0 %v1988
  %2058 = vmatprep.subr.mxu0 %v1993
  %2059 = vmatpush1.msra.mxu0 %v1992
  %2060 = vmatprep.subr.mxu0 %v1997
  %2061 = vmatpush1.msra.mxu0 %v1996
  %2062 = vmatprep.subr.mxu0 %v2001
  %2063 = vmatpush1.msra.mxu0 %v2000
  %2064 = vmatprep.subr.mxu0 %v2005
  %2065 = vmatpush1.msra.mxu0 %v2004
  %2066 = vmatprep.subr.mxu0 %v2009
  %2067 = vmatpush1.msra.mxu0 %v2008
  %2068 = vmatprep.subr.mxu0 %v2013
  %2069 = vmatpush1.msra.mxu0 %v2012
  %2070 = vmatprep.subr.mxu0 0.0
  %2071 = vmatpush1.msra.mxu0 0.0
  %2072 = vmatprep.subr.mxu0 0.0
  %2073 = vmatpush1.msra.mxu0 0.0
  %2074 = vmatprep.subr.mxu0 0.0
  %2075 = vmatpush1.msra.mxu0 0.0
  %2076 = vmatprep.subr.mxu0 0.0
  %2077 = vmatpush1.msra.mxu0 0.0
  %2078 = vmatprep.subr.mxu0 0.0
  %2079 = vmatpush1.msra.mxu0 0.0
  %2080 = vmatprep.subr.mxu0 0.0
  %2081 = vmatpush1.msra.mxu0 0.0
  %2082 = vmatprep.subr.mxu0 0.0
  %2083 = vmatpush1.msra.mxu0 0.0
  %2084 = vmatprep.subr.mxu0 0.0
  %2085 = vmatpush1.msra.mxu0 0.0
  %2086 = vmatprep.subr.mxu0 0.0
  %2087 = vmatpush1.msra.mxu0 0.0
  %2088 = vmatprep.subr.mxu0 0.0
  %2089 = vmatpush1.msra.mxu0 0.0
  %2090 = vmatprep.subr.mxu0 0.0
  %2091 = vmatpush1.msra.mxu0 0.0
  %2092 = vmatprep.subr.mxu0 0.0
  %2093 = vmatpush1.msra.mxu0 0.0
  %2094 = vmatprep.subr.mxu0 0.0
  %2095 = vmatpush1.msra.mxu0 0.0
  %2096 = vmatprep.subr.mxu0 0.0
  %2097 = vmatpush1.msra.mxu0 0.0
  %2098 = vmatprep.subr.mxu0 0.0
  %2099 = vmatpush1.msra.mxu0 0.0
  %2100 = vmatprep.subr.mxu0 0.0
  %2101 = vmatpush1.msra.mxu0 0.0
  %2102 = vmatprep.mubr.f32.mxu0 0.0
  %2103 = vmatmul.mubr.f32.gmra.mrb[0].mxu0 %v1944
  %v2104 = vpop.f32.mrb[0].mxu0
  %v2105 = vadd.f32 %v2021, %v2104
  %v2106 = vpop.f32.mrb[0].mxu0
  %v2107 = vadd.f32 %v2025, %v2106
  %2108 = vmatprep.mubr.f32.mxu0 0.0
  %2109 = vmatmul.mubr.f32.gmra.mrb[0].mxu0 %v1945
  %v2110 = vpop.f32.mrb[0].mxu0
  %v2111 = vadd.f32 %v2021, %v2110
  %v2112 = vpop.f32.mrb[0].mxu0
  %v2113 = vadd.f32 %v2025, %v2112
  %2114 = vmatprep.mubr.f32.mxu0 0.0
  %2115 = vmatmul.mubr.f32.gmra.mrb[0].mxu0 %v1946
  %v2116 = vpop.f32.mrb[0].mxu0
  %v2117 = vadd.f32 %v2021, %v2116
  %v2118 = vpop.f32.mrb[0].mxu0
  %v2119 = vadd.f32 %v2025, %v2118
  %2120 = vmatprep.mubr.f32.mxu0 0.0
  %2121 = vmatmul.mubr.f32.gmra.mrb[0].mxu0 %v1947
  %v2122 = vpop.f32.mrb[0].mxu0
  %v2123 = vadd.f32 %v2021, %v2122
  %v2124 = vpop.f32.mrb[0].mxu0
  %v2125 = vadd.f32 %v2025, %v2124
  %2126 = vmatprep.mubr.f32.mxu0 0.0
  %2127 = vmatmul.mubr.f32.gmra.mrb[0].mxu0 %v1948
  %v2128 = vpop.f32.mrb[0].mxu0
  %v2129 = vadd.f32 %v2021, %v2128
  %v2130 = vpop.f32.mrb[0].mxu0
  %v2131 = vadd.f32 %v2025, %v2130
  %2132 = vmatprep.mubr.f32.mxu0 0.0
  %2133 = vmatmul.mubr.f32.gmra.mrb[0].mxu0 %v1949
  %v2134 = vpop.f32.mrb[0].mxu0
  %v2135 = vadd.f32 %v2021, %v2134
  %v2136 = vpop.f32.mrb[0].mxu0
  %v2137 = vadd.f32 %v2025, %v2136
  %2138 = vmatprep.mubr.f32.mxu0 0.0
  %2139 = vmatmul.mubr.f32.gmra.mrb[0].mxu0 %v1950
  %v2140 = vpop.f32.mrb[0].mxu0
  %v2141 = vadd.f32 %v2021, %v2140
  %v2142 = vpop.f32.mrb[0].mxu0
  %v2143 = vadd.f32 %v2025, %v2142
  %2144 = vmatprep.mubr.f32.mxu0 0.0
  %2145 = vmatmul.mubr.f32.gmra.mrb[0].mxu0 %v1951
  %v2146 = vpop.f32.mrb[0].mxu0
  %v2147 = vadd.f32 %v2021, %v2146
  %v2148 = vpop.f32.mrb[0].mxu0
  %v2149 = vadd.f32 %v2025, %v2148
  %2150 = vdwg.mxu0
  %2151 = vmatprep.subr.mxu0 %v1955
  %2152 = vmatpush1.msra.mxu0 %v1954
  %2153 = vmatprep.subr.mxu0 %v1959
  %2154 = vmatpush1.msra.mxu0 %v1958
  %2155 = vmatprep.subr.mxu0 %v1963
  %2156 = vmatpush1.msra.mxu0 %v1962
  %2157 = vmatprep.subr.mxu0 %v1967
  %2158 = vmatpush1.msra.mxu0 %v1966
  %2159 = vmatprep.subr.mxu0 %v1971
  %2160 = vmatpush1.msra.mxu0 %v1970
  %2161 = vmatprep.subr.mxu0 %v1975
  %2162 = vmatpush1.msra.mxu0 %v1974
  %2163 = vmatprep.subr.mxu0 %v1979
  %2164 = vmatpush1.msra.mxu0 %v1978
  %2165 = vmatprep.subr.mxu0 %v1983
  %2166 = vmatpush1.msra.mxu0 %v1982
  %2167 = vmatprep.subr.mxu0 %v1987
  %2168 = vmatpush1.msra.mxu0 %v1986
  %2169 = vmatprep.subr.mxu0 %v1991
  %2170 = vmatpush1.msra.mxu0 %v1990
  %2171 = vmatprep.subr.mxu0 %v1995
  %2172 = vmatpush1.msra.mxu0 %v1994
  %2173 = vmatprep.subr.mxu0 %v1999
  %2174 = vmatpush1.msra.mxu0 %v1998
  %2175 = vmatprep.subr.mxu0 %v2003
  %2176 = vmatpush1.msra.mxu0 %v2002
  %2177 = vmatprep.subr.mxu0 %v2007
  %2178 = vmatpush1.msra.mxu0 %v2006
  %2179 = vmatprep.subr.mxu0 %v2011
  %2180 = vmatpush1.msra.mxu0 %v2010
  %2181 = vmatprep.subr.mxu0 %v2015
  %2182 = vmatpush1.msra.mxu0 %v2014
  %2183 = vmatprep.subr.mxu0 0.0
  %2184 = vmatpush1.msra.mxu0 0.0
  %2185 = vmatprep.subr.mxu0 0.0
  %2186 = vmatpush1.msra.mxu0 0.0
  %2187 = vmatprep.subr.mxu0 0.0
  %2188 = vmatpush1.msra.mxu0 0.0
  %2189 = vmatprep.subr.mxu0 0.0
  %2190 = vmatpush1.msra.mxu0 0.0
  %2191 = vmatprep.subr.mxu0 0.0
  %2192 = vmatpush1.msra.mxu0 0.0
  %2193 = vmatprep.subr.mxu0 0.0
  %2194 = vmatpush1.msra.mxu0 0.0
  %2195 = vmatprep.subr.mxu0 0.0
  %2196 = vmatpush1.msra.mxu0 0.0
  %2197 = vmatprep.subr.mxu0 0.0
  %2198 = vmatpush1.msra.mxu0 0.0
  %2199 = vmatprep.subr.mxu0 0.0
  %2200 = vmatpush1.msra.mxu0 0.0
  %2201 = vmatprep.subr.mxu0 0.0
  %2202 = vmatpush1.msra.mxu0 0.0
  %2203 = vmatprep.subr.mxu0 0.0
  %2204 = vmatpush1.msra.mxu0 0.0
  %2205 = vmatprep.subr.mxu0 0.0
  %2206 = vmatpush1.msra.mxu0 0.0
  %2207 = vmatprep.subr.mxu0 0.0
  %2208 = vmatpush1.msra.mxu0 0.0
  %2209 = vmatprep.subr.mxu0 0.0
  %2210 = vmatpush1.msra.mxu0 0.0
  %2211 = vmatprep.subr.mxu0 0.0
  %2212 = vmatpush1.msra.mxu0 0.0
  %2213 = vmatprep.subr.mxu0 0.0
  %2214 = vmatpush1.msra.mxu0 0.0
  %2215 = vmatprep.mubr.f32.mxu0 0.0
  %2216 = vmatmul.mubr.f32.gmra.mrb[0].mxu0 %v1944
  %v2217 = vpop.f32.mrb[0].mxu0
  %v2218 = vadd.f32 %v2029, %v2217
  %v2219 = vpop.f32.mrb[0].mxu0
  %v2220 = vadd.f32 %v2033, %v2219
  %2221 = vmatprep.mubr.f32.mxu0 0.0
  %2222 = vmatmul.mubr.f32.gmra.mrb[0].mxu0 %v1945
  %v2223 = vpop.f32.mrb[0].mxu0
  %v2224 = vadd.f32 %v2029, %v2223
  %v2225 = vpop.f32.mrb[0].mxu0
  %v2226 = vadd.f32 %v2033, %v2225
  %2227 = vmatprep.mubr.f32.mxu0 0.0
  %2228 = vmatmul.mubr.f32.gmra.mrb[0].mxu0 %v1946
  %v2229 = vpop.f32.mrb[0].mxu0
  %v2230 = vadd.f32 %v2029, %v2229
  %v2231 = vpop.f32.mrb[0].mxu0
  %v2232 = vadd.f32 %v2033, %v2231
  %2233 = vmatprep.mubr.f32.mxu0 0.0
  %2234 = vmatmul.mubr.f32.gmra.mrb[0].mxu0 %v1947
  %v2235 = vpop.f32.mrb[0].mxu0
  %v2236 = vadd.f32 %v2029, %v2235
  %v2237 = vpop.f32.mrb[0].mxu0
  %v2238 = vadd.f32 %v2033, %v2237
  %2239 = vmatprep.mubr.f32.mxu0 0.0
  %2240 = vmatmul.mubr.f32.gmra.mrb[0].mxu0 %v1948
  %v2241 = vpop.f32.mrb[0].mxu0
  %v2242 = vadd.f32 %v2029, %v2241
  %v2243 = vpop.f32.mrb[0].mxu0
  %v2244 = vadd.f32 %v2033, %v2243
  %2245 = vmatprep.mubr.f32.mxu0 0.0
  %2246 = vmatmul.mubr.f32.gmra.mrb[0].mxu0 %v1949
  %v2247 = vpop.f32.mrb[0].mxu0
  %v2248 = vadd.f32 %v2029, %v2247
  %v2249 = vpop.f32.mrb[0].mxu0
  %v2250 = vadd.f32 %v2033, %v2249
  %2251 = vmatprep.mubr.f32.mxu0 0.0
  %2252 = vmatmul.mubr.f32.gmra.mrb[0].mxu0 %v1950
  %v2253 = vpop.f32.mrb[0].mxu0
  %v2254 = vadd.f32 %v2029, %v2253
  %v2255 = vpop.f32.mrb[0].mxu0
  %v2256 = vadd.f32 %v2033, %v2255
  %2257 = vmatprep.mubr.f32.mxu0 0.0
  %2258 = vmatmul.mubr.f32.gmra.mrb[0].mxu0 %v1951
  %v2259 = vpop.f32.mrb[0].mxu0
  %v2260 = vadd.f32 %v2029, %v2259
  %v2261 = vpop.f32.mrb[0].mxu0
  %v2262 = vadd.f32 %v2033, %v2261
  %2263 = vdwg.mxu0
  %2264 = vst [vmem:[#allocation2] sm:$0xff] %v2105
  %2265 = vst [vmem:[#allocation2 + $0x8] sm:$0xff] %v2107
  %2266 = vst [vmem:[#allocation2 + $0x10] sm:$0xff] %v2218
  %2267 = vst [vmem:[#allocation2 + $0x18] sm:$0xff] %v2220
  %2268 = vst [vmem:[#allocation2 + $0x20] sm:$0xff] %v2111
  %2269 = vst [vmem:[#allocation2 + $0x28] sm:$0xff] %v2113
  %2270 = vst [vmem:[#allocation2 + $0x30] sm:$0xff] %v2224
  %2271 = vst [vmem:[#allocation2 + $0x38] sm:$0xff] %v2226
  %2272 = vst [vmem:[#allocation2 + $0x40] sm:$0xff] %v2117
  %2273 = vst [vmem:[#allocation2 + $0x48] sm:$0xff] %v2119
  %2274 = vst [vmem:[#allocation2 + $0x50] sm:$0xff] %v2230
  %2275 = vst [vmem:[#allocation2 + $0x58] sm:$0xff] %v2232
  %2276 = vst [vmem:[#allocation2 + $0x60] sm:$0xff] %v2123
  %2277 = vst [vmem:[#allocation2 + $0x68] sm:$0xff] %v2125
  %2278 = vst [vmem:[#allocation2 + $0x70] sm:$0xff] %v2236
  %2279 = vst [vmem:[#allocation2 + $0x78] sm:$0xff] %v2238
  %2280 = vst [vmem:[#allocation2 + $0x80] sm:$0xff] %v2129
  %2281 = vst [vmem:[#allocation2 + $0x88] sm:$0xff] %v2131
  %2282 = vst [vmem:[#allocation2 + $0x90] sm:$0xff] %v2242
  %2283 = vst [vmem:[#allocation2 + $0x98] sm:$0xff] %v2244
  %2284 = vst [vmem:[#allocation2 + $0xa0] sm:$0xff] %v2135
  %2285 = vst [vmem:[#allocation2 + $0xa8] sm:$0xff] %v2137
  %2286 = vst [vmem:[#allocation2 + $0xb0] sm:$0xff] %v2248
  %2287 = vst [vmem:[#allocation2 + $0xb8] sm:$0xff] %v2250
  %2288 = vst [vmem:[#allocation2 + $0xc0] sm:$0xff] %v2141
  %2289 = vst [vmem:[#allocation2 + $0xc8] sm:$0xff] %v2143
  %2290 = vst [vmem:[#allocation2 + $0xd0] sm:$0xff] %v2254
  %2291 = vst [vmem:[#allocation2 + $0xd8] sm:$0xff] %v2256
  %2292 = vst [vmem:[#allocation2 + $0xe0] sm:$0xff] %v2147
  %2293 = vst [vmem:[#allocation2 + $0xe8] sm:$0xff] %v2149
  %2294 = vst [vmem:[#allocation2 + $0xf0] sm:$0xff] %v2260
  %2295 = vst [vmem:[#allocation2 + $0xf8] sm:$0xff] %v2262
  %s2296 = scalar_lea.vmem %s1, 8
  %v2297 = vld [vmem:[%s2296] sm:$0xff]
  %s2298 = scalar_lea.vmem %s2, 8
  %v2299 = vld [vmem:[%s2298] sm:$0xff]
  %v2300 = vld [vmem:[%s513] sm:$0xff]
  %v2301 = vld [vmem:[%s513 + $0x8] sm:$0xff]
  %v2302 = vld [vmem:[%s513 + $0x10] sm:$0xff]
  %v2303 = vld [vmem:[%s513 + $0x18] sm:$0xff]
  %2304 = vmatprep.subr.mxu0 %v112
  %2305 = vmatpush1.msra.mxu0 %v111
  %2306 = vmatprep.subr.mxu0 %v116
  %2307 = vmatpush1.msra.mxu0 %v115
  %2308 = vmatprep.subr.mxu0 %v120
  %2309 = vmatpush1.msra.mxu0 %v119
  %2310 = vmatprep.subr.mxu0 %v124
  %2311 = vmatpush1.msra.mxu0 %v123
  %2312 = vmatprep.subr.mxu0 %v128
  %2313 = vmatpush1.msra.mxu0 %v127
  %2314 = vmatprep.subr.mxu0 %v132
  %2315 = vmatpush1.msra.mxu0 %v131
  %2316 = vmatprep.subr.mxu0 %v136
  %2317 = vmatpush1.msra.mxu0 %v135
  %2318 = vmatprep.subr.mxu0 %v140
  %2319 = vmatpush1.msra.mxu0 %v139
  %2320 = vmatprep.subr.mxu0 %v144
  %2321 = vmatpush1.msra.mxu0 %v143
  %2322 = vmatprep.subr.mxu0 %v148
  %2323 = vmatpush1.msra.mxu0 %v147
  %2324 = vmatprep.subr.mxu0 %v152
  %2325 = vmatpush1.msra.mxu0 %v151
  %2326 = vmatprep.subr.mxu0 %v156
  %2327 = vmatpush1.msra.mxu0 %v155
  %2328 = vmatprep.subr.mxu0 %v160
  %2329 = vmatpush1.msra.mxu0 %v159
  %2330 = vmatprep.subr.mxu0 %v164
  %2331 = vmatpush1.msra.mxu0 %v163
  %2332 = vmatprep.subr.mxu0 %v168
  %2333 = vmatpush1.msra.mxu0 %v167
  %2334 = vmatprep.subr.mxu0 %v172
  %2335 = vmatpush1.msra.mxu0 %v171
  %2336 = vmatprep.subr.mxu0 0.0
  %2337 = vmatpush1.msra.mxu0 0.0
  %2338 = vmatprep.subr.mxu0 0.0
  %2339 = vmatpush1.msra.mxu0 0.0
  %2340 = vmatprep.subr.mxu0 0.0
  %2341 = vmatpush1.msra.mxu0 0.0
  %2342 = vmatprep.subr.mxu0 0.0
  %2343 = vmatpush1.msra.mxu0 0.0
  %2344 = vmatprep.subr.mxu0 0.0
  %2345 = vmatpush1.msra.mxu0 0.0
  %2346 = vmatprep.subr.mxu0 0.0
  %2347 = vmatpush1.msra.mxu0 0.0
  %2348 = vmatprep.subr.mxu0 0.0
  %2349 = vmatpush1.msra.mxu0 0.0
  %2350 = vmatprep.subr.mxu0 0.0
  %2351 = vmatpush1.msra.mxu0 0.0
  %2352 = vmatprep.subr.mxu0 0.0
  %2353 = vmatpush1.msra.mxu0 0.0
  %2354 = vmatprep.subr.mxu0 0.0
  %2355 = vmatpush1.msra.mxu0 0.0
  %2356 = vmatprep.subr.mxu0 0.0
  %2357 = vmatpush1.msra.mxu0 0.0
  %2358 = vmatprep.subr.mxu0 0.0
  %2359 = vmatpush1.msra.mxu0 0.0
  %2360 = vmatprep.subr.mxu0 0.0
  %2361 = vmatpush1.msra.mxu0 0.0
  %2362 = vmatprep.subr.mxu0 0.0
  %2363 = vmatpush1.msra.mxu0 0.0
  %2364 = vmatprep.subr.mxu0 0.0
  %2365 = vmatpush1.msra.mxu0 0.0
  %2366 = vmatprep.subr.mxu0 0.0
  %2367 = vmatpush1.msra.mxu0 0.0
  %2368 = vmatprep.mubr.f32.mxu0 0.0
  %2369 = vmatmul.mubr.f32.gmra.mrb[0].mxu0 %v2297
  %v2370 = vpop.f32.mrb[0].mxu0
  %v2371 = vadd.f32 0.0, %v2370
  %v2372 = vpop.f32.mrb[0].mxu0
  %v2373 = vadd.f32 0.0, %v2372
  %2374 = vdwg.mxu0
  %2375 = vmatprep.subr.mxu0 %v114
  %2376 = vmatpush1.msra.mxu0 %v113
  %2377 = vmatprep.subr.mxu0 %v118
  %2378 = vmatpush1.msra.mxu0 %v117
  %2379 = vmatprep.subr.mxu0 %v122
  %2380 = vmatpush1.msra.mxu0 %v121
  %2381 = vmatprep.subr.mxu0 %v126
  %2382 = vmatpush1.msra.mxu0 %v125
  %2383 = vmatprep.subr.mxu0 %v130
  %2384 = vmatpush1.msra.mxu0 %v129
  %2385 = vmatprep.subr.mxu0 %v134
  %2386 = vmatpush1.msra.mxu0 %v133
  %2387 = vmatprep.subr.mxu0 %v138
  %2388 = vmatpush1.msra.mxu0 %v137
  %2389 = vmatprep.subr.mxu0 %v142
  %2390 = vmatpush1.msra.mxu0 %v141
  %2391 = vmatprep.subr.mxu0 %v146
  %2392 = vmatpush1.msra.mxu0 %v145
  %2393 = vmatprep.subr.mxu0 %v150
  %2394 = vmatpush1.msra.mxu0 %v149
  %2395 = vmatprep.subr.mxu0 %v154
  %2396 = vmatpush1.msra.mxu0 %v153
  %2397 = vmatprep.subr.mxu0 %v158
  %2398 = vmatpush1.msra.mxu0 %v157
  %2399 = vmatprep.subr.mxu0 %v162
  %2400 = vmatpush1.msra.mxu0 %v161
  %2401 = vmatprep.subr.mxu0 %v166
  %2402 = vmatpush1.msra.mxu0 %v165
  %2403 = vmatprep.subr.mxu0 %v170
  %2404 = vmatpush1.msra.mxu0 %v169
  %2405 = vmatprep.subr.mxu0 %v174
  %2406 = vmatpush1.msra.mxu0 %v173
  %2407 = vmatprep.subr.mxu0 0.0
  %2408 = vmatpush1.msra.mxu0 0.0
  %2409 = vmatprep.subr.mxu0 0.0
  %2410 = vmatpush1.msra.mxu0 0.0
  %2411 = vmatprep.subr.mxu0 0.0
  %2412 = vmatpush1.msra.mxu0 0.0
  %2413 = vmatprep.subr.mxu0 0.0
  %2414 = vmatpush1.msra.mxu0 0.0
  %2415 = vmatprep.subr.mxu0 0.0
  %2416 = vmatpush1.msra.mxu0 0.0
  %2417 = vmatprep.subr.mxu0 0.0
  %2418 = vmatpush1.msra.mxu0 0.0
  %2419 = vmatprep.subr.mxu0 0.0
  %2420 = vmatpush1.msra.mxu0 0.0
  %2421 = vmatprep.subr.mxu0 0.0
  %2422 = vmatpush1.msra.mxu0 0.0
  %2423 = vmatprep.subr.mxu0 0.0
  %2424 = vmatpush1.msra.mxu0 0.0
  %2425 = vmatprep.subr.mxu0 0.0
  %2426 = vmatpush1.msra.mxu0 0.0
  %2427 = vmatprep.subr.mxu0 0.0
  %2428 = vmatpush1.msra.mxu0 0.0
  %2429 = vmatprep.subr.mxu0 0.0
  %2430 = vmatpush1.msra.mxu0 0.0
  %2431 = vmatprep.subr.mxu0 0.0
  %2432 = vmatpush1.msra.mxu0 0.0
  %2433 = vmatprep.subr.mxu0 0.0
  %2434 = vmatpush1.msra.mxu0 0.0
  %2435 = vmatprep.subr.mxu0 0.0
  %2436 = vmatpush1.msra.mxu0 0.0
  %2437 = vmatprep.subr.mxu0 0.0
  %2438 = vmatpush1.msra.mxu0 0.0
  %2439 = vmatprep.mubr.f32.mxu0 0.0
  %2440 = vmatmul.mubr.f32.gmra.mrb[0].mxu0 %v2297
  %v2441 = vpop.f32.mrb[0].mxu0
  %v2442 = vadd.f32 0.0, %v2441
  %v2443 = vpop.f32.mrb[0].mxu0
  %v2444 = vadd.f32 0.0, %v2443
  %2445 = vdwg.mxu0
  %v2446 = vadd.f32 %v2300, %v2371
  %v2447 = vadd.f32 %v2301, %v2373
  %v2448 = vadd.f32 %v2302, %v2442
  %v2449 = vadd.f32 %v2303, %v2444
  %v2450 = vxor.u32 %v2446, 2147483648
  %v2451 = vmul.f32 %v2450, 1.442695
  %v2452 = vpow.pop %v2451
  %v2453 = vadd.f32 %v2452, 1.0
  %v2454 = vrcp.pop %v2453
  %v2455 = vmul.f32 1.0, %v2454
  %v2456 = vxor.u32 %v2447, 2147483648
  %v2457 = vmul.f32 %v2456, 1.442695
  %v2458 = vpow.pop %v2457
  %v2459 = vadd.f32 %v2458, 1.0
  %v2460 = vrcp.pop %v2459
  %v2461 = vmul.f32 1.0, %v2460
  %v2462 = vtanh.pop %v2448
  %v2463 = vxor.u32 %v2449, 2147483648
  %v2464 = vmul.f32 %v2463, 1.442695
  %v2465 = vpow.pop %v2464
  %v2466 = vadd.f32 %v2465, 1.0
  %v2467 = vrcp.pop %v2466
  %v2468 = vmul.f32 1.0, %v2467
  %v2469 = vmul.f32 %v2461, %v2299
  %v2470 = vmul.f32 %v2455, %v2462
  %v2471 = vadd.f32 %v2469, %v2470
  %v2472 = vtanh.pop %v2471
  %v2473 = vmul.f32 %v2468, %v2472
  %2474 = vst [vmem:[#allocation3] sm:$0xff] %v2473
  %v2475 = vld [vmem:[%s691] sm:$0xff]
  %v2476 = vld [vmem:[%s691 + $0x8] sm:$0xff]
  %v2477 = vld [vmem:[%s691 + $0x10] sm:$0xff]
  %v2478 = vld [vmem:[%s691 + $0x18] sm:$0xff]
  %2479 = vmatprep.subr.mxu0 %v112
  %2480 = vmatpush1.msra.mxu0 %v111
  %2481 = vmatprep.subr.mxu0 %v116
  %2482 = vmatpush1.msra.mxu0 %v115
  %2483 = vmatprep.subr.mxu0 %v120
  %2484 = vmatpush1.msra.mxu0 %v119
  %2485 = vmatprep.subr.mxu0 %v124
  %2486 = vmatpush1.msra.mxu0 %v123
  %2487 = vmatprep.subr.mxu0 %v128
  %2488 = vmatpush1.msra.mxu0 %v127
  %2489 = vmatprep.subr.mxu0 %v132
  %2490 = vmatpush1.msra.mxu0 %v131
  %2491 = vmatprep.subr.mxu0 %v136
  %2492 = vmatpush1.msra.mxu0 %v135
  %2493 = vmatprep.subr.mxu0 %v140
  %2494 = vmatpush1.msra.mxu0 %v139
  %2495 = vmatprep.subr.mxu0 %v144
  %2496 = vmatpush1.msra.mxu0 %v143
  %2497 = vmatprep.subr.mxu0 %v148
  %2498 = vmatpush1.msra.mxu0 %v147
  %2499 = vmatprep.subr.mxu0 %v152
  %2500 = vmatpush1.msra.mxu0 %v151
  %2501 = vmatprep.subr.mxu0 %v156
  %2502 = vmatpush1.msra.mxu0 %v155
  %2503 = vmatprep.subr.mxu0 %v160
  %2504 = vmatpush1.msra.mxu0 %v159
  %2505 = vmatprep.subr.mxu0 %v164
  %2506 = vmatpush1.msra.mxu0 %v163
  %2507 = vmatprep.subr.mxu0 %v168
  %2508 = vmatpush1.msra.mxu0 %v167
  %2509 = vmatprep.subr.mxu0 %v172
  %2510 = vmatpush1.msra.mxu0 %v171
  %2511 = vmatprep.subr.mxu0 0.0
  %2512 = vmatpush1.msra.mxu0 0.0
  %2513 = vmatprep.subr.mxu0 0.0
  %2514 = vmatpush1.msra.mxu0 0.0
  %2515 = vmatprep.subr.mxu0 0.0
  %2516 = vmatpush1.msra.mxu0 0.0
  %2517 = vmatprep.subr.mxu0 0.0
  %2518 = vmatpush1.msra.mxu0 0.0
  %2519 = vmatprep.subr.mxu0 0.0
  %2520 = vmatpush1.msra.mxu0 0.0
  %2521 = vmatprep.subr.mxu0 0.0
  %2522 = vmatpush1.msra.mxu0 0.0
  %2523 = vmatprep.subr.mxu0 0.0
  %2524 = vmatpush1.msra.mxu0 0.0
  %2525 = vmatprep.subr.mxu0 0.0
  %2526 = vmatpush1.msra.mxu0 0.0
  %2527 = vmatprep.subr.mxu0 0.0
  %2528 = vmatpush1.msra.mxu0 0.0
  %2529 = vmatprep.subr.mxu0 0.0
  %2530 = vmatpush1.msra.mxu0 0.0
  %2531 = vmatprep.subr.mxu0 0.0
  %2532 = vmatpush1.msra.mxu0 0.0
  %2533 = vmatprep.subr.mxu0 0.0
  %2534 = vmatpush1.msra.mxu0 0.0
  %2535 = vmatprep.subr.mxu0 0.0
  %2536 = vmatpush1.msra.mxu0 0.0
  %2537 = vmatprep.subr.mxu0 0.0
  %2538 = vmatpush1.msra.mxu0 0.0
  %2539 = vmatprep.subr.mxu0 0.0
  %2540 = vmatpush1.msra.mxu0 0.0
  %2541 = vmatprep.subr.mxu0 0.0
  %2542 = vmatpush1.msra.mxu0 0.0
  %2543 = vmatprep.mubr.f32.mxu0 0.0
  %2544 = vmatmul.mubr.f32.gmra.mrb[0].mxu0 %v2473
  %v2545 = vpop.f32.mrb[0].mxu0
  %v2546 = vadd.f32 0.0, %v2545
  %v2547 = vpop.f32.mrb[0].mxu0
  %v2548 = vadd.f32 0.0, %v2547
  %2549 = vdwg.mxu0
  %2550 = vmatprep.subr.mxu0 %v114
  %2551 = vmatpush1.msra.mxu0 %v113
  %2552 = vmatprep.subr.mxu0 %v118
  %2553 = vmatpush1.msra.mxu0 %v117
  %2554 = vmatprep.subr.mxu0 %v122
  %2555 = vmatpush1.msra.mxu0 %v121
  %2556 = vmatprep.subr.mxu0 %v126
  %2557 = vmatpush1.msra.mxu0 %v125
  %2558 = vmatprep.subr.mxu0 %v130
  %2559 = vmatpush1.msra.mxu0 %v129
  %2560 = vmatprep.subr.mxu0 %v134
  %2561 = vmatpush1.msra.mxu0 %v133
  %2562 = vmatprep.subr.mxu0 %v138
  %2563 = vmatpush1.msra.mxu0 %v137
  %2564 = vmatprep.subr.mxu0 %v142
  %2565 = vmatpush1.msra.mxu0 %v141
  %2566 = vmatprep.subr.mxu0 %v146
  %2567 = vmatpush1.msra.mxu0 %v145
  %2568 = vmatprep.subr.mxu0 %v150
  %2569 = vmatpush1.msra.mxu0 %v149
  %2570 = vmatprep.subr.mxu0 %v154
  %2571 = vmatpush1.msra.mxu0 %v153
  %2572 = vmatprep.subr.mxu0 %v158
  %2573 = vmatpush1.msra.mxu0 %v157
  %2574 = vmatprep.subr.mxu0 %v162
  %2575 = vmatpush1.msra.mxu0 %v161
  %2576 = vmatprep.subr.mxu0 %v166
  %2577 = vmatpush1.msra.mxu0 %v165
  %2578 = vmatprep.subr.mxu0 %v170
  %2579 = vmatpush1.msra.mxu0 %v169
  %2580 = vmatprep.subr.mxu0 %v174
  %2581 = vmatpush1.msra.mxu0 %v173
  %2582 = vmatprep.subr.mxu0 0.0
  %2583 = vmatpush1.msra.mxu0 0.0
  %2584 = vmatprep.subr.mxu0 0.0
  %2585 = vmatpush1.msra.mxu0 0.0
  %2586 = vmatprep.subr.mxu0 0.0
  %2587 = vmatpush1.msra.mxu0 0.0
  %2588 = vmatprep.subr.mxu0 0.0
  %2589 = vmatpush1.msra.mxu0 0.0
  %2590 = vmatprep.subr.mxu0 0.0
  %2591 = vmatpush1.msra.mxu0 0.0
  %2592 = vmatprep.subr.mxu0 0.0
  %2593 = vmatpush1.msra.mxu0 0.0
  %2594 = vmatprep.subr.mxu0 0.0
  %2595 = vmatpush1.msra.mxu0 0.0
  %2596 = vmatprep.subr.mxu0 0.0
  %2597 = vmatpush1.msra.mxu0 0.0
  %2598 = vmatprep.subr.mxu0 0.0
  %2599 = vmatpush1.msra.mxu0 0.0
  %2600 = vmatprep.subr.mxu0 0.0
  %2601 = vmatpush1.msra.mxu0 0.0
  %2602 = vmatprep.subr.mxu0 0.0
  %2603 = vmatpush1.msra.mxu0 0.0
  %2604 = vmatprep.subr.mxu0 0.0
  %2605 = vmatpush1.msra.mxu0 0.0
  %2606 = vmatprep.subr.mxu0 0.0
  %2607 = vmatpush1.msra.mxu0 0.0
  %2608 = vmatprep.subr.mxu0 0.0
  %2609 = vmatpush1.msra.mxu0 0.0
  %2610 = vmatprep.subr.mxu0 0.0
  %2611 = vmatpush1.msra.mxu0 0.0
  %2612 = vmatprep.subr.mxu0 0.0
  %2613 = vmatpush1.msra.mxu0 0.0
  %2614 = vmatprep.mubr.f32.mxu0 0.0
  %2615 = vmatmul.mubr.f32.gmra.mrb[0].mxu0 %v2473
  %v2616 = vpop.f32.mrb[0].mxu0
  %v2617 = vadd.f32 0.0, %v2616
  %v2618 = vpop.f32.mrb[0].mxu0
  %v2619 = vadd.f32 0.0, %v2618
  %2620 = vdwg.mxu0
  %v2621 = vadd.f32 %v2475, %v2546
  %v2622 = vadd.f32 %v2476, %v2548
  %v2623 = vadd.f32 %v2477, %v2617
  %v2624 = vadd.f32 %v2478, %v2619
  %v2625 = vxor.u32 %v2621, 2147483648
  %v2626 = vmul.f32 %v2625, 1.442695
  %v2627 = vpow.pop %v2626
  %v2628 = vadd.f32 %v2627, 1.0
  %v2629 = vrcp.pop %v2628
  %v2630 = vmul.f32 1.0, %v2629
  %v2631 = vxor.u32 %v2622, 2147483648
  %v2632 = vmul.f32 %v2631, 1.442695
  %v2633 = vpow.pop %v2632
  %v2634 = vadd.f32 %v2633, 1.0
  %v2635 = vrcp.pop %v2634
  %v2636 = vmul.f32 1.0, %v2635
  %v2637 = vtanh.pop %v2623
  %v2638 = vxor.u32 %v2624, 2147483648
  %v2639 = vmul.f32 %v2638, 1.442695
  %v2640 = vpow.pop %v2639
  %v2641 = vadd.f32 %v2640, 1.0
  %v2642 = vrcp.pop %v2641
  %v2643 = vmul.f32 1.0, %v2642
  %v2644 = vmul.f32 %v2636, %v2471
  %v2645 = vmul.f32 %v2630, %v2637
  %v2646 = vadd.f32 %v2644, %v2645
  %v2647 = vtanh.pop %v2646
  %v2648 = vmul.f32 %v2643, %v2647
  %2649 = vst [vmem:[%s866] sm:$0xff] %v2648
  %v2650 = vld [vmem:[%s870] sm:$0xff]
  %v2651 = vld [vmem:[%s870 + $0x8] sm:$0xff]
  %v2652 = vld [vmem:[%s870 + $0x10] sm:$0xff]
  %v2653 = vld [vmem:[%s870 + $0x18] sm:$0xff]
  %2654 = vmatprep.subr.mxu0 %v112
  %2655 = vmatpush1.msra.mxu0 %v111
  %2656 = vmatprep.subr.mxu0 %v116
  %2657 = vmatpush1.msra.mxu0 %v115
  %2658 = vmatprep.subr.mxu0 %v120
  %2659 = vmatpush1.msra.mxu0 %v119
  %2660 = vmatprep.subr.mxu0 %v124
  %2661 = vmatpush1.msra.mxu0 %v123
  %2662 = vmatprep.subr.mxu0 %v128
  %2663 = vmatpush1.msra.mxu0 %v127
  %2664 = vmatprep.subr.mxu0 %v132
  %2665 = vmatpush1.msra.mxu0 %v131
  %2666 = vmatprep.subr.mxu0 %v136
  %2667 = vmatpush1.msra.mxu0 %v135
  %2668 = vmatprep.subr.mxu0 %v140
  %2669 = vmatpush1.msra.mxu0 %v139
  %2670 = vmatprep.subr.mxu0 %v144
  %2671 = vmatpush1.msra.mxu0 %v143
  %2672 = vmatprep.subr.mxu0 %v148
  %2673 = vmatpush1.msra.mxu0 %v147
  %2674 = vmatprep.subr.mxu0 %v152
  %2675 = vmatpush1.msra.mxu0 %v151
  %2676 = vmatprep.subr.mxu0 %v156
  %2677 = vmatpush1.msra.mxu0 %v155
  %2678 = vmatprep.subr.mxu0 %v160
  %2679 = vmatpush1.msra.mxu0 %v159
  %2680 = vmatprep.subr.mxu0 %v164
  %2681 = vmatpush1.msra.mxu0 %v163
  %2682 = vmatprep.subr.mxu0 %v168
  %2683 = vmatpush1.msra.mxu0 %v167
  %2684 = vmatprep.subr.mxu0 %v172
  %2685 = vmatpush1.msra.mxu0 %v171
  %2686 = vmatprep.subr.mxu0 0.0
  %2687 = vmatpush1.msra.mxu0 0.0
  %2688 = vmatprep.subr.mxu0 0.0
  %2689 = vmatpush1.msra.mxu0 0.0
  %2690 = vmatprep.subr.mxu0 0.0
  %2691 = vmatpush1.msra.mxu0 0.0
  %2692 = vmatprep.subr.mxu0 0.0
  %2693 = vmatpush1.msra.mxu0 0.0
  %2694 = vmatprep.subr.mxu0 0.0
  %2695 = vmatpush1.msra.mxu0 0.0
  %2696 = vmatprep.subr.mxu0 0.0
  %2697 = vmatpush1.msra.mxu0 0.0
  %2698 = vmatprep.subr.mxu0 0.0
  %2699 = vmatpush1.msra.mxu0 0.0
  %2700 = vmatprep.subr.mxu0 0.0
  %2701 = vmatpush1.msra.mxu0 0.0
  %2702 = vmatprep.subr.mxu0 0.0
  %2703 = vmatpush1.msra.mxu0 0.0
  %2704 = vmatprep.subr.mxu0 0.0
  %2705 = vmatpush1.msra.mxu0 0.0
  %2706 = vmatprep.subr.mxu0 0.0
  %2707 = vmatpush1.msra.mxu0 0.0
  %2708 = vmatprep.subr.mxu0 0.0
  %2709 = vmatpush1.msra.mxu0 0.0
  %2710 = vmatprep.subr.mxu0 0.0
  %2711 = vmatpush1.msra.mxu0 0.0
  %2712 = vmatprep.subr.mxu0 0.0
  %2713 = vmatpush1.msra.mxu0 0.0
  %2714 = vmatprep.subr.mxu0 0.0
  %2715 = vmatpush1.msra.mxu0 0.0
  %2716 = vmatprep.subr.mxu0 0.0
  %2717 = vmatpush1.msra.mxu0 0.0
  %2718 = vmatprep.mubr.f32.mxu0 0.0
  %2719 = vmatmul.mubr.f32.gmra.mrb[0].mxu0 %v2648
  %v2720 = vpop.f32.mrb[0].mxu0
  %v2721 = vadd.f32 0.0, %v2720
  %v2722 = vpop.f32.mrb[0].mxu0
  %v2723 = vadd.f32 0.0, %v2722
  %2724 = vdwg.mxu0
  %2725 = vmatprep.subr.mxu0 %v114
  %2726 = vmatpush1.msra.mxu0 %v113
  %2727 = vmatprep.subr.mxu0 %v118
  %2728 = vmatpush1.msra.mxu0 %v117
  %2729 = vmatprep.subr.mxu0 %v122
  %2730 = vmatpush1.msra.mxu0 %v121
  %2731 = vmatprep.subr.mxu0 %v126
  %2732 = vmatpush1.msra.mxu0 %v125
  %2733 = vmatprep.subr.mxu0 %v130
  %2734 = vmatpush1.msra.mxu0 %v129
  %2735 = vmatprep.subr.mxu0 %v134
  %2736 = vmatpush1.msra.mxu0 %v133
  %2737 = vmatprep.subr.mxu0 %v138
  %2738 = vmatpush1.msra.mxu0 %v137
  %2739 = vmatprep.subr.mxu0 %v142
  %2740 = vmatpush1.msra.mxu0 %v141
  %2741 = vmatprep.subr.mxu0 %v146
  %2742 = vmatpush1.msra.mxu0 %v145
  %2743 = vmatprep.subr.mxu0 %v150
  %2744 = vmatpush1.msra.mxu0 %v149
  %2745 = vmatprep.subr.mxu0 %v154
  %2746 = vmatpush1.msra.mxu0 %v153
  %2747 = vmatprep.subr.mxu0 %v158
  %2748 = vmatpush1.msra.mxu0 %v157
  %2749 = vmatprep.subr.mxu0 %v162
  %2750 = vmatpush1.msra.mxu0 %v161
  %2751 = vmatprep.subr.mxu0 %v166
  %2752 = vmatpush1.msra.mxu0 %v165
  %2753 = vmatprep.subr.mxu0 %v170
  %2754 = vmatpush1.msra.mxu0 %v169
  %2755 = vmatprep.subr.mxu0 %v174
  %2756 = vmatpush1.msra.mxu0 %v173
  %2757 = vmatprep.subr.mxu0 0.0
  %2758 = vmatpush1.msra.mxu0 0.0
  %2759 = vmatprep.subr.mxu0 0.0
  %2760 = vmatpush1.msra.mxu0 0.0
  %2761 = vmatprep.subr.mxu0 0.0
  %2762 = vmatpush1.msra.mxu0 0.0
  %2763 = vmatprep.subr.mxu0 0.0
  %2764 = vmatpush1.msra.mxu0 0.0
  %2765 = vmatprep.subr.mxu0 0.0
  %2766 = vmatpush1.msra.mxu0 0.0
  %2767 = vmatprep.subr.mxu0 0.0
  %2768 = vmatpush1.msra.mxu0 0.0
  %2769 = vmatprep.subr.mxu0 0.0
  %2770 = vmatpush1.msra.mxu0 0.0
  %2771 = vmatprep.subr.mxu0 0.0
  %2772 = vmatpush1.msra.mxu0 0.0
  %2773 = vmatprep.subr.mxu0 0.0
  %2774 = vmatpush1.msra.mxu0 0.0
  %2775 = vmatprep.subr.mxu0 0.0
  %2776 = vmatpush1.msra.mxu0 0.0
  %2777 = vmatprep.subr.mxu0 0.0
  %2778 = vmatpush1.msra.mxu0 0.0
  %2779 = vmatprep.subr.mxu0 0.0
  %2780 = vmatpush1.msra.mxu0 0.0
  %2781 = vmatprep.subr.mxu0 0.0
  %2782 = vmatpush1.msra.mxu0 0.0
  %2783 = vmatprep.subr.mxu0 0.0
  %2784 = vmatpush1.msra.mxu0 0.0
  %2785 = vmatprep.subr.mxu0 0.0
  %2786 = vmatpush1.msra.mxu0 0.0
  %2787 = vmatprep.subr.mxu0 0.0
  %2788 = vmatpush1.msra.mxu0 0.0
  %2789 = vmatprep.mubr.f32.mxu0 0.0
  %2790 = vmatmul.mubr.f32.gmra.mrb[0].mxu0 %v2648
  %v2791 = vpop.f32.mrb[0].mxu0
  %v2792 = vadd.f32 0.0, %v2791
  %v2793 = vpop.f32.mrb[0].mxu0
  %v2794 = vadd.f32 0.0, %v2793
  %2795 = vdwg.mxu0
  %v2796 = vadd.f32 %v2650, %v2721
  %v2797 = vadd.f32 %v2651, %v2723
  %v2798 = vadd.f32 %v2652, %v2792
  %v2799 = vadd.f32 %v2653, %v2794
  %v2800 = vxor.u32 %v2796, 2147483648
  %v2801 = vmul.f32 %v2800, 1.442695
  %v2802 = vpow.pop %v2801
  %v2803 = vadd.f32 %v2802, 1.0
  %v2804 = vrcp.pop %v2803
  %v2805 = vmul.f32 1.0, %v2804
  %v2806 = vxor.u32 %v2797, 2147483648
  %v2807 = vmul.f32 %v2806, 1.442695
  %v2808 = vpow.pop %v2807
  %v2809 = vadd.f32 %v2808, 1.0
  %v2810 = vrcp.pop %v2809
  %v2811 = vmul.f32 1.0, %v2810
  %v2812 = vtanh.pop %v2798
  %v2813 = vxor.u32 %v2799, 2147483648
  %v2814 = vmul.f32 %v2813, 1.442695
  %v2815 = vpow.pop %v2814
  %v2816 = vadd.f32 %v2815, 1.0
  %v2817 = vrcp.pop %v2816
  %v2818 = vmul.f32 1.0, %v2817
  %v2819 = vmul.f32 %v2811, %v2646
  %v2820 = vmul.f32 %v2805, %v2812
  %v2821 = vadd.f32 %v2819, %v2820
  %v2822 = vtanh.pop %v2821
  %v2823 = vmul.f32 %v2818, %v2822
  %2824 = vst [vmem:[%s1045] sm:$0xff] %v2823
  %v2825 = vld [vmem:[%s1049] sm:$0xff]
  %v2826 = vld [vmem:[%s1049 + $0x8] sm:$0xff]
  %v2827 = vld [vmem:[%s1049 + $0x10] sm:$0xff]
  %v2828 = vld [vmem:[%s1049 + $0x18] sm:$0xff]
  %2829 = vmatprep.subr.mxu0 %v112
  %2830 = vmatpush1.msra.mxu0 %v111
  %2831 = vmatprep.subr.mxu0 %v116
  %2832 = vmatpush1.msra.mxu0 %v115
  %2833 = vmatprep.subr.mxu0 %v120
  %2834 = vmatpush1.msra.mxu0 %v119
  %2835 = vmatprep.subr.mxu0 %v124
  %2836 = vmatpush1.msra.mxu0 %v123
  %2837 = vmatprep.subr.mxu0 %v128
  %2838 = vmatpush1.msra.mxu0 %v127
  %2839 = vmatprep.subr.mxu0 %v132
  %2840 = vmatpush1.msra.mxu0 %v131
  %2841 = vmatprep.subr.mxu0 %v136
  %2842 = vmatpush1.msra.mxu0 %v135
  %2843 = vmatprep.subr.mxu0 %v140
  %2844 = vmatpush1.msra.mxu0 %v139
  %2845 = vmatprep.subr.mxu0 %v144
  %2846 = vmatpush1.msra.mxu0 %v143
  %2847 = vmatprep.subr.mxu0 %v148
  %2848 = vmatpush1.msra.mxu0 %v147
  %2849 = vmatprep.subr.mxu0 %v152
  %2850 = vmatpush1.msra.mxu0 %v151
  %2851 = vmatprep.subr.mxu0 %v156
  %2852 = vmatpush1.msra.mxu0 %v155
  %2853 = vmatprep.subr.mxu0 %v160
  %2854 = vmatpush1.msra.mxu0 %v159
  %2855 = vmatprep.subr.mxu0 %v164
  %2856 = vmatpush1.msra.mxu0 %v163
  %2857 = vmatprep.subr.mxu0 %v168
  %2858 = vmatpush1.msra.mxu0 %v167
  %2859 = vmatprep.subr.mxu0 %v172
  %2860 = vmatpush1.msra.mxu0 %v171
  %2861 = vmatprep.subr.mxu0 0.0
  %2862 = vmatpush1.msra.mxu0 0.0
  %2863 = vmatprep.subr.mxu0 0.0
  %2864 = vmatpush1.msra.mxu0 0.0
  %2865 = vmatprep.subr.mxu0 0.0
  %2866 = vmatpush1.msra.mxu0 0.0
  %2867 = vmatprep.subr.mxu0 0.0
  %2868 = vmatpush1.msra.mxu0 0.0
  %2869 = vmatprep.subr.mxu0 0.0
  %2870 = vmatpush1.msra.mxu0 0.0
  %2871 = vmatprep.subr.mxu0 0.0
  %2872 = vmatpush1.msra.mxu0 0.0
  %2873 = vmatprep.subr.mxu0 0.0
  %2874 = vmatpush1.msra.mxu0 0.0
  %2875 = vmatprep.subr.mxu0 0.0
  %2876 = vmatpush1.msra.mxu0 0.0
  %2877 = vmatprep.subr.mxu0 0.0
  %2878 = vmatpush1.msra.mxu0 0.0
  %2879 = vmatprep.subr.mxu0 0.0
  %2880 = vmatpush1.msra.mxu0 0.0
  %2881 = vmatprep.subr.mxu0 0.0
  %2882 = vmatpush1.msra.mxu0 0.0
  %2883 = vmatprep.subr.mxu0 0.0
  %2884 = vmatpush1.msra.mxu0 0.0
  %2885 = vmatprep.subr.mxu0 0.0
  %2886 = vmatpush1.msra.mxu0 0.0
  %2887 = vmatprep.subr.mxu0 0.0
  %2888 = vmatpush1.msra.mxu0 0.0
  %2889 = vmatprep.subr.mxu0 0.0
  %2890 = vmatpush1.msra.mxu0 0.0
  %2891 = vmatprep.subr.mxu0 0.0
  %2892 = vmatpush1.msra.mxu0 0.0
  %2893 = vmatprep.mubr.f32.mxu0 0.0
  %2894 = vmatmul.mubr.f32.gmra.mrb[0].mxu0 %v2823
  %v2895 = vpop.f32.mrb[0].mxu0
  %v2896 = vadd.f32 0.0, %v2895
  %v2897 = vpop.f32.mrb[0].mxu0
  %v2898 = vadd.f32 0.0, %v2897
  %2899 = vdwg.mxu0
  %2900 = vmatprep.subr.mxu0 %v114
  %2901 = vmatpush1.msra.mxu0 %v113
  %2902 = vmatprep.subr.mxu0 %v118
  %2903 = vmatpush1.msra.mxu0 %v117
  %2904 = vmatprep.subr.mxu0 %v122
  %2905 = vmatpush1.msra.mxu0 %v121
  %2906 = vmatprep.subr.mxu0 %v126
  %2907 = vmatpush1.msra.mxu0 %v125
  %2908 = vmatprep.subr.mxu0 %v130
  %2909 = vmatpush1.msra.mxu0 %v129
  %2910 = vmatprep.subr.mxu0 %v134
  %2911 = vmatpush1.msra.mxu0 %v133
  %2912 = vmatprep.subr.mxu0 %v138
  %2913 = vmatpush1.msra.mxu0 %v137
  %2914 = vmatprep.subr.mxu0 %v142
  %2915 = vmatpush1.msra.mxu0 %v141
  %2916 = vmatprep.subr.mxu0 %v146
  %2917 = vmatpush1.msra.mxu0 %v145
  %2918 = vmatprep.subr.mxu0 %v150
  %2919 = vmatpush1.msra.mxu0 %v149
  %2920 = vmatprep.subr.mxu0 %v154
  %2921 = vmatpush1.msra.mxu0 %v153
  %2922 = vmatprep.subr.mxu0 %v158
  %2923 = vmatpush1.msra.mxu0 %v157
  %2924 = vmatprep.subr.mxu0 %v162
  %2925 = vmatpush1.msra.mxu0 %v161
  %2926 = vmatprep.subr.mxu0 %v166
  %2927 = vmatpush1.msra.mxu0 %v165
  %2928 = vmatprep.subr.mxu0 %v170
  %2929 = vmatpush1.msra.mxu0 %v169
  %2930 = vmatprep.subr.mxu0 %v174
  %2931 = vmatpush1.msra.mxu0 %v173
  %2932 = vmatprep.subr.mxu0 0.0
  %2933 = vmatpush1.msra.mxu0 0.0
  %2934 = vmatprep.subr.mxu0 0.0
  %2935 = vmatpush1.msra.mxu0 0.0
  %2936 = vmatprep.subr.mxu0 0.0
  %2937 = vmatpush1.msra.mxu0 0.0
  %2938 = vmatprep.subr.mxu0 0.0
  %2939 = vmatpush1.msra.mxu0 0.0
  %2940 = vmatprep.subr.mxu0 0.0
  %2941 = vmatpush1.msra.mxu0 0.0
  %2942 = vmatprep.subr.mxu0 0.0
  %2943 = vmatpush1.msra.mxu0 0.0
  %2944 = vmatprep.subr.mxu0 0.0
  %2945 = vmatpush1.msra.mxu0 0.0
  %2946 = vmatprep.subr.mxu0 0.0
  %2947 = vmatpush1.msra.mxu0 0.0
  %2948 = vmatprep.subr.mxu0 0.0
  %2949 = vmatpush1.msra.mxu0 0.0
  %2950 = vmatprep.subr.mxu0 0.0
  %2951 = vmatpush1.msra.mxu0 0.0
  %2952 = vmatprep.subr.mxu0 0.0
  %2953 = vmatpush1.msra.mxu0 0.0
  %2954 = vmatprep.subr.mxu0 0.0
  %2955 = vmatpush1.msra.mxu0 0.0
  %2956 = vmatprep.subr.mxu0 0.0
  %2957 = vmatpush1.msra.mxu0 0.0
  %2958 = vmatprep.subr.mxu0 0.0
  %2959 = vmatpush1.msra.mxu0 0.0
  %2960 = vmatprep.subr.mxu0 0.0
  %2961 = vmatpush1.msra.mxu0 0.0
  %2962 = vmatprep.subr.mxu0 0.0
  %2963 = vmatpush1.msra.mxu0 0.0
  %2964 = vmatprep.mubr.f32.mxu0 0.0
  %2965 = vmatmul.mubr.f32.gmra.mrb[0].mxu0 %v2823
  %v2966 = vpop.f32.mrb[0].mxu0
  %v2967 = vadd.f32 0.0, %v2966
  %v2968 = vpop.f32.mrb[0].mxu0
  %v2969 = vadd.f32 0.0, %v2968
  %2970 = vdwg.mxu0
  %v2971 = vadd.f32 %v2825, %v2896
  %v2972 = vadd.f32 %v2826, %v2898
  %v2973 = vadd.f32 %v2827, %v2967
  %v2974 = vadd.f32 %v2828, %v2969
  %v2975 = vxor.u32 %v2971, 2147483648
  %v2976 = vmul.f32 %v2975, 1.442695
  %v2977 = vpow.pop %v2976
  %v2978 = vadd.f32 %v2977, 1.0
  %v2979 = vrcp.pop %v2978
  %v2980 = vmul.f32 1.0, %v2979
  %v2981 = vxor.u32 %v2972, 2147483648
  %v2982 = vmul.f32 %v2981, 1.442695
  %v2983 = vpow.pop %v2982
  %v2984 = vadd.f32 %v2983, 1.0
  %v2985 = vrcp.pop %v2984
  %v2986 = vmul.f32 1.0, %v2985
  %v2987 = vtanh.pop %v2973
  %v2988 = vxor.u32 %v2974, 2147483648
  %v2989 = vmul.f32 %v2988, 1.442695
  %v2990 = vpow.pop %v2989
  %v2991 = vadd.f32 %v2990, 1.0
  %v2992 = vrcp.pop %v2991
  %v2993 = vmul.f32 1.0, %v2992
  %v2994 = vmul.f32 %v2986, %v2821
  %v2995 = vmul.f32 %v2980, %v2987
  %v2996 = vadd.f32 %v2994, %v2995
  %v2997 = vtanh.pop %v2996
  %v2998 = vmul.f32 %v2993, %v2997
  %2999 = vst [vmem:[%s1224] sm:$0xff] %v2998
  %v3000 = vld [vmem:[%s1228] sm:$0xff]
  %v3001 = vld [vmem:[%s1228 + $0x8] sm:$0xff]
  %v3002 = vld [vmem:[%s1228 + $0x10] sm:$0xff]
  %v3003 = vld [vmem:[%s1228 + $0x18] sm:$0xff]
  %3004 = vmatprep.subr.mxu0 %v112
  %3005 = vmatpush1.msra.mxu0 %v111
  %3006 = vmatprep.subr.mxu0 %v116
  %3007 = vmatpush1.msra.mxu0 %v115
  %3008 = vmatprep.subr.mxu0 %v120
  %3009 = vmatpush1.msra.mxu0 %v119
  %3010 = vmatprep.subr.mxu0 %v124
  %3011 = vmatpush1.msra.mxu0 %v123
  %3012 = vmatprep.subr.mxu0 %v128
  %3013 = vmatpush1.msra.mxu0 %v127
  %3014 = vmatprep.subr.mxu0 %v132
  %3015 = vmatpush1.msra.mxu0 %v131
  %3016 = vmatprep.subr.mxu0 %v136
  %3017 = vmatpush1.msra.mxu0 %v135
  %3018 = vmatprep.subr.mxu0 %v140
  %3019 = vmatpush1.msra.mxu0 %v139
  %3020 = vmatprep.subr.mxu0 %v144
  %3021 = vmatpush1.msra.mxu0 %v143
  %3022 = vmatprep.subr.mxu0 %v148
  %3023 = vmatpush1.msra.mxu0 %v147
  %3024 = vmatprep.subr.mxu0 %v152
  %3025 = vmatpush1.msra.mxu0 %v151
  %3026 = vmatprep.subr.mxu0 %v156
  %3027 = vmatpush1.msra.mxu0 %v155
  %3028 = vmatprep.subr.mxu0 %v160
  %3029 = vmatpush1.msra.mxu0 %v159
  %3030 = vmatprep.subr.mxu0 %v164
  %3031 = vmatpush1.msra.mxu0 %v163
  %3032 = vmatprep.subr.mxu0 %v168
  %3033 = vmatpush1.msra.mxu0 %v167
  %3034 = vmatprep.subr.mxu0 %v172
  %3035 = vmatpush1.msra.mxu0 %v171
  %3036 = vmatprep.subr.mxu0 0.0
  %3037 = vmatpush1.msra.mxu0 0.0
  %3038 = vmatprep.subr.mxu0 0.0
  %3039 = vmatpush1.msra.mxu0 0.0
  %3040 = vmatprep.subr.mxu0 0.0
  %3041 = vmatpush1.msra.mxu0 0.0
  %3042 = vmatprep.subr.mxu0 0.0
  %3043 = vmatpush1.msra.mxu0 0.0
  %3044 = vmatprep.subr.mxu0 0.0
  %3045 = vmatpush1.msra.mxu0 0.0
  %3046 = vmatprep.subr.mxu0 0.0
  %3047 = vmatpush1.msra.mxu0 0.0
  %3048 = vmatprep.subr.mxu0 0.0
  %3049 = vmatpush1.msra.mxu0 0.0
  %3050 = vmatprep.subr.mxu0 0.0
  %3051 = vmatpush1.msra.mxu0 0.0
  %3052 = vmatprep.subr.mxu0 0.0
  %3053 = vmatpush1.msra.mxu0 0.0
  %3054 = vmatprep.subr.mxu0 0.0
  %3055 = vmatpush1.msra.mxu0 0.0
  %3056 = vmatprep.subr.mxu0 0.0
  %3057 = vmatpush1.msra.mxu0 0.0
  %3058 = vmatprep.subr.mxu0 0.0
  %3059 = vmatpush1.msra.mxu0 0.0
  %3060 = vmatprep.subr.mxu0 0.0
  %3061 = vmatpush1.msra.mxu0 0.0
  %3062 = vmatprep.subr.mxu0 0.0
  %3063 = vmatpush1.msra.mxu0 0.0
  %3064 = vmatprep.subr.mxu0 0.0
  %3065 = vmatpush1.msra.mxu0 0.0
  %3066 = vmatprep.subr.mxu0 0.0
  %3067 = vmatpush1.msra.mxu0 0.0
  %3068 = vmatprep.mubr.f32.mxu0 0.0
  %3069 = vmatmul.mubr.f32.gmra.mrb[0].mxu0 %v2998
  %v3070 = vpop.f32.mrb[0].mxu0
  %v3071 = vadd.f32 0.0, %v3070
  %v3072 = vpop.f32.mrb[0].mxu0
  %v3073 = vadd.f32 0.0, %v3072
  %3074 = vdwg.mxu0
  %3075 = vmatprep.subr.mxu0 %v114
  %3076 = vmatpush1.msra.mxu0 %v113
  %3077 = vmatprep.subr.mxu0 %v118
  %3078 = vmatpush1.msra.mxu0 %v117
  %3079 = vmatprep.subr.mxu0 %v122
  %3080 = vmatpush1.msra.mxu0 %v121
  %3081 = vmatprep.subr.mxu0 %v126
  %3082 = vmatpush1.msra.mxu0 %v125
  %3083 = vmatprep.subr.mxu0 %v130
  %3084 = vmatpush1.msra.mxu0 %v129
  %3085 = vmatprep.subr.mxu0 %v134
  %3086 = vmatpush1.msra.mxu0 %v133
  %3087 = vmatprep.subr.mxu0 %v138
  %3088 = vmatpush1.msra.mxu0 %v137
  %3089 = vmatprep.subr.mxu0 %v142
  %3090 = vmatpush1.msra.mxu0 %v141
  %3091 = vmatprep.subr.mxu0 %v146
  %3092 = vmatpush1.msra.mxu0 %v145
  %3093 = vmatprep.subr.mxu0 %v150
  %3094 = vmatpush1.msra.mxu0 %v149
  %3095 = vmatprep.subr.mxu0 %v154
  %3096 = vmatpush1.msra.mxu0 %v153
  %3097 = vmatprep.subr.mxu0 %v158
  %3098 = vmatpush1.msra.mxu0 %v157
  %3099 = vmatprep.subr.mxu0 %v162
  %3100 = vmatpush1.msra.mxu0 %v161
  %3101 = vmatprep.subr.mxu0 %v166
  %3102 = vmatpush1.msra.mxu0 %v165
  %3103 = vmatprep.subr.mxu0 %v170
  %3104 = vmatpush1.msra.mxu0 %v169
  %3105 = vmatprep.subr.mxu0 %v174
  %3106 = vmatpush1.msra.mxu0 %v173
  %3107 = vmatprep.subr.mxu0 0.0
  %3108 = vmatpush1.msra.mxu0 0.0
  %3109 = vmatprep.subr.mxu0 0.0
  %3110 = vmatpush1.msra.mxu0 0.0
  %3111 = vmatprep.subr.mxu0 0.0
  %3112 = vmatpush1.msra.mxu0 0.0
  %3113 = vmatprep.subr.mxu0 0.0
  %3114 = vmatpush1.msra.mxu0 0.0
  %3115 = vmatprep.subr.mxu0 0.0
  %3116 = vmatpush1.msra.mxu0 0.0
  %3117 = vmatprep.subr.mxu0 0.0
  %3118 = vmatpush1.msra.mxu0 0.0
  %3119 = vmatprep.subr.mxu0 0.0
  %3120 = vmatpush1.msra.mxu0 0.0
  %3121 = vmatprep.subr.mxu0 0.0
  %3122 = vmatpush1.msra.mxu0 0.0
  %3123 = vmatprep.subr.mxu0 0.0
  %3124 = vmatpush1.msra.mxu0 0.0
  %3125 = vmatprep.subr.mxu0 0.0
  %3126 = vmatpush1.msra.mxu0 0.0
  %3127 = vmatprep.subr.mxu0 0.0
  %3128 = vmatpush1.msra.mxu0 0.0
  %3129 = vmatprep.subr.mxu0 0.0
  %3130 = vmatpush1.msra.mxu0 0.0
  %3131 = vmatprep.subr.mxu0 0.0
  %3132 = vmatpush1.msra.mxu0 0.0
  %3133 = vmatprep.subr.mxu0 0.0
  %3134 = vmatpush1.msra.mxu0 0.0
  %3135 = vmatprep.subr.mxu0 0.0
  %3136 = vmatpush1.msra.mxu0 0.0
  %3137 = vmatprep.subr.mxu0 0.0
  %3138 = vmatpush1.msra.mxu0 0.0
  %3139 = vmatprep.mubr.f32.mxu0 0.0
  %3140 = vmatmul.mubr.f32.gmra.mrb[0].mxu0 %v2998
  %v3141 = vpop.f32.mrb[0].mxu0
  %v3142 = vadd.f32 0.0, %v3141
  %v3143 = vpop.f32.mrb[0].mxu0
  %v3144 = vadd.f32 0.0, %v3143
  %3145 = vdwg.mxu0
  %v3146 = vadd.f32 %v3000, %v3071
  %v3147 = vadd.f32 %v3001, %v3073
  %v3148 = vadd.f32 %v3002, %v3142
  %v3149 = vadd.f32 %v3003, %v3144
  %v3150 = vxor.u32 %v3146, 2147483648
  %v3151 = vmul.f32 %v3150, 1.442695
  %v3152 = vpow.pop %v3151
  %v3153 = vadd.f32 %v3152, 1.0
  %v3154 = vrcp.pop %v3153
  %v3155 = vmul.f32 1.0, %v3154
  %v3156 = vxor.u32 %v3147, 2147483648
  %v3157 = vmul.f32 %v3156, 1.442695
  %v3158 = vpow.pop %v3157
  %v3159 = vadd.f32 %v3158, 1.0
  %v3160 = vrcp.pop %v3159
  %v3161 = vmul.f32 1.0, %v3160
  %v3162 = vtanh.pop %v3148
  %v3163 = vxor.u32 %v3149, 2147483648
  %v3164 = vmul.f32 %v3163, 1.442695
  %v3165 = vpow.pop %v3164
  %v3166 = vadd.f32 %v3165, 1.0
  %v3167 = vrcp.pop %v3166
  %v3168 = vmul.f32 1.0, %v3167
  %v3169 = vmul.f32 %v3161, %v2996
  %v3170 = vmul.f32 %v3155, %v3162
  %v3171 = vadd.f32 %v3169, %v3170
  %v3172 = vtanh.pop %v3171
  %v3173 = vmul.f32 %v3168, %v3172
  %3174 = vst [vmem:[%s1403] sm:$0xff] %v3173
  %v3175 = vld [vmem:[%s1407] sm:$0xff]
  %v3176 = vld [vmem:[%s1407 + $0x8] sm:$0xff]
  %v3177 = vld [vmem:[%s1407 + $0x10] sm:$0xff]
  %v3178 = vld [vmem:[%s1407 + $0x18] sm:$0xff]
  %3179 = vmatprep.subr.mxu0 %v112
  %3180 = vmatpush1.msra.mxu0 %v111
  %3181 = vmatprep.subr.mxu0 %v116
  %3182 = vmatpush1.msra.mxu0 %v115
  %3183 = vmatprep.subr.mxu0 %v120
  %3184 = vmatpush1.msra.mxu0 %v119
  %3185 = vmatprep.subr.mxu0 %v124
  %3186 = vmatpush1.msra.mxu0 %v123
  %3187 = vmatprep.subr.mxu0 %v128
  %3188 = vmatpush1.msra.mxu0 %v127
  %3189 = vmatprep.subr.mxu0 %v132
  %3190 = vmatpush1.msra.mxu0 %v131
  %3191 = vmatprep.subr.mxu0 %v136
  %3192 = vmatpush1.msra.mxu0 %v135
  %3193 = vmatprep.subr.mxu0 %v140
  %3194 = vmatpush1.msra.mxu0 %v139
  %3195 = vmatprep.subr.mxu0 %v144
  %3196 = vmatpush1.msra.mxu0 %v143
  %3197 = vmatprep.subr.mxu0 %v148
  %3198 = vmatpush1.msra.mxu0 %v147
  %3199 = vmatprep.subr.mxu0 %v152
  %3200 = vmatpush1.msra.mxu0 %v151
  %3201 = vmatprep.subr.mxu0 %v156
  %3202 = vmatpush1.msra.mxu0 %v155
  %3203 = vmatprep.subr.mxu0 %v160
  %3204 = vmatpush1.msra.mxu0 %v159
  %3205 = vmatprep.subr.mxu0 %v164
  %3206 = vmatpush1.msra.mxu0 %v163
  %3207 = vmatprep.subr.mxu0 %v168
  %3208 = vmatpush1.msra.mxu0 %v167
  %3209 = vmatprep.subr.mxu0 %v172
  %3210 = vmatpush1.msra.mxu0 %v171
  %3211 = vmatprep.subr.mxu0 0.0
  %3212 = vmatpush1.msra.mxu0 0.0
  %3213 = vmatprep.subr.mxu0 0.0
  %3214 = vmatpush1.msra.mxu0 0.0
  %3215 = vmatprep.subr.mxu0 0.0
  %3216 = vmatpush1.msra.mxu0 0.0
  %3217 = vmatprep.subr.mxu0 0.0
  %3218 = vmatpush1.msra.mxu0 0.0
  %3219 = vmatprep.subr.mxu0 0.0
  %3220 = vmatpush1.msra.mxu0 0.0
  %3221 = vmatprep.subr.mxu0 0.0
  %3222 = vmatpush1.msra.mxu0 0.0
  %3223 = vmatprep.subr.mxu0 0.0
  %3224 = vmatpush1.msra.mxu0 0.0
  %3225 = vmatprep.subr.mxu0 0.0
  %3226 = vmatpush1.msra.mxu0 0.0
  %3227 = vmatprep.subr.mxu0 0.0
  %3228 = vmatpush1.msra.mxu0 0.0
  %3229 = vmatprep.subr.mxu0 0.0
  %3230 = vmatpush1.msra.mxu0 0.0
  %3231 = vmatprep.subr.mxu0 0.0
  %3232 = vmatpush1.msra.mxu0 0.0
  %3233 = vmatprep.subr.mxu0 0.0
  %3234 = vmatpush1.msra.mxu0 0.0
  %3235 = vmatprep.subr.mxu0 0.0
  %3236 = vmatpush1.msra.mxu0 0.0
  %3237 = vmatprep.subr.mxu0 0.0
  %3238 = vmatpush1.msra.mxu0 0.0
  %3239 = vmatprep.subr.mxu0 0.0
  %3240 = vmatpush1.msra.mxu0 0.0
  %3241 = vmatprep.subr.mxu0 0.0
  %3242 = vmatpush1.msra.mxu0 0.0
  %3243 = vmatprep.mubr.f32.mxu0 0.0
  %3244 = vmatmul.mubr.f32.gmra.mrb[0].mxu0 %v3173
  %v3245 = vpop.f32.mrb[0].mxu0
  %v3246 = vadd.f32 0.0, %v3245
  %v3247 = vpop.f32.mrb[0].mxu0
  %v3248 = vadd.f32 0.0, %v3247
  %3249 = vdwg.mxu0
  %3250 = vmatprep.subr.mxu0 %v114
  %3251 = vmatpush1.msra.mxu0 %v113
  %3252 = vmatprep.subr.mxu0 %v118
  %3253 = vmatpush1.msra.mxu0 %v117
  %3254 = vmatprep.subr.mxu0 %v122
  %3255 = vmatpush1.msra.mxu0 %v121
  %3256 = vmatprep.subr.mxu0 %v126
  %3257 = vmatpush1.msra.mxu0 %v125
  %3258 = vmatprep.subr.mxu0 %v130
  %3259 = vmatpush1.msra.mxu0 %v129
  %3260 = vmatprep.subr.mxu0 %v134
  %3261 = vmatpush1.msra.mxu0 %v133
  %3262 = vmatprep.subr.mxu0 %v138
  %3263 = vmatpush1.msra.mxu0 %v137
  %3264 = vmatprep.subr.mxu0 %v142
  %3265 = vmatpush1.msra.mxu0 %v141
  %3266 = vmatprep.subr.mxu0 %v146
  %3267 = vmatpush1.msra.mxu0 %v145
  %3268 = vmatprep.subr.mxu0 %v150
  %3269 = vmatpush1.msra.mxu0 %v149
  %3270 = vmatprep.subr.mxu0 %v154
  %3271 = vmatpush1.msra.mxu0 %v153
  %3272 = vmatprep.subr.mxu0 %v158
  %3273 = vmatpush1.msra.mxu0 %v157
  %3274 = vmatprep.subr.mxu0 %v162
  %3275 = vmatpush1.msra.mxu0 %v161
  %3276 = vmatprep.subr.mxu0 %v166
  %3277 = vmatpush1.msra.mxu0 %v165
  %3278 = vmatprep.subr.mxu0 %v170
  %3279 = vmatpush1.msra.mxu0 %v169
  %3280 = vmatprep.subr.mxu0 %v174
  %3281 = vmatpush1.msra.mxu0 %v173
  %3282 = vmatprep.subr.mxu0 0.0
  %3283 = vmatpush1.msra.mxu0 0.0
  %3284 = vmatprep.subr.mxu0 0.0
  %3285 = vmatpush1.msra.mxu0 0.0
  %3286 = vmatprep.subr.mxu0 0.0
  %3287 = vmatpush1.msra.mxu0 0.0
  %3288 = vmatprep.subr.mxu0 0.0
  %3289 = vmatpush1.msra.mxu0 0.0
  %3290 = vmatprep.subr.mxu0 0.0
  %3291 = vmatpush1.msra.mxu0 0.0
  %3292 = vmatprep.subr.mxu0 0.0
  %3293 = vmatpush1.msra.mxu0 0.0
  %3294 = vmatprep.subr.mxu0 0.0
  %3295 = vmatpush1.msra.mxu0 0.0
  %3296 = vmatprep.subr.mxu0 0.0
  %3297 = vmatpush1.msra.mxu0 0.0
  %3298 = vmatprep.subr.mxu0 0.0
  %3299 = vmatpush1.msra.mxu0 0.0
  %3300 = vmatprep.subr.mxu0 0.0
  %3301 = vmatpush1.msra.mxu0 0.0
  %3302 = vmatprep.subr.mxu0 0.0
  %3303 = vmatpush1.msra.mxu0 0.0
  %3304 = vmatprep.subr.mxu0 0.0
  %3305 = vmatpush1.msra.mxu0 0.0
  %3306 = vmatprep.subr.mxu0 0.0
  %3307 = vmatpush1.msra.mxu0 0.0
  %3308 = vmatprep.subr.mxu0 0.0
  %3309 = vmatpush1.msra.mxu0 0.0
  %3310 = vmatprep.subr.mxu0 0.0
  %3311 = vmatpush1.msra.mxu0 0.0
  %3312 = vmatprep.subr.mxu0 0.0
  %3313 = vmatpush1.msra.mxu0 0.0
  %3314 = vmatprep.mubr.f32.mxu0 0.0
  %3315 = vmatmul.mubr.f32.gmra.mrb[0].mxu0 %v3173
  %v3316 = vpop.f32.mrb[0].mxu0
  %v3317 = vadd.f32 0.0, %v3316
  %v3318 = vpop.f32.mrb[0].mxu0
  %v3319 = vadd.f32 0.0, %v3318
  %3320 = vdwg.mxu0
  %v3321 = vadd.f32 %v3175, %v3246
  %v3322 = vadd.f32 %v3176, %v3248
  %v3323 = vadd.f32 %v3177, %v3317
  %v3324 = vadd.f32 %v3178, %v3319
  %v3325 = vxor.u32 %v3321, 2147483648
  %v3326 = vmul.f32 %v3325, 1.442695
  %v3327 = vpow.pop %v3326
  %v3328 = vadd.f32 %v3327, 1.0
  %v3329 = vrcp.pop %v3328
  %v3330 = vmul.f32 1.0, %v3329
  %v3331 = vxor.u32 %v3322, 2147483648
  %v3332 = vmul.f32 %v3331, 1.442695
  %v3333 = vpow.pop %v3332
  %v3334 = vadd.f32 %v3333, 1.0
  %v3335 = vrcp.pop %v3334
  %v3336 = vmul.f32 1.0, %v3335
  %v3337 = vtanh.pop %v3323
  %v3338 = vxor.u32 %v3324, 2147483648
  %v3339 = vmul.f32 %v3338, 1.442695
  %v3340 = vpow.pop %v3339
  %v3341 = vadd.f32 %v3340, 1.0
  %v3342 = vrcp.pop %v3341
  %v3343 = vmul.f32 1.0, %v3342
  %v3344 = vmul.f32 %v3336, %v3171
  %v3345 = vmul.f32 %v3330, %v3337
  %v3346 = vadd.f32 %v3344, %v3345
  %v3347 = vtanh.pop %v3346
  %v3348 = vmul.f32 %v3343, %v3347
  %3349 = vst [vmem:[%s1582] sm:$0xff] %v3348
  %v3350 = vld [vmem:[%s1586] sm:$0xff]
  %v3351 = vld [vmem:[%s1586 + $0x8] sm:$0xff]
  %v3352 = vld [vmem:[%s1586 + $0x10] sm:$0xff]
  %v3353 = vld [vmem:[%s1586 + $0x18] sm:$0xff]
  %3354 = vmatprep.subr.mxu0 %v112
  %3355 = vmatpush1.msra.mxu0 %v111
  %3356 = vmatprep.subr.mxu0 %v116
  %3357 = vmatpush1.msra.mxu0 %v115
  %3358 = vmatprep.subr.mxu0 %v120
  %3359 = vmatpush1.msra.mxu0 %v119
  %3360 = vmatprep.subr.mxu0 %v124
  %3361 = vmatpush1.msra.mxu0 %v123
  %3362 = vmatprep.subr.mxu0 %v128
  %3363 = vmatpush1.msra.mxu0 %v127
  %3364 = vmatprep.subr.mxu0 %v132
  %3365 = vmatpush1.msra.mxu0 %v131
  %3366 = vmatprep.subr.mxu0 %v136
  %3367 = vmatpush1.msra.mxu0 %v135
  %3368 = vmatprep.subr.mxu0 %v140
  %3369 = vmatpush1.msra.mxu0 %v139
  %3370 = vmatprep.subr.mxu0 %v144
  %3371 = vmatpush1.msra.mxu0 %v143
  %3372 = vmatprep.subr.mxu0 %v148
  %3373 = vmatpush1.msra.mxu0 %v147
  %3374 = vmatprep.subr.mxu0 %v152
  %3375 = vmatpush1.msra.mxu0 %v151
  %3376 = vmatprep.subr.mxu0 %v156
  %3377 = vmatpush1.msra.mxu0 %v155
  %3378 = vmatprep.subr.mxu0 %v160
  %3379 = vmatpush1.msra.mxu0 %v159
  %3380 = vmatprep.subr.mxu0 %v164
  %3381 = vmatpush1.msra.mxu0 %v163
  %3382 = vmatprep.subr.mxu0 %v168
  %3383 = vmatpush1.msra.mxu0 %v167
  %3384 = vmatprep.subr.mxu0 %v172
  %3385 = vmatpush1.msra.mxu0 %v171
  %3386 = vmatprep.subr.mxu0 0.0
  %3387 = vmatpush1.msra.mxu0 0.0
  %3388 = vmatprep.subr.mxu0 0.0
  %3389 = vmatpush1.msra.mxu0 0.0
  %3390 = vmatprep.subr.mxu0 0.0
  %3391 = vmatpush1.msra.mxu0 0.0
  %3392 = vmatprep.subr.mxu0 0.0
  %3393 = vmatpush1.msra.mxu0 0.0
  %3394 = vmatprep.subr.mxu0 0.0
  %3395 = vmatpush1.msra.mxu0 0.0
  %3396 = vmatprep.subr.mxu0 0.0
  %3397 = vmatpush1.msra.mxu0 0.0
  %3398 = vmatprep.subr.mxu0 0.0
  %3399 = vmatpush1.msra.mxu0 0.0
  %3400 = vmatprep.subr.mxu0 0.0
  %3401 = vmatpush1.msra.mxu0 0.0
  %3402 = vmatprep.subr.mxu0 0.0
  %3403 = vmatpush1.msra.mxu0 0.0
  %3404 = vmatprep.subr.mxu0 0.0
  %3405 = vmatpush1.msra.mxu0 0.0
  %3406 = vmatprep.subr.mxu0 0.0
  %3407 = vmatpush1.msra.mxu0 0.0
  %3408 = vmatprep.subr.mxu0 0.0
  %3409 = vmatpush1.msra.mxu0 0.0
  %3410 = vmatprep.subr.mxu0 0.0
  %3411 = vmatpush1.msra.mxu0 0.0
  %3412 = vmatprep.subr.mxu0 0.0
  %3413 = vmatpush1.msra.mxu0 0.0
  %3414 = vmatprep.subr.mxu0 0.0
  %3415 = vmatpush1.msra.mxu0 0.0
  %3416 = vmatprep.subr.mxu0 0.0
  %3417 = vmatpush1.msra.mxu0 0.0
  %3418 = vmatprep.mubr.f32.mxu0 0.0
  %3419 = vmatmul.mubr.f32.gmra.mrb[0].mxu0 %v3348
  %v3420 = vpop.f32.mrb[0].mxu0
  %v3421 = vadd.f32 0.0, %v3420
  %v3422 = vpop.f32.mrb[0].mxu0
  %v3423 = vadd.f32 0.0, %v3422
  %3424 = vdwg.mxu0
  %3425 = vmatprep.subr.mxu0 %v114
  %3426 = vmatpush1.msra.mxu0 %v113
  %3427 = vmatprep.subr.mxu0 %v118
  %3428 = vmatpush1.msra.mxu0 %v117
  %3429 = vmatprep.subr.mxu0 %v122
  %3430 = vmatpush1.msra.mxu0 %v121
  %3431 = vmatprep.subr.mxu0 %v126
  %3432 = vmatpush1.msra.mxu0 %v125
  %3433 = vmatprep.subr.mxu0 %v130
  %3434 = vmatpush1.msra.mxu0 %v129
  %3435 = vmatprep.subr.mxu0 %v134
  %3436 = vmatpush1.msra.mxu0 %v133
  %3437 = vmatprep.subr.mxu0 %v138
  %3438 = vmatpush1.msra.mxu0 %v137
  %3439 = vmatprep.subr.mxu0 %v142
  %3440 = vmatpush1.msra.mxu0 %v141
  %3441 = vmatprep.subr.mxu0 %v146
  %3442 = vmatpush1.msra.mxu0 %v145
  %3443 = vmatprep.subr.mxu0 %v150
  %3444 = vmatpush1.msra.mxu0 %v149
  %3445 = vmatprep.subr.mxu0 %v154
  %3446 = vmatpush1.msra.mxu0 %v153
  %3447 = vmatprep.subr.mxu0 %v158
  %3448 = vmatpush1.msra.mxu0 %v157
  %3449 = vmatprep.subr.mxu0 %v162
  %3450 = vmatpush1.msra.mxu0 %v161
  %3451 = vmatprep.subr.mxu0 %v166
  %3452 = vmatpush1.msra.mxu0 %v165
  %3453 = vmatprep.subr.mxu0 %v170
  %3454 = vmatpush1.msra.mxu0 %v169
  %3455 = vmatprep.subr.mxu0 %v174
  %3456 = vmatpush1.msra.mxu0 %v173
  %3457 = vmatprep.subr.mxu0 0.0
  %3458 = vmatpush1.msra.mxu0 0.0
  %3459 = vmatprep.subr.mxu0 0.0
  %3460 = vmatpush1.msra.mxu0 0.0
  %3461 = vmatprep.subr.mxu0 0.0
  %3462 = vmatpush1.msra.mxu0 0.0
  %3463 = vmatprep.subr.mxu0 0.0
  %3464 = vmatpush1.msra.mxu0 0.0
  %3465 = vmatprep.subr.mxu0 0.0
  %3466 = vmatpush1.msra.mxu0 0.0
  %3467 = vmatprep.subr.mxu0 0.0
  %3468 = vmatpush1.msra.mxu0 0.0
  %3469 = vmatprep.subr.mxu0 0.0
  %3470 = vmatpush1.msra.mxu0 0.0
  %3471 = vmatprep.subr.mxu0 0.0
  %3472 = vmatpush1.msra.mxu0 0.0
  %3473 = vmatprep.subr.mxu0 0.0
  %3474 = vmatpush1.msra.mxu0 0.0
  %3475 = vmatprep.subr.mxu0 0.0
  %3476 = vmatpush1.msra.mxu0 0.0
  %3477 = vmatprep.subr.mxu0 0.0
  %3478 = vmatpush1.msra.mxu0 0.0
  %3479 = vmatprep.subr.mxu0 0.0
  %3480 = vmatpush1.msra.mxu0 0.0
  %3481 = vmatprep.subr.mxu0 0.0
  %3482 = vmatpush1.msra.mxu0 0.0
  %3483 = vmatprep.subr.mxu0 0.0
  %3484 = vmatpush1.msra.mxu0 0.0
  %3485 = vmatprep.subr.mxu0 0.0
  %3486 = vmatpush1.msra.mxu0 0.0
  %3487 = vmatprep.subr.mxu0 0.0
  %3488 = vmatpush1.msra.mxu0 0.0
  %3489 = vmatprep.mubr.f32.mxu0 0.0
  %3490 = vmatmul.mubr.f32.gmra.mrb[0].mxu0 %v3348
  %v3491 = vpop.f32.mrb[0].mxu0
  %v3492 = vadd.f32 0.0, %v3491
  %v3493 = vpop.f32.mrb[0].mxu0
  %v3494 = vadd.f32 0.0, %v3493
  %3495 = vdwg.mxu0
  %v3496 = vadd.f32 %v3350, %v3421
  %v3497 = vadd.f32 %v3351, %v3423
  %v3498 = vadd.f32 %v3352, %v3492
  %v3499 = vadd.f32 %v3353, %v3494
  %v3500 = vxor.u32 %v3496, 2147483648
  %v3501 = vmul.f32 %v3500, 1.442695
  %v3502 = vpow.pop %v3501
  %v3503 = vadd.f32 %v3502, 1.0
  %v3504 = vrcp.pop %v3503
  %v3505 = vmul.f32 1.0, %v3504
  %v3506 = vxor.u32 %v3497, 2147483648
  %v3507 = vmul.f32 %v3506, 1.442695
  %v3508 = vpow.pop %v3507
  %v3509 = vadd.f32 %v3508, 1.0
  %v3510 = vrcp.pop %v3509
  %v3511 = vmul.f32 1.0, %v3510
  %v3512 = vtanh.pop %v3498
  %v3513 = vxor.u32 %v3499, 2147483648
  %v3514 = vmul.f32 %v3513, 1.442695
  %v3515 = vpow.pop %v3514
  %v3516 = vadd.f32 %v3515, 1.0
  %v3517 = vrcp.pop %v3516
  %v3518 = vmul.f32 1.0, %v3517
  %v3519 = vmul.f32 %v3511, %v3346
  %v3520 = vmul.f32 %v3505, %v3512
  %v3521 = vadd.f32 %v3519, %v3520
  %v3522 = vtanh.pop %v3521
  %v3523 = vmul.f32 %v3518, %v3522
  %3524 = vst [vmem:[%s1761] sm:$0xff] %v3523
  %v3525 = vld [vmem:[%s1765] sm:$0xff]
  %v3526 = vld [vmem:[%s1765 + $0x8] sm:$0xff]
  %v3527 = vld [vmem:[%s1765 + $0x10] sm:$0xff]
  %v3528 = vld [vmem:[%s1765 + $0x18] sm:$0xff]
  %3529 = vmatprep.subr.mxu0 %v112
  %3530 = vmatpush1.msra.mxu0 %v111
  %3531 = vmatprep.subr.mxu0 %v116
  %3532 = vmatpush1.msra.mxu0 %v115
  %3533 = vmatprep.subr.mxu0 %v120
  %3534 = vmatpush1.msra.mxu0 %v119
  %3535 = vmatprep.subr.mxu0 %v124
  %3536 = vmatpush1.msra.mxu0 %v123
  %3537 = vmatprep.subr.mxu0 %v128
  %3538 = vmatpush1.msra.mxu0 %v127
  %3539 = vmatprep.subr.mxu0 %v132
  %3540 = vmatpush1.msra.mxu0 %v131
  %3541 = vmatprep.subr.mxu0 %v136
  %3542 = vmatpush1.msra.mxu0 %v135
  %3543 = vmatprep.subr.mxu0 %v140
  %3544 = vmatpush1.msra.mxu0 %v139
  %3545 = vmatprep.subr.mxu0 %v144
  %3546 = vmatpush1.msra.mxu0 %v143
  %3547 = vmatprep.subr.mxu0 %v148
  %3548 = vmatpush1.msra.mxu0 %v147
  %3549 = vmatprep.subr.mxu0 %v152
  %3550 = vmatpush1.msra.mxu0 %v151
  %3551 = vmatprep.subr.mxu0 %v156
  %3552 = vmatpush1.msra.mxu0 %v155
  %3553 = vmatprep.subr.mxu0 %v160
  %3554 = vmatpush1.msra.mxu0 %v159
  %3555 = vmatprep.subr.mxu0 %v164
  %3556 = vmatpush1.msra.mxu0 %v163
  %3557 = vmatprep.subr.mxu0 %v168
  %3558 = vmatpush1.msra.mxu0 %v167
  %3559 = vmatprep.subr.mxu0 %v172
  %3560 = vmatpush1.msra.mxu0 %v171
  %3561 = vmatprep.subr.mxu0 0.0
  %3562 = vmatpush1.msra.mxu0 0.0
  %3563 = vmatprep.subr.mxu0 0.0
  %3564 = vmatpush1.msra.mxu0 0.0
  %3565 = vmatprep.subr.mxu0 0.0
  %3566 = vmatpush1.msra.mxu0 0.0
  %3567 = vmatprep.subr.mxu0 0.0
  %3568 = vmatpush1.msra.mxu0 0.0
  %3569 = vmatprep.subr.mxu0 0.0
  %3570 = vmatpush1.msra.mxu0 0.0
  %3571 = vmatprep.subr.mxu0 0.0
  %3572 = vmatpush1.msra.mxu0 0.0
  %3573 = vmatprep.subr.mxu0 0.0
  %3574 = vmatpush1.msra.mxu0 0.0
  %3575 = vmatprep.subr.mxu0 0.0
  %3576 = vmatpush1.msra.mxu0 0.0
  %3577 = vmatprep.subr.mxu0 0.0
  %3578 = vmatpush1.msra.mxu0 0.0
  %3579 = vmatprep.subr.mxu0 0.0
  %3580 = vmatpush1.msra.mxu0 0.0
  %3581 = vmatprep.subr.mxu0 0.0
  %3582 = vmatpush1.msra.mxu0 0.0
  %3583 = vmatprep.subr.mxu0 0.0
  %3584 = vmatpush1.msra.mxu0 0.0
  %3585 = vmatprep.subr.mxu0 0.0
  %3586 = vmatpush1.msra.mxu0 0.0
  %3587 = vmatprep.subr.mxu0 0.0
  %3588 = vmatpush1.msra.mxu0 0.0
  %3589 = vmatprep.subr.mxu0 0.0
  %3590 = vmatpush1.msra.mxu0 0.0
  %3591 = vmatprep.subr.mxu0 0.0
  %3592 = vmatpush1.msra.mxu0 0.0
  %3593 = vmatprep.mubr.f32.mxu0 0.0
  %3594 = vmatmul.mubr.f32.gmra.mrb[0].mxu0 %v3523
  %v3595 = vpop.f32.mrb[0].mxu0
  %v3596 = vadd.f32 0.0, %v3595
  %v3597 = vpop.f32.mrb[0].mxu0
  %v3598 = vadd.f32 0.0, %v3597
  %3599 = vdwg.mxu0
  %3600 = vmatprep.subr.mxu0 %v114
  %3601 = vmatpush1.msra.mxu0 %v113
  %3602 = vmatprep.subr.mxu0 %v118
  %3603 = vmatpush1.msra.mxu0 %v117
  %3604 = vmatprep.subr.mxu0 %v122
  %3605 = vmatpush1.msra.mxu0 %v121
  %3606 = vmatprep.subr.mxu0 %v126
  %3607 = vmatpush1.msra.mxu0 %v125
  %3608 = vmatprep.subr.mxu0 %v130
  %3609 = vmatpush1.msra.mxu0 %v129
  %3610 = vmatprep.subr.mxu0 %v134
  %3611 = vmatpush1.msra.mxu0 %v133
  %3612 = vmatprep.subr.mxu0 %v138
  %3613 = vmatpush1.msra.mxu0 %v137
  %3614 = vmatprep.subr.mxu0 %v142
  %3615 = vmatpush1.msra.mxu0 %v141
  %3616 = vmatprep.subr.mxu0 %v146
  %3617 = vmatpush1.msra.mxu0 %v145
  %3618 = vmatprep.subr.mxu0 %v150
  %3619 = vmatpush1.msra.mxu0 %v149
  %3620 = vmatprep.subr.mxu0 %v154
  %3621 = vmatpush1.msra.mxu0 %v153
  %3622 = vmatprep.subr.mxu0 %v158
  %3623 = vmatpush1.msra.mxu0 %v157
  %3624 = vmatprep.subr.mxu0 %v162
  %3625 = vmatpush1.msra.mxu0 %v161
  %3626 = vmatprep.subr.mxu0 %v166
  %3627 = vmatpush1.msra.mxu0 %v165
  %3628 = vmatprep.subr.mxu0 %v170
  %3629 = vmatpush1.msra.mxu0 %v169
  %3630 = vmatprep.subr.mxu0 %v174
  %3631 = vmatpush1.msra.mxu0 %v173
  %3632 = vmatprep.subr.mxu0 0.0
  %3633 = vmatpush1.msra.mxu0 0.0
  %3634 = vmatprep.subr.mxu0 0.0
  %3635 = vmatpush1.msra.mxu0 0.0
  %3636 = vmatprep.subr.mxu0 0.0
  %3637 = vmatpush1.msra.mxu0 0.0
  %3638 = vmatprep.subr.mxu0 0.0
  %3639 = vmatpush1.msra.mxu0 0.0
  %3640 = vmatprep.subr.mxu0 0.0
  %3641 = vmatpush1.msra.mxu0 0.0
  %3642 = vmatprep.subr.mxu0 0.0
  %3643 = vmatpush1.msra.mxu0 0.0
  %3644 = vmatprep.subr.mxu0 0.0
  %3645 = vmatpush1.msra.mxu0 0.0
  %3646 = vmatprep.subr.mxu0 0.0
  %3647 = vmatpush1.msra.mxu0 0.0
  %3648 = vmatprep.subr.mxu0 0.0
  %3649 = vmatpush1.msra.mxu0 0.0
  %3650 = vmatprep.subr.mxu0 0.0
  %3651 = vmatpush1.msra.mxu0 0.0
  %3652 = vmatprep.subr.mxu0 0.0
  %3653 = vmatpush1.msra.mxu0 0.0
  %3654 = vmatprep.subr.mxu0 0.0
  %3655 = vmatpush1.msra.mxu0 0.0
  %3656 = vmatprep.subr.mxu0 0.0
  %3657 = vmatpush1.msra.mxu0 0.0
  %3658 = vmatprep.subr.mxu0 0.0
  %3659 = vmatpush1.msra.mxu0 0.0
  %3660 = vmatprep.subr.mxu0 0.0
  %3661 = vmatpush1.msra.mxu0 0.0
  %3662 = vmatprep.subr.mxu0 0.0
  %3663 = vmatpush1.msra.mxu0 0.0
  %3664 = vmatprep.mubr.f32.mxu0 0.0
  %3665 = vmatmul.mubr.f32.gmra.mrb[0].mxu0 %v3523
  %v3666 = vpop.f32.mrb[0].mxu0
  %v3667 = vadd.f32 0.0, %v3666
  %v3668 = vpop.f32.mrb[0].mxu0
  %v3669 = vadd.f32 0.0, %v3668
  %3670 = vdwg.mxu0
  %v3671 = vadd.f32 %v3525, %v3596
  %v3672 = vadd.f32 %v3526, %v3598
  %v3673 = vadd.f32 %v3527, %v3667
  %v3674 = vadd.f32 %v3528, %v3669
  %v3675 = vxor.u32 %v3671, 2147483648
  %v3676 = vmul.f32 %v3675, 1.442695
  %v3677 = vpow.pop %v3676
  %v3678 = vadd.f32 %v3677, 1.0
  %v3679 = vrcp.pop %v3678
  %v3680 = vmul.f32 1.0, %v3679
  %v3681 = vxor.u32 %v3672, 2147483648
  %v3682 = vmul.f32 %v3681, 1.442695
  %v3683 = vpow.pop %v3682
  %v3684 = vadd.f32 %v3683, 1.0
  %v3685 = vrcp.pop %v3684
  %v3686 = vmul.f32 1.0, %v3685
  %v3687 = vtanh.pop %v3673
  %v3688 = vxor.u32 %v3674, 2147483648
  %v3689 = vmul.f32 %v3688, 1.442695
  %v3690 = vpow.pop %v3689
  %v3691 = vadd.f32 %v3690, 1.0
  %v3692 = vrcp.pop %v3691
  %v3693 = vmul.f32 1.0, %v3692
  %v3694 = vmul.f32 %v3686, %v3521
  %v3695 = vmul.f32 %v3680, %v3687
  %v3696 = vadd.f32 %v3694, %v3695
  %v3697 = vtanh.pop %v3696
  %v3698 = vmul.f32 %v3693, %v3697
  %3699 = vst [vmem:[%s1940] sm:$0xff] %v3698
  %s3700 = scalar_lea.vmem %s14, 8
  %3701 = vst [vmem:[%s3700] sm:$0xff] %v3698
  %s3702 = scalar_lea.vmem %s15, 8
  %3703 = vst [vmem:[%s3702] sm:$0xff] %v3696
  %v3704 = vld [vmem:[#allocation3] sm:$0xff]
  %v3705 = vld [vmem:[#allocation3 + $0x8] sm:$0xff]
  %v3706 = vld [vmem:[#allocation3 + $0x10] sm:$0xff]
  %v3707 = vld [vmem:[#allocation3 + $0x18] sm:$0xff]
  %v3708 = vld [vmem:[#allocation3 + $0x20] sm:$0xff]
  %v3709 = vld [vmem:[#allocation3 + $0x28] sm:$0xff]
  %v3710 = vld [vmem:[#allocation3 + $0x30] sm:$0xff]
  %v3711 = vld [vmem:[#allocation3 + $0x38] sm:$0xff]
  %v3712 = vld [vmem:[%s9] sm:$0xff]
  %v3713 = vld [vmem:[%s9 + $0x8] sm:$0xff]
  %v3714 = vld [vmem:[%s9 + $0x10] sm:$0xff]
  %v3715 = vld [vmem:[%s9 + $0x18] sm:$0xff]
  %v3716 = vld [vmem:[%s9 + $0x20] sm:$0xff]
  %v3717 = vld [vmem:[%s9 + $0x28] sm:$0xff]
  %v3718 = vld [vmem:[%s9 + $0x30] sm:$0xff]
  %v3719 = vld [vmem:[%s9 + $0x38] sm:$0xff]
  %v3720 = vld [vmem:[%s9 + $0x40] sm:$0xff]
  %v3721 = vld [vmem:[%s9 + $0x48] sm:$0xff]
  %v3722 = vld [vmem:[%s9 + $0x50] sm:$0xff]
  %v3723 = vld [vmem:[%s9 + $0x58] sm:$0xff]
  %v3724 = vld [vmem:[%s9 + $0x60] sm:$0xff]
  %v3725 = vld [vmem:[%s9 + $0x68] sm:$0xff]
  %v3726 = vld [vmem:[%s9 + $0x70] sm:$0xff]
  %v3727 = vld [vmem:[%s9 + $0x78] sm:$0xff]
  %v3728 = vld [vmem:[%s10] sm:$0x1]
  %v3730 = vlaneseq
  %v3731 = vshrl.u32 %v3730, 7
  %v3732 = vsub.s32 0, %v3731
  %v3733 = vrot.slane %v3728, %v3732
  %3735 = vmatprep.subr.mxu0 0.0
  %3736 = vmatpush1.msra.mxu0 %v3712
  %3737 = vmatprep.subr.mxu0 0.0
  %3738 = vmatpush1.msra.mxu0 %v3713
  %3739 = vmatprep.subr.mxu0 0.0
  %3740 = vmatpush1.msra.mxu0 %v3714
  %3741 = vmatprep.subr.mxu0 0.0
  %3742 = vmatpush1.msra.mxu0 %v3715
  %3743 = vmatprep.subr.mxu0 0.0
  %3744 = vmatpush1.msra.mxu0 %v3716
  %3745 = vmatprep.subr.mxu0 0.0
  %3746 = vmatpush1.msra.mxu0 %v3717
  %3747 = vmatprep.subr.mxu0 0.0
  %3748 = vmatpush1.msra.mxu0 %v3718
  %3749 = vmatprep.subr.mxu0 0.0
  %3750 = vmatpush1.msra.mxu0 %v3719
  %3751 = vmatprep.subr.mxu0 0.0
  %3752 = vmatpush1.msra.mxu0 %v3720
  %3753 = vmatprep.subr.mxu0 0.0
  %3754 = vmatpush1.msra.mxu0 %v3721
  %3755 = vmatprep.subr.mxu0 0.0
  %3756 = vmatpush1.msra.mxu0 %v3722
  %3757 = vmatprep.subr.mxu0 0.0
  %3758 = vmatpush1.msra.mxu0 %v3723
  %3759 = vmatprep.subr.mxu0 0.0
  %3760 = vmatpush1.msra.mxu0 %v3724
  %3761 = vmatprep.subr.mxu0 0.0
  %3762 = vmatpush1.msra.mxu0 %v3725
  %3763 = vmatprep.subr.mxu0 0.0
  %3764 = vmatpush1.msra.mxu0 %v3726
  %3765 = vmatprep.subr.mxu0 0.0
  %3766 = vmatpush1.msra.mxu0 %v3727
  %3767 = vmatprep.subr.mxu0 0.0
  %3768 = vmatpush1.msra.mxu0 0.0
  %3769 = vmatprep.subr.mxu0 0.0
  %3770 = vmatpush1.msra.mxu0 0.0
  %3771 = vmatprep.subr.mxu0 0.0
  %3772 = vmatpush1.msra.mxu0 0.0
  %3773 = vmatprep.subr.mxu0 0.0
  %3774 = vmatpush1.msra.mxu0 0.0
  %3775 = vmatprep.subr.mxu0 0.0
  %3776 = vmatpush1.msra.mxu0 0.0
  %3777 = vmatprep.subr.mxu0 0.0
  %3778 = vmatpush1.msra.mxu0 0.0
  %3779 = vmatprep.subr.mxu0 0.0
  %3780 = vmatpush1.msra.mxu0 0.0
  %3781 = vmatprep.subr.mxu0 0.0
  %3782 = vmatpush1.msra.mxu0 0.0
  %3783 = vmatprep.subr.mxu0 0.0
  %3784 = vmatpush1.msra.mxu0 0.0
  %3785 = vmatprep.subr.mxu0 0.0
  %3786 = vmatpush1.msra.mxu0 0.0
  %3787 = vmatprep.subr.mxu0 0.0
  %3788 = vmatpush1.msra.mxu0 0.0
  %3789 = vmatprep.subr.mxu0 0.0
  %3790 = vmatpush1.msra.mxu0 0.0
  %3791 = vmatprep.subr.mxu0 0.0
  %3792 = vmatpush1.msra.mxu0 0.0
  %3793 = vmatprep.subr.mxu0 0.0
  %3794 = vmatpush1.msra.mxu0 0.0
  %3795 = vmatprep.subr.mxu0 0.0
  %3796 = vmatpush1.msra.mxu0 0.0
  %3797 = vmatprep.subr.mxu0 0.0
  %3798 = vmatpush1.msra.mxu0 0.0
  %3799 = vmatprep.mubr.f32.mxu0 0.0
  %3800 = vmatmul.mubr.f32.gmra.mrb[0].mxu0 %v3704
  %v3801 = vpop.f32.mrb[0].mxu0
  %v3802 = vadd.f32 %v3733, %v3801
  %v3803 = vpop.f32.mrb[0].mxu0
  %3804 = vmatprep.mubr.f32.mxu0 0.0
  %3805 = vmatmul.mubr.f32.gmra.mrb[0].mxu0 %v3705
  %v3806 = vpop.f32.mrb[0].mxu0
  %v3807 = vadd.f32 %v3733, %v3806
  %v3808 = vpop.f32.mrb[0].mxu0
  %3809 = vmatprep.mubr.f32.mxu0 0.0
  %3810 = vmatmul.mubr.f32.gmra.mrb[0].mxu0 %v3706
  %v3811 = vpop.f32.mrb[0].mxu0
  %v3812 = vadd.f32 %v3733, %v3811
  %v3813 = vpop.f32.mrb[0].mxu0
  %3814 = vmatprep.mubr.f32.mxu0 0.0
  %3815 = vmatmul.mubr.f32.gmra.mrb[0].mxu0 %v3707
  %v3816 = vpop.f32.mrb[0].mxu0
  %v3817 = vadd.f32 %v3733, %v3816
  %v3818 = vpop.f32.mrb[0].mxu0
  %3819 = vmatprep.mubr.f32.mxu0 0.0
  %3820 = vmatmul.mubr.f32.gmra.mrb[0].mxu0 %v3708
  %v3821 = vpop.f32.mrb[0].mxu0
  %v3822 = vadd.f32 %v3733, %v3821
  %v3823 = vpop.f32.mrb[0].mxu0
  %3824 = vmatprep.mubr.f32.mxu0 0.0
  %3825 = vmatmul.mubr.f32.gmra.mrb[0].mxu0 %v3709
  %v3826 = vpop.f32.mrb[0].mxu0
  %v3827 = vadd.f32 %v3733, %v3826
  %v3828 = vpop.f32.mrb[0].mxu0
  %3829 = vmatprep.mubr.f32.mxu0 0.0
  %3830 = vmatmul.mubr.f32.gmra.mrb[0].mxu0 %v3710
  %v3831 = vpop.f32.mrb[0].mxu0
  %v3832 = vadd.f32 %v3733, %v3831
  %v3833 = vpop.f32.mrb[0].mxu0
  %3834 = vmatprep.mubr.f32.mxu0 0.0
  %3835 = vmatmul.mubr.f32.gmra.mrb[0].mxu0 %v3711
  %v3836 = vpop.f32.mrb[0].mxu0
  %v3837 = vadd.f32 %v3733, %v3836
  %v3838 = vpop.f32.mrb[0].mxu0
  %3839 = vdwg.mxu0
  %v3840 = vld [vmem:[%s12] sm:$0x1]
  %v3841 = vld [vmem:[%s11] sm:$0x1]
  %v3842 = vsub.f32 %v3840, %v3841
  %v3843 = vmul.f32 %v3842, 0.5
  %v3844 = vadd.f32 %v3841, %v3843
  %v3845 = vtanh.pop %v3802
  %v3846 = vtanh.pop %v3807
  %v3847 = vtanh.pop %v3812
  %v3848 = vtanh.pop %v3817
  %v3849 = vtanh.pop %v3822
  %v3850 = vtanh.pop %v3827
  %v3851 = vtanh.pop %v3832
  %v3852 = vtanh.pop %v3837
  %v3854 = vlaneseq
  %v3855 = vshrl.u32 %v3854, 7
  %v3856 = vsub.s32 0, %v3855
  %v3857 = vrot.slane %v3843, %v3856
  %v3859 = vmul.f32 %v3857, %v3845
  %v3860 = vmul.f32 %v3857, %v3846
  %v3861 = vmul.f32 %v3857, %v3847
  %v3862 = vmul.f32 %v3857, %v3848
  %v3863 = vmul.f32 %v3857, %v3849
  %v3864 = vmul.f32 %v3857, %v3850
  %v3865 = vmul.f32 %v3857, %v3851
  %v3866 = vmul.f32 %v3857, %v3852
  %v3868 = vlaneseq
  %v3869 = vshrl.u32 %v3868, 7
  %v3870 = vsub.s32 0, %v3869
  %v3871 = vrot.slane %v3844, %v3870
  %v3873 = vadd.f32 %v3871, %v3859
  %v3874 = vadd.f32 %v3871, %v3860
  %v3875 = vadd.f32 %v3871, %v3861
  %v3876 = vadd.f32 %v3871, %v3862
  %v3877 = vadd.f32 %v3871, %v3863
  %v3878 = vadd.f32 %v3871, %v3864
  %v3879 = vadd.f32 %v3871, %v3865
  %v3880 = vadd.f32 %v3871, %v3866
  %3881 = vst [vmem:[%s13] sm:$0xff] %v3873
  %3882 = vst [vmem:[%s13 + $0x8] sm:$0xff] %v3874
  %3883 = vst [vmem:[%s13 + $0x10] sm:$0xff] %v3875
  %3884 = vst [vmem:[%s13 + $0x18] sm:$0xff] %v3876
  %3885 = vst [vmem:[%s13 + $0x20] sm:$0xff] %v3877
  %3886 = vst [vmem:[%s13 + $0x28] sm:$0xff] %v3878
  %3887 = vst [vmem:[%s13 + $0x30] sm:$0xff] %v3879
  %3888 = vst [vmem:[%s13 + $0x38] sm:$0xff] %v3880
  // Predicated region
  $region54: #{rnn_forward.1} parent=0 // pred_check
    _
  $region55: #{rnn_forward.1} parent=0 // pred_check_branch
    %3890 = sbr.rel (0) target = $region57
  $region56: #{rnn_forward.1} parent=0 // pred_region
    _
  $region57: #{rnn_forward.1} parent=0 // pred_fallthru
    _
  // Predicated region
  $region58: #{rnn_forward.1} parent=0 // pred_check
    _
  $region59: #{rnn_forward.1} parent=0 // pred_check_branch
    %3892 = sbr.rel (0) target = $region61
  $region60: #{rnn_forward.1} parent=0 // pred_region
    _
  $region61: #{rnn_forward.1} parent=0 // pred_fallthru
    _
  // Predicated region
  $region62: #{rnn_forward.1} parent=0 // pred_check
    _
  $region63: #{rnn_forward.1} parent=0 // pred_check_branch
    %3894 = sbr.rel (0) target = $region65
  $region64: #{rnn_forward.1} parent=0 // pred_region
    _
  $region65: #{rnn_forward.1} parent=0 // pred_fallthru
    _
  // Predicated region
  $region66: #{rnn_forward.1} parent=0 // pred_check
    _
  $region67: #{rnn_forward.1} parent=0 // pred_check_branch
    %3896 = sbr.rel (0) target = $region69
  $region68: #{rnn_forward.1} parent=0 // pred_region
    _
  $region69: #{rnn_forward.1} parent=0 // pred_fallthru
    _
  // Predicated region
  $region70: #{rnn_forward.1} parent=0 // pred_check
    _
  $region71: #{rnn_forward.1} parent=0 // pred_check_branch
    %3898 = sbr.rel (0) target = $region73
  $region72: #{rnn_forward.1} parent=0 // pred_region
    _
  $region73: #{rnn_forward.1} parent=0 // pred_fallthru
    _
  // Predicated region
  $region74: #{rnn_forward.1} parent=0 // pred_check
    _
  $region75: #{rnn_forward.1} parent=0 // pred_check_branch
    %3900 = sbr.rel (0) target = $region77
  $region76: #{rnn_forward.1} parent=0 // pred_region
    _
  $region77: #{rnn_forward.1} parent=0 // pred_fallthru
    _

</llo_original>
